<compile_context>
chip_gen: v7x
topology: tpu7x:2x2x1
jax: 0.10.0
libtpu: 0.0.40
codegen_flags: <defaults>
</compile_context>

<pallas_src>
import math

import jax
import jax.numpy as jnp
from jax import lax
from jax.experimental import pallas as pl
from jax.experimental.pallas import tpu as pltpu

_WIDTH = 1024           # lane-dense last dim (large multiple of 128 -> unmasked vst)
_MAX_BLOCK_ROWS = 1024  # 1024 x 1024 x 4B = 4 MiB per f32 block
_ROW_ALIGN = 32         # sublane-tile safe for f32 (8) and bf16 (16)


def _round_up(n, m):
    return ((n + m - 1) // m) * m


def _hash_u32(x):
    """lowbias32-style avalanche hash on uint32 arrays (VPU-only ops)."""
    x = x ^ (x >> 16)
    x = x * jnp.uint32(0x7FEB352D)
    x = x ^ (x >> 15)
    x = x * jnp.uint32(0x846CA68B)
    x = x ^ (x >> 16)
    return x


def _unit_gaussian_kernel(key_ref, o_ref):
    block_rows, width = o_ref.shape
    half = block_rows // 2
    pairs_per_block = half * width

    # Per-pair global counter: stateless RNG -> the grid axis is truly parallel.
    row = lax.broadcasted_iota(jnp.int32, (half, width), 0)
    col = lax.broadcasted_iota(jnp.int32, (half, width), 1)
    ctr = pl.program_id(0) * pairs_per_block + row * width + col

    # Two independent uniform bit streams from counter + seed-derived keys.
    b1 = _hash_u32((ctr ^ key_ref[0]).astype(jnp.uint32))
    b2 = _hash_u32((ctr ^ key_ref[1]).astype(jnp.uint32))

    # 24-bit mantissas -> uniforms; u1 strictly inside (0, 1) so log() is finite.
    inv24 = jnp.float32(1.0 / 16777216.0)
    m1 = (b1 >> 8).astype(jnp.int32).astype(jnp.float32)
    m2 = (b2 >> 8).astype(jnp.int32).astype(jnp.float32)
    u1 = (m1 + 0.5) * inv24
    u2 = m2 * inv24

    # Box-Muller; both outputs are used, halving transcendental (EUP) work.
    r = jnp.sqrt(-2.0 * jnp.log(u1))
    theta = jnp.float32(2.0 * math.pi) * u2
    z0 = r * jnp.cos(theta)
    z1 = r * jnp.sin(theta)

    o_ref[...] = jnp.concatenate([z0, z1], axis=0).astype(o_ref.dtype)


def _derive_keys(seed: int):
    """Hash the seed on the host into two distinct 32-bit stream keys."""
    def h(v):
        v &= 0xFFFFFFFF
        v ^= v >> 16
        v = (v * 0x7FEB352D) & 0xFFFFFFFF
        v ^= v >> 15
        v = (v * 0x846CA68B) & 0xFFFFFFFF
        v ^= v >> 16
        return v

    k1 = h((seed & 0xFFFFFFFF) ^ 0x9E3779B9)
    k2 = h((seed & 0xFFFFFFFF) ^ 0x85EBCA6B)

    def to_i32(v):
        return v - (1 << 32) if v >= (1 << 31) else v

    return to_i32(k1), to_i32(k2)


def unit_gaussian_sample(x, seed: int = 0):
    """Pallas equivalent of UnitGaussianSampler.forward(x) (= randn_like(x))."""
    total = x.size
    out_dtype = x.dtype

    rows_needed = pl.cdiv(total, _WIDTH)
    block_rows = min(_MAX_BLOCK_ROWS, _round_up(rows_needed, _ROW_ALIGN))
    padded_rows = _round_up(rows_needed, block_rows)
    grid = padded_rows // block_rows
    padded_total = padded_rows * _WIDTH

    keys = jnp.array(_derive_keys(seed), dtype=jnp.int32)

    itemsize = jnp.dtype(out_dtype).itemsize
    cost = pl.CostEstimate(
        flops=30 * padded_total,
        transcendentals=2 * padded_total,
        bytes_accessed=padded_total * itemsize,
    )

    out2d = pl.pallas_call(
        _unit_gaussian_kernel,
        out_shape=jax.ShapeDtypeStruct((padded_rows, _WIDTH), out_dtype),
        grid_spec=pltpu.PrefetchScalarGridSpec(
            num_scalar_prefetch=1,            # stream keys live in SMEM
            grid=(grid,),
            in_specs=[],
            out_specs=pl.BlockSpec((block_rows, _WIDTH), lambda i, keys: (i, 0)),
        ),
        compiler_params=pltpu.CompilerParams(
            dimension_semantics=("parallel",)),
        cost_estimate=cost,
    )(keys)

    if padded_total == total:
        return out2d.reshape(x.shape)       # free metadata reshape, no copy
    return out2d.reshape(-1)[:total].reshape(x.shape)


if __name__ == "__main__":
    key = jax.random.PRNGKey(0)
    # NCHW input; only shape/dtype matter (like randn_like).
    x = jax.random.normal(key, (2, 4, 16, 16), dtype=jnp.float32)

    samples = unit_gaussian_sample(x, seed=0)
    samples = jax.block_until_ready(samples)

    assert samples.shape == x.shape, (samples.shape, x.shape)
    assert samples.dtype == x.dtype, (samples.dtype, x.dtype)
    assert bool(jnp.all(jnp.isfinite(samples)))
    # loose statistical sanity check on ~2048 draws of N(0, 1)
    assert abs(float(jnp.mean(samples))) < 0.25
    assert abs(float(jnp.std(samples)) - 1.0) < 0.25

    print("KERNEL_OK")
</pallas_src>

<mosaic_0001>
module attributes {stable_mosaic.version = 11 : i64} {
  func.func @_unit_gaussian_kernel(%arg0: i32, %arg1: memref<2xi32, #tpu.memory_space<smem>>, %arg2: memref<32x1024xf32, #tpu.memory_space<vmem>>) attributes {dimension_semantics = [#tpu.dimension_semantics<parallel>], iteration_bounds = array<i64: 1>, scalar_prefetch = 1 : i64, scratch_operands = 0 : i64, tpu.core_type = #tpu.core_type<tc>, window_params = [{transform_indices = @transform_0, window_bounds = array<i64: 32, 1024>}]} {
    %0 = tpu.iota {dimensions = array<i32: 0>} : vector<16x1024xi32>
    %1 = tpu.iota {dimensions = array<i32: 1>} : vector<16x1024xi32>
    %c16384_i32 = arith.constant 16384 : i32
    %2 = arith.muli %arg0, %c16384_i32 : i32
    %c1024_i32 = arith.constant 1024 : i32
    %3 = vector.broadcast %c1024_i32 : i32 to vector<16x1024xi32>
    %4 = arith.muli %0, %3 : vector<16x1024xi32>
    %5 = vector.broadcast %2 : i32 to vector<16x1024xi32>
    %6 = arith.addi %5, %4 : vector<16x1024xi32>
    %7 = arith.addi %6, %1 : vector<16x1024xi32>
    %c0 = arith.constant 0 : index
    %8 = memref.load %arg1[%c0] : memref<2xi32, #tpu.memory_space<smem>>
    %9 = vector.broadcast %8 : i32 to vector<16x1024xi32>
    %10 = arith.xori %7, %9 : vector<16x1024xi32>
    %c16_i32 = arith.constant 16 : i32
    %11 = vector.broadcast %c16_i32 : i32 to vector<16x1024xi32>
    %12 = arith.shrui %10, %11 : vector<16x1024xi32>
    %13 = arith.xori %10, %12 : vector<16x1024xi32>
    %c2146121005_i32 = arith.constant 2146121005 : i32
    %14 = vector.broadcast %c2146121005_i32 : i32 to vector<16x1024xi32>
    %15 = arith.muli %13, %14 : vector<16x1024xi32>
    %c15_i32 = arith.constant 15 : i32
    %16 = vector.broadcast %c15_i32 : i32 to vector<16x1024xi32>
    %17 = arith.shrui %15, %16 : vector<16x1024xi32>
    %18 = arith.xori %15, %17 : vector<16x1024xi32>
    %c-2073254261_i32 = arith.constant -2073254261 : i32
    %19 = vector.broadcast %c-2073254261_i32 : i32 to vector<16x1024xi32>
    %20 = arith.muli %18, %19 : vector<16x1024xi32>
    %c16_i32_0 = arith.constant 16 : i32
    %21 = vector.broadcast %c16_i32_0 : i32 to vector<16x1024xi32>
    %22 = arith.shrui %20, %21 : vector<16x1024xi32>
    %23 = arith.xori %20, %22 : vector<16x1024xi32>
    %c1 = arith.constant 1 : index
    %24 = memref.load %arg1[%c1] : memref<2xi32, #tpu.memory_space<smem>>
    %25 = vector.broadcast %24 : i32 to vector<16x1024xi32>
    %26 = arith.xori %7, %25 : vector<16x1024xi32>
    %c16_i32_1 = arith.constant 16 : i32
    %27 = vector.broadcast %c16_i32_1 : i32 to vector<16x1024xi32>
    %28 = arith.shrui %26, %27 : vector<16x1024xi32>
    %29 = arith.xori %26, %28 : vector<16x1024xi32>
    %c2146121005_i32_2 = arith.constant 2146121005 : i32
    %30 = vector.broadcast %c2146121005_i32_2 : i32 to vector<16x1024xi32>
    %31 = arith.muli %29, %30 : vector<16x1024xi32>
    %c15_i32_3 = arith.constant 15 : i32
    %32 = vector.broadcast %c15_i32_3 : i32 to vector<16x1024xi32>
    %33 = arith.shrui %31, %32 : vector<16x1024xi32>
    %34 = arith.xori %31, %33 : vector<16x1024xi32>
    %c-2073254261_i32_4 = arith.constant -2073254261 : i32
    %35 = vector.broadcast %c-2073254261_i32_4 : i32 to vector<16x1024xi32>
    %36 = arith.muli %34, %35 : vector<16x1024xi32>
    %c16_i32_5 = arith.constant 16 : i32
    %37 = vector.broadcast %c16_i32_5 : i32 to vector<16x1024xi32>
    %38 = arith.shrui %36, %37 : vector<16x1024xi32>
    %39 = arith.xori %36, %38 : vector<16x1024xi32>
    %c8_i32 = arith.constant 8 : i32
    %40 = vector.broadcast %c8_i32 : i32 to vector<16x1024xi32>
    %41 = arith.shrui %23, %40 : vector<16x1024xi32>
    %42 = arith.sitofp %41 : vector<16x1024xi32> to vector<16x1024xf32>
    %c8_i32_6 = arith.constant 8 : i32
    %43 = vector.broadcast %c8_i32_6 : i32 to vector<16x1024xi32>
    %44 = arith.shrui %39, %43 : vector<16x1024xi32>
    %45 = arith.sitofp %44 : vector<16x1024xi32> to vector<16x1024xf32>
    %cst = arith.constant 5.000000e-01 : f32
    %46 = vector.broadcast %cst : f32 to vector<16x1024xf32>
    %47 = arith.addf %42, %46 : vector<16x1024xf32>
    %cst_7 = arith.constant 5.96046448E-8 : f32
    %48 = vector.broadcast %cst_7 : f32 to vector<16x1024xf32>
    %49 = arith.mulf %47, %48 : vector<16x1024xf32>
    %cst_8 = arith.constant 5.96046448E-8 : f32
    %50 = vector.broadcast %cst_8 : f32 to vector<16x1024xf32>
    %51 = arith.mulf %45, %50 : vector<16x1024xf32>
    %52 = math.log %49 : vector<16x1024xf32>
    %cst_9 = arith.constant -2.000000e+00 : f32
    %53 = vector.broadcast %cst_9 : f32 to vector<16x1024xf32>
    %54 = arith.mulf %53, %52 : vector<16x1024xf32>
    %55 = math.sqrt %54 : vector<16x1024xf32>
    %cst_10 = arith.constant 6.28318548 : f32
    %56 = vector.broadcast %cst_10 : f32 to vector<16x1024xf32>
    %57 = arith.mulf %56, %51 : vector<16x1024xf32>
    %58 = math.cos %57 : vector<16x1024xf32>
    %59 = arith.mulf %55, %58 : vector<16x1024xf32>
    %60 = math.sin %57 : vector<16x1024xf32>
    %61 = arith.mulf %55, %60 : vector<16x1024xf32>
    %62 = tpu.concatenate %59, %61 in 0 : vector<16x1024xf32>, vector<16x1024xf32> -> vector<32x1024xf32>
    %c0_11 = arith.constant 0 : index
    %c0_12 = arith.constant 0 : index
    %63 = vector.load %arg2[%c0_11, %c0_12] : memref<32x1024xf32, #tpu.memory_space<vmem>>, vector<32x1024xf32>
    tpu.vector_store %arg2[%c0_11, %c0_12], %62 {strides = array<i32>} : memref<32x1024xf32, #tpu.memory_space<vmem>>, vector<32x1024xf32>,
    return
  }
  func.func @transform_0(%arg0: i32, %arg1: memref<2xi32, #tpu.memory_space<smem>>) -> (i32, i32) {
    %c0_i32 = arith.constant 0 : i32
    %c0_i32_0 = arith.constant 0 : i32
    return %arg0, %c0_i32 : i32, i32
  }
}

</mosaic_0001>

<llo_original>
// kernel: tpu_custom_call.1
$region0: #{tpu_custom_call.1}
  #allocation0 [shape = 'u32[]', space=smem, size = 0x4, offset = 0x4, fixed_abs, tag = 'smem constant byte address 0x4 - core index']
  #allocation1 [shape = 'u32[144,128]{1,0:T(1,128)}', space=vmem, size = 0x12000, scoped, tag = 'internal scratch']
  #allocation2 [shape = 's32[1]{0}', space=sflag, size = 0x4, scoped, tag = 'scoped memory for tpu_custom_call.1']
  #allocation3 [shape = 'u8[512]{0}', space=smem, size = 0x200, scoped, tag = 'prefetched SMEM operand 0']
  %s0 = inlined_call_operand.hbm [shape: s32[2], index: 0, kind: input, shape index: {}]
  %s1 = inlined_call_operand.hbm [shape: f32[32,1024], index: 1, kind: output, shape index: {}]
  %s2 = sld [smem:[#allocation0]]
  $region10: #{tpu_custom_call.1} parent=0
    _
  %s4 = ssub.s32 1, %s2
  %s5 = scalar_select 0, %s4, %s2
  %7 = dma.hbm_to_smem %s0, 16, [#allocation3], [#allocation2]
  %8 = dma.done [#allocation2], 16
  %9 = sfence
  $region1: #{tpu_custom_call.1} parent=0
    #allocation4 [shape = 'u8[131072]{0}', space=vmem, size = 0x20000, scoped, tag = 'output window, operand 0, single buffered']
    #allocation5 [shape = 's32[1]{0}', space=sflag, size = 0x4, scoped, tag = 'scoped memory for tpu_custom_call.1']
    %10 = vsyncpa [#allocation5], 0
    %v11 = vlaneseq
    %v12 = vshrl.u32 %v11, 7
    %v13 = vadd.s32 %v12, 8
    %v14 = vlaneseq
    %v15 = vand.u32 %v14, 127
    %v16 = vadd.s32 %v15, 128
    %v17 = vadd.s32 %v15, 256
    %v18 = vadd.s32 %v15, 384
    %v19 = vadd.s32 %v15, 512
    %v20 = vadd.s32 %v15, 640
    %v21 = vadd.s32 %v15, 768
    %v22 = vadd.s32 %v15, 896
    %s23 = smul.u32 0, 16384
    %v24 = vmul.u32 %v12, 1024
    %v25 = vmul.u32 %v13, 1024
    %v26 = vstv %s23
    %v27 = vadd.s32 %v26, %v24
    %v28 = vadd.s32 %v26, %v25
    %v29 = vadd.s32 %v27, %v15
    %v30 = vadd.s32 %v27, %v16
    %v31 = vadd.s32 %v27, %v17
    %v32 = vadd.s32 %v27, %v18
    %v33 = vadd.s32 %v27, %v19
    %v34 = vadd.s32 %v27, %v20
    %v35 = vadd.s32 %v27, %v21
    %v36 = vadd.s32 %v27, %v22
    %v37 = vadd.s32 %v28, %v15
    %v38 = vadd.s32 %v28, %v16
    %v39 = vadd.s32 %v28, %v17
    %v40 = vadd.s32 %v28, %v18
    %v41 = vadd.s32 %v28, %v19
    %v42 = vadd.s32 %v28, %v20
    %v43 = vadd.s32 %v28, %v21
    %v44 = vadd.s32 %v28, %v22
    %s45 = sld [smem:[#allocation3]]
    %v46 = vstv %s45
    %v47 = vxor.u32 %v29, %v46
    %v48 = vxor.u32 %v30, %v46
    %v49 = vxor.u32 %v31, %v46
    %v50 = vxor.u32 %v32, %v46
    %v51 = vxor.u32 %v33, %v46
    %v52 = vxor.u32 %v34, %v46
    %v53 = vxor.u32 %v35, %v46
    %v54 = vxor.u32 %v36, %v46
    %v55 = vxor.u32 %v37, %v46
    %v56 = vxor.u32 %v38, %v46
    %v57 = vxor.u32 %v39, %v46
    %v58 = vxor.u32 %v40, %v46
    %v59 = vxor.u32 %v41, %v46
    %v60 = vxor.u32 %v42, %v46
    %v61 = vxor.u32 %v43, %v46
    %v62 = vxor.u32 %v44, %v46
    %v63 = vshrl.u32 %v47, 16
    %v64 = vshrl.u32 %v48, 16
    %v65 = vshrl.u32 %v49, 16
    %v66 = vshrl.u32 %v50, 16
    %v67 = vshrl.u32 %v51, 16
    %v68 = vshrl.u32 %v52, 16
    %v69 = vshrl.u32 %v53, 16
    %v70 = vshrl.u32 %v54, 16
    %v71 = vshrl.u32 %v55, 16
    %v72 = vshrl.u32 %v56, 16
    %v73 = vshrl.u32 %v57, 16
    %v74 = vshrl.u32 %v58, 16
    %v75 = vshrl.u32 %v59, 16
    %v76 = vshrl.u32 %v60, 16
    %v77 = vshrl.u32 %v61, 16
    %v78 = vshrl.u32 %v62, 16
    %v79 = vxor.u32 %v47, %v63
    %v80 = vxor.u32 %v48, %v64
    %v81 = vxor.u32 %v49, %v65
    %v82 = vxor.u32 %v50, %v66
    %v83 = vxor.u32 %v51, %v67
    %v84 = vxor.u32 %v52, %v68
    %v85 = vxor.u32 %v53, %v69
    %v86 = vxor.u32 %v54, %v70
    %v87 = vxor.u32 %v55, %v71
    %v88 = vxor.u32 %v56, %v72
    %v89 = vxor.u32 %v57, %v73
    %v90 = vxor.u32 %v58, %v74
    %v91 = vxor.u32 %v59, %v75
    %v92 = vxor.u32 %v60, %v76
    %v93 = vxor.u32 %v61, %v77
    %v94 = vxor.u32 %v62, %v78
    %v95 = vmul.u32 %v79, 2146121005
    %v96 = vmul.u32 %v80, 2146121005
    %v97 = vmul.u32 %v81, 2146121005
    %v98 = vmul.u32 %v82, 2146121005
    %v99 = vmul.u32 %v83, 2146121005
    %v100 = vmul.u32 %v84, 2146121005
    %v101 = vmul.u32 %v85, 2146121005
    %v102 = vmul.u32 %v86, 2146121005
    %v103 = vmul.u32 %v87, 2146121005
    %v104 = vmul.u32 %v88, 2146121005
    %v105 = vmul.u32 %v89, 2146121005
    %v106 = vmul.u32 %v90, 2146121005
    %v107 = vmul.u32 %v91, 2146121005
    %v108 = vmul.u32 %v92, 2146121005
    %v109 = vmul.u32 %v93, 2146121005
    %v110 = vmul.u32 %v94, 2146121005
    %v111 = vshrl.u32 %v95, 15
    %v112 = vshrl.u32 %v96, 15
    %v113 = vshrl.u32 %v97, 15
    %v114 = vshrl.u32 %v98, 15
    %v115 = vshrl.u32 %v99, 15
    %v116 = vshrl.u32 %v100, 15
    %v117 = vshrl.u32 %v101, 15
    %v118 = vshrl.u32 %v102, 15
    %v119 = vshrl.u32 %v103, 15
    %v120 = vshrl.u32 %v104, 15
    %v121 = vshrl.u32 %v105, 15
    %v122 = vshrl.u32 %v106, 15
    %v123 = vshrl.u32 %v107, 15
    %v124 = vshrl.u32 %v108, 15
    %v125 = vshrl.u32 %v109, 15
    %v126 = vshrl.u32 %v110, 15
    %v127 = vxor.u32 %v95, %v111
    %v128 = vxor.u32 %v96, %v112
    %v129 = vxor.u32 %v97, %v113
    %v130 = vxor.u32 %v98, %v114
    %v131 = vxor.u32 %v99, %v115
    %v132 = vxor.u32 %v100, %v116
    %v133 = vxor.u32 %v101, %v117
    %v134 = vxor.u32 %v102, %v118
    %v135 = vxor.u32 %v103, %v119
    %v136 = vxor.u32 %v104, %v120
    %v137 = vxor.u32 %v105, %v121
    %v138 = vxor.u32 %v106, %v122
    %v139 = vxor.u32 %v107, %v123
    %v140 = vxor.u32 %v108, %v124
    %v141 = vxor.u32 %v109, %v125
    %v142 = vxor.u32 %v110, %v126
    %v143 = vmul.u32 %v127, 2221713035
    %v144 = vmul.u32 %v128, 2221713035
    %v145 = vmul.u32 %v129, 2221713035
    %v146 = vmul.u32 %v130, 2221713035
    %v147 = vmul.u32 %v131, 2221713035
    %v148 = vmul.u32 %v132, 2221713035
    %v149 = vmul.u32 %v133, 2221713035
    %v150 = vmul.u32 %v134, 2221713035
    %v151 = vmul.u32 %v135, 2221713035
    %v152 = vmul.u32 %v136, 2221713035
    %v153 = vmul.u32 %v137, 2221713035
    %v154 = vmul.u32 %v138, 2221713035
    %v155 = vmul.u32 %v139, 2221713035
    %v156 = vmul.u32 %v140, 2221713035
    %v157 = vmul.u32 %v141, 2221713035
    %v158 = vmul.u32 %v142, 2221713035
    %v159 = vshrl.u32 %v143, 16
    %v160 = vshrl.u32 %v144, 16
    %v161 = vshrl.u32 %v145, 16
    %v162 = vshrl.u32 %v146, 16
    %v163 = vshrl.u32 %v147, 16
    %v164 = vshrl.u32 %v148, 16
    %v165 = vshrl.u32 %v149, 16
    %v166 = vshrl.u32 %v150, 16
    %v167 = vshrl.u32 %v151, 16
    %v168 = vshrl.u32 %v152, 16
    %v169 = vshrl.u32 %v153, 16
    %v170 = vshrl.u32 %v154, 16
    %v171 = vshrl.u32 %v155, 16
    %v172 = vshrl.u32 %v156, 16
    %v173 = vshrl.u32 %v157, 16
    %v174 = vshrl.u32 %v158, 16
    %v175 = vxor.u32 %v143, %v159
    %v176 = vxor.u32 %v144, %v160
    %v177 = vxor.u32 %v145, %v161
    %v178 = vxor.u32 %v146, %v162
    %v179 = vxor.u32 %v147, %v163
    %v180 = vxor.u32 %v148, %v164
    %v181 = vxor.u32 %v149, %v165
    %v182 = vxor.u32 %v150, %v166
    %v183 = vxor.u32 %v151, %v167
    %v184 = vxor.u32 %v152, %v168
    %v185 = vxor.u32 %v153, %v169
    %v186 = vxor.u32 %v154, %v170
    %v187 = vxor.u32 %v155, %v171
    %v188 = vxor.u32 %v156, %v172
    %v189 = vxor.u32 %v157, %v173
    %v190 = vxor.u32 %v158, %v174
    %s191 = sld [smem:[#allocation3 + $0x1]]
    %v192 = vstv %s191
    %v193 = vxor.u32 %v29, %v192
    %v194 = vxor.u32 %v30, %v192
    %v195 = vxor.u32 %v31, %v192
    %v196 = vxor.u32 %v32, %v192
    %v197 = vxor.u32 %v33, %v192
    %v198 = vxor.u32 %v34, %v192
    %v199 = vxor.u32 %v35, %v192
    %v200 = vxor.u32 %v36, %v192
    %v201 = vxor.u32 %v37, %v192
    %v202 = vxor.u32 %v38, %v192
    %v203 = vxor.u32 %v39, %v192
    %v204 = vxor.u32 %v40, %v192
    %v205 = vxor.u32 %v41, %v192
    %v206 = vxor.u32 %v42, %v192
    %v207 = vxor.u32 %v43, %v192
    %v208 = vxor.u32 %v44, %v192
    %v209 = vshrl.u32 %v193, 16
    %v210 = vshrl.u32 %v194, 16
    %v211 = vshrl.u32 %v195, 16
    %v212 = vshrl.u32 %v196, 16
    %v213 = vshrl.u32 %v197, 16
    %v214 = vshrl.u32 %v198, 16
    %v215 = vshrl.u32 %v199, 16
    %v216 = vshrl.u32 %v200, 16
    %v217 = vshrl.u32 %v201, 16
    %v218 = vshrl.u32 %v202, 16
    %v219 = vshrl.u32 %v203, 16
    %v220 = vshrl.u32 %v204, 16
    %v221 = vshrl.u32 %v205, 16
    %v222 = vshrl.u32 %v206, 16
    %v223 = vshrl.u32 %v207, 16
    %v224 = vshrl.u32 %v208, 16
    %v225 = vxor.u32 %v193, %v209
    %v226 = vxor.u32 %v194, %v210
    %v227 = vxor.u32 %v195, %v211
    %v228 = vxor.u32 %v196, %v212
    %v229 = vxor.u32 %v197, %v213
    %v230 = vxor.u32 %v198, %v214
    %v231 = vxor.u32 %v199, %v215
    %v232 = vxor.u32 %v200, %v216
    %v233 = vxor.u32 %v201, %v217
    %v234 = vxor.u32 %v202, %v218
    %v235 = vxor.u32 %v203, %v219
    %v236 = vxor.u32 %v204, %v220
    %v237 = vxor.u32 %v205, %v221
    %v238 = vxor.u32 %v206, %v222
    %v239 = vxor.u32 %v207, %v223
    %v240 = vxor.u32 %v208, %v224
    %v241 = vmul.u32 %v225, 2146121005
    %v242 = vmul.u32 %v226, 2146121005
    %v243 = vmul.u32 %v227, 2146121005
    %v244 = vmul.u32 %v228, 2146121005
    %v245 = vmul.u32 %v229, 2146121005
    %v246 = vmul.u32 %v230, 2146121005
    %v247 = vmul.u32 %v231, 2146121005
    %v248 = vmul.u32 %v232, 2146121005
    %v249 = vmul.u32 %v233, 2146121005
    %v250 = vmul.u32 %v234, 2146121005
    %v251 = vmul.u32 %v235, 2146121005
    %v252 = vmul.u32 %v236, 2146121005
    %v253 = vmul.u32 %v237, 2146121005
    %v254 = vmul.u32 %v238, 2146121005
    %v255 = vmul.u32 %v239, 2146121005
    %v256 = vmul.u32 %v240, 2146121005
    %v257 = vshrl.u32 %v241, 15
    %v258 = vshrl.u32 %v242, 15
    %v259 = vshrl.u32 %v243, 15
    %v260 = vshrl.u32 %v244, 15
    %v261 = vshrl.u32 %v245, 15
    %v262 = vshrl.u32 %v246, 15
    %v263 = vshrl.u32 %v247, 15
    %v264 = vshrl.u32 %v248, 15
    %v265 = vshrl.u32 %v249, 15
    %v266 = vshrl.u32 %v250, 15
    %v267 = vshrl.u32 %v251, 15
    %v268 = vshrl.u32 %v252, 15
    %v269 = vshrl.u32 %v253, 15
    %v270 = vshrl.u32 %v254, 15
    %v271 = vshrl.u32 %v255, 15
    %v272 = vshrl.u32 %v256, 15
    %v273 = vxor.u32 %v241, %v257
    %v274 = vxor.u32 %v242, %v258
    %v275 = vxor.u32 %v243, %v259
    %v276 = vxor.u32 %v244, %v260
    %v277 = vxor.u32 %v245, %v261
    %v278 = vxor.u32 %v246, %v262
    %v279 = vxor.u32 %v247, %v263
    %v280 = vxor.u32 %v248, %v264
    %v281 = vxor.u32 %v249, %v265
    %v282 = vxor.u32 %v250, %v266
    %v283 = vxor.u32 %v251, %v267
    %v284 = vxor.u32 %v252, %v268
    %v285 = vxor.u32 %v253, %v269
    %v286 = vxor.u32 %v254, %v270
    %v287 = vxor.u32 %v255, %v271
    %v288 = vxor.u32 %v256, %v272
    %v289 = vmul.u32 %v273, 2221713035
    %v290 = vmul.u32 %v274, 2221713035
    %v291 = vmul.u32 %v275, 2221713035
    %v292 = vmul.u32 %v276, 2221713035
    %v293 = vmul.u32 %v277, 2221713035
    %v294 = vmul.u32 %v278, 2221713035
    %v295 = vmul.u32 %v279, 2221713035
    %v296 = vmul.u32 %v280, 2221713035
    %v297 = vmul.u32 %v281, 2221713035
    %v298 = vmul.u32 %v282, 2221713035
    %v299 = vmul.u32 %v283, 2221713035
    %v300 = vmul.u32 %v284, 2221713035
    %v301 = vmul.u32 %v285, 2221713035
    %v302 = vmul.u32 %v286, 2221713035
    %v303 = vmul.u32 %v287, 2221713035
    %v304 = vmul.u32 %v288, 2221713035
    %v305 = vshrl.u32 %v289, 16
    %v306 = vshrl.u32 %v290, 16
    %v307 = vshrl.u32 %v291, 16
    %v308 = vshrl.u32 %v292, 16
    %v309 = vshrl.u32 %v293, 16
    %v310 = vshrl.u32 %v294, 16
    %v311 = vshrl.u32 %v295, 16
    %v312 = vshrl.u32 %v296, 16
    %v313 = vshrl.u32 %v297, 16
    %v314 = vshrl.u32 %v298, 16
    %v315 = vshrl.u32 %v299, 16
    %v316 = vshrl.u32 %v300, 16
    %v317 = vshrl.u32 %v301, 16
    %v318 = vshrl.u32 %v302, 16
    %v319 = vshrl.u32 %v303, 16
    %v320 = vshrl.u32 %v304, 16
    %v321 = vxor.u32 %v289, %v305
    %v322 = vxor.u32 %v290, %v306
    %v323 = vxor.u32 %v291, %v307
    %v324 = vxor.u32 %v292, %v308
    %v325 = vxor.u32 %v293, %v309
    %v326 = vxor.u32 %v294, %v310
    %v327 = vxor.u32 %v295, %v311
    %v328 = vxor.u32 %v296, %v312
    %v329 = vxor.u32 %v297, %v313
    %v330 = vxor.u32 %v298, %v314
    %v331 = vxor.u32 %v299, %v315
    %v332 = vxor.u32 %v300, %v316
    %v333 = vxor.u32 %v301, %v317
    %v334 = vxor.u32 %v302, %v318
    %v335 = vxor.u32 %v303, %v319
    %v336 = vxor.u32 %v304, %v320
    %v337 = vshrl.u32 %v175, 8
    %v338 = vshrl.u32 %v176, 8
    %v339 = vshrl.u32 %v177, 8
    %v340 = vshrl.u32 %v178, 8
    %v341 = vshrl.u32 %v179, 8
    %v342 = vshrl.u32 %v180, 8
    %v343 = vshrl.u32 %v181, 8
    %v344 = vshrl.u32 %v182, 8
    %v345 = vshrl.u32 %v183, 8
    %v346 = vshrl.u32 %v184, 8
    %v347 = vshrl.u32 %v185, 8
    %v348 = vshrl.u32 %v186, 8
    %v349 = vshrl.u32 %v187, 8
    %v350 = vshrl.u32 %v188, 8
    %v351 = vshrl.u32 %v189, 8
    %v352 = vshrl.u32 %v190, 8
    %v353 = vcvt.s32.f32 %v337
    %v354 = vcvt.s32.f32 %v338
    %v355 = vcvt.s32.f32 %v339
    %v356 = vcvt.s32.f32 %v340
    %v357 = vcvt.s32.f32 %v341
    %v358 = vcvt.s32.f32 %v342
    %v359 = vcvt.s32.f32 %v343
    %v360 = vcvt.s32.f32 %v344
    %v361 = vcvt.s32.f32 %v345
    %v362 = vcvt.s32.f32 %v346
    %v363 = vcvt.s32.f32 %v347
    %v364 = vcvt.s32.f32 %v348
    %v365 = vcvt.s32.f32 %v349
    %v366 = vcvt.s32.f32 %v350
    %v367 = vcvt.s32.f32 %v351
    %v368 = vcvt.s32.f32 %v352
    %v369 = vshrl.u32 %v321, 8
    %v370 = vshrl.u32 %v322, 8
    %v371 = vshrl.u32 %v323, 8
    %v372 = vshrl.u32 %v324, 8
    %v373 = vshrl.u32 %v325, 8
    %v374 = vshrl.u32 %v326, 8
    %v375 = vshrl.u32 %v327, 8
    %v376 = vshrl.u32 %v328, 8
    %v377 = vshrl.u32 %v329, 8
    %v378 = vshrl.u32 %v330, 8
    %v379 = vshrl.u32 %v331, 8
    %v380 = vshrl.u32 %v332, 8
    %v381 = vshrl.u32 %v333, 8
    %v382 = vshrl.u32 %v334, 8
    %v383 = vshrl.u32 %v335, 8
    %v384 = vshrl.u32 %v336, 8
    %v385 = vcvt.s32.f32 %v369
    %v386 = vcvt.s32.f32 %v370
    %v387 = vcvt.s32.f32 %v371
    %v388 = vcvt.s32.f32 %v372
    %v389 = vcvt.s32.f32 %v373
    %v390 = vcvt.s32.f32 %v374
    %v391 = vcvt.s32.f32 %v375
    %v392 = vcvt.s32.f32 %v376
    %v393 = vcvt.s32.f32 %v377
    %v394 = vcvt.s32.f32 %v378
    %v395 = vcvt.s32.f32 %v379
    %v396 = vcvt.s32.f32 %v380
    %v397 = vcvt.s32.f32 %v381
    %v398 = vcvt.s32.f32 %v382
    %v399 = vcvt.s32.f32 %v383
    %v400 = vcvt.s32.f32 %v384
    %v401 = vadd.f32 %v353, 0.5
    %v402 = vadd.f32 %v354, 0.5
    %v403 = vadd.f32 %v355, 0.5
    %v404 = vadd.f32 %v356, 0.5
    %v405 = vadd.f32 %v357, 0.5
    %v406 = vadd.f32 %v358, 0.5
    %v407 = vadd.f32 %v359, 0.5
    %v408 = vadd.f32 %v360, 0.5
    %v409 = vadd.f32 %v361, 0.5
    %v410 = vadd.f32 %v362, 0.5
    %v411 = vadd.f32 %v363, 0.5
    %v412 = vadd.f32 %v364, 0.5
    %v413 = vadd.f32 %v365, 0.5
    %v414 = vadd.f32 %v366, 0.5
    %v415 = vadd.f32 %v367, 0.5
    %v416 = vadd.f32 %v368, 0.5
    %v417 = vmul.f32 %v401, 5.9604645e-08
    %v418 = vmul.f32 %v402, 5.9604645e-08
    %v419 = vmul.f32 %v403, 5.9604645e-08
    %v420 = vmul.f32 %v404, 5.9604645e-08
    %v421 = vmul.f32 %v405, 5.9604645e-08
    %v422 = vmul.f32 %v406, 5.9604645e-08
    %v423 = vmul.f32 %v407, 5.9604645e-08
    %v424 = vmul.f32 %v408, 5.9604645e-08
    %v425 = vmul.f32 %v409, 5.9604645e-08
    %v426 = vmul.f32 %v410, 5.9604645e-08
    %v427 = vmul.f32 %v411, 5.9604645e-08
    %v428 = vmul.f32 %v412, 5.9604645e-08
    %v429 = vmul.f32 %v413, 5.9604645e-08
    %v430 = vmul.f32 %v414, 5.9604645e-08
    %v431 = vmul.f32 %v415, 5.9604645e-08
    %v432 = vmul.f32 %v416, 5.9604645e-08
    %v433 = vmul.f32 %v385, 5.9604645e-08
    %v434 = vmul.f32 %v386, 5.9604645e-08
    %v435 = vmul.f32 %v387, 5.9604645e-08
    %v436 = vmul.f32 %v388, 5.9604645e-08
    %v437 = vmul.f32 %v389, 5.9604645e-08
    %v438 = vmul.f32 %v390, 5.9604645e-08
    %v439 = vmul.f32 %v391, 5.9604645e-08
    %v440 = vmul.f32 %v392, 5.9604645e-08
    %v441 = vmul.f32 %v393, 5.9604645e-08
    %v442 = vmul.f32 %v394, 5.9604645e-08
    %v443 = vmul.f32 %v395, 5.9604645e-08
    %v444 = vmul.f32 %v396, 5.9604645e-08
    %v445 = vmul.f32 %v397, 5.9604645e-08
    %v446 = vmul.f32 %v398, 5.9604645e-08
    %v447 = vmul.f32 %v399, 5.9604645e-08
    %v448 = vmul.f32 %v400, 5.9604645e-08
    %v449 = vlog2.pop %v417
    %v450 = vmul.f32 %v449, 0.6931472
    %v451 = vlog2.pop %v418
    %v452 = vmul.f32 %v451, 0.6931472
    %v453 = vlog2.pop %v419
    %v454 = vmul.f32 %v453, 0.6931472
    %v455 = vlog2.pop %v420
    %v456 = vmul.f32 %v455, 0.6931472
    %v457 = vlog2.pop %v421
    %v458 = vmul.f32 %v457, 0.6931472
    %v459 = vlog2.pop %v422
    %v460 = vmul.f32 %v459, 0.6931472
    %v461 = vlog2.pop %v423
    %v462 = vmul.f32 %v461, 0.6931472
    %v463 = vlog2.pop %v424
    %v464 = vmul.f32 %v463, 0.6931472
    %v465 = vlog2.pop %v425
    %v466 = vmul.f32 %v465, 0.6931472
    %v467 = vlog2.pop %v426
    %v468 = vmul.f32 %v467, 0.6931472
    %v469 = vlog2.pop %v427
    %v470 = vmul.f32 %v469, 0.6931472
    %v471 = vlog2.pop %v428
    %v472 = vmul.f32 %v471, 0.6931472
    %v473 = vlog2.pop %v429
    %v474 = vmul.f32 %v473, 0.6931472
    %v475 = vlog2.pop %v430
    %v476 = vmul.f32 %v475, 0.6931472
    %v477 = vlog2.pop %v431
    %v478 = vmul.f32 %v477, 0.6931472
    %v479 = vlog2.pop %v432
    %v480 = vmul.f32 %v479, 0.6931472
    %v481 = vmul.f32 %v450, -2.0
    %v482 = vmul.f32 %v452, -2.0
    %v483 = vmul.f32 %v454, -2.0
    %v484 = vmul.f32 %v456, -2.0
    %v485 = vmul.f32 %v458, -2.0
    %v486 = vmul.f32 %v460, -2.0
    %v487 = vmul.f32 %v462, -2.0
    %v488 = vmul.f32 %v464, -2.0
    %v489 = vmul.f32 %v466, -2.0
    %v490 = vmul.f32 %v468, -2.0
    %v491 = vmul.f32 %v470, -2.0
    %v492 = vmul.f32 %v472, -2.0
    %v493 = vmul.f32 %v474, -2.0
    %v494 = vmul.f32 %v476, -2.0
    %v495 = vmul.f32 %v478, -2.0
    %v496 = vmul.f32 %v480, -2.0
    %v497 = vrsqrt.pop %v481
    %v498 = vmul.f32 %v481, %v497
    %vm499 = vcmp.eq.f32.partialorder %v481, inf
    %v500 = vsel %vm499, %v481, %v498
    %vm501 = vcmp.eq.f32.partialorder %v481, 0.0
    %v502 = vand.u32 %v481, 2147483648
    %v503 = vsel %vm501, %v502, %v500
    %v504 = vrsqrt.pop %v482
    %v505 = vmul.f32 %v482, %v504
    %vm506 = vcmp.eq.f32.partialorder %v482, inf
    %v507 = vsel %vm506, %v482, %v505
    %vm508 = vcmp.eq.f32.partialorder %v482, 0.0
    %v509 = vand.u32 %v482, 2147483648
    %v510 = vsel %vm508, %v509, %v507
    %v511 = vrsqrt.pop %v483
    %v512 = vmul.f32 %v483, %v511
    %vm513 = vcmp.eq.f32.partialorder %v483, inf
    %v514 = vsel %vm513, %v483, %v512
    %vm515 = vcmp.eq.f32.partialorder %v483, 0.0
    %v516 = vand.u32 %v483, 2147483648
    %v517 = vsel %vm515, %v516, %v514
    %v518 = vrsqrt.pop %v484
    %v519 = vmul.f32 %v484, %v518
    %vm520 = vcmp.eq.f32.partialorder %v484, inf
    %v521 = vsel %vm520, %v484, %v519
    %vm522 = vcmp.eq.f32.partialorder %v484, 0.0
    %v523 = vand.u32 %v484, 2147483648
    %v524 = vsel %vm522, %v523, %v521
    %v525 = vrsqrt.pop %v485
    %v526 = vmul.f32 %v485, %v525
    %vm527 = vcmp.eq.f32.partialorder %v485, inf
    %v528 = vsel %vm527, %v485, %v526
    %vm529 = vcmp.eq.f32.partialorder %v485, 0.0
    %v530 = vand.u32 %v485, 2147483648
    %v531 = vsel %vm529, %v530, %v528
    %v532 = vrsqrt.pop %v486
    %v533 = vmul.f32 %v486, %v532
    %vm534 = vcmp.eq.f32.partialorder %v486, inf
    %v535 = vsel %vm534, %v486, %v533
    %vm536 = vcmp.eq.f32.partialorder %v486, 0.0
    %v537 = vand.u32 %v486, 2147483648
    %v538 = vsel %vm536, %v537, %v535
    %v539 = vrsqrt.pop %v487
    %v540 = vmul.f32 %v487, %v539
    %vm541 = vcmp.eq.f32.partialorder %v487, inf
    %v542 = vsel %vm541, %v487, %v540
    %vm543 = vcmp.eq.f32.partialorder %v487, 0.0
    %v544 = vand.u32 %v487, 2147483648
    %v545 = vsel %vm543, %v544, %v542
    %v546 = vrsqrt.pop %v488
    %v547 = vmul.f32 %v488, %v546
    %vm548 = vcmp.eq.f32.partialorder %v488, inf
    %v549 = vsel %vm548, %v488, %v547
    %vm550 = vcmp.eq.f32.partialorder %v488, 0.0
    %v551 = vand.u32 %v488, 2147483648
    %v552 = vsel %vm550, %v551, %v549
    %v553 = vrsqrt.pop %v489
    %v554 = vmul.f32 %v489, %v553
    %vm555 = vcmp.eq.f32.partialorder %v489, inf
    %v556 = vsel %vm555, %v489, %v554
    %vm557 = vcmp.eq.f32.partialorder %v489, 0.0
    %v558 = vand.u32 %v489, 2147483648
    %v559 = vsel %vm557, %v558, %v556
    %v560 = vrsqrt.pop %v490
    %v561 = vmul.f32 %v490, %v560
    %vm562 = vcmp.eq.f32.partialorder %v490, inf
    %v563 = vsel %vm562, %v490, %v561
    %vm564 = vcmp.eq.f32.partialorder %v490, 0.0
    %v565 = vand.u32 %v490, 2147483648
    %v566 = vsel %vm564, %v565, %v563
    %v567 = vrsqrt.pop %v491
    %v568 = vmul.f32 %v491, %v567
    %vm569 = vcmp.eq.f32.partialorder %v491, inf
    %v570 = vsel %vm569, %v491, %v568
    %vm571 = vcmp.eq.f32.partialorder %v491, 0.0
    %v572 = vand.u32 %v491, 2147483648
    %v573 = vsel %vm571, %v572, %v570
    %v574 = vrsqrt.pop %v492
    %v575 = vmul.f32 %v492, %v574
    %vm576 = vcmp.eq.f32.partialorder %v492, inf
    %v577 = vsel %vm576, %v492, %v575
    %vm578 = vcmp.eq.f32.partialorder %v492, 0.0
    %v579 = vand.u32 %v492, 2147483648
    %v580 = vsel %vm578, %v579, %v577
    %v581 = vrsqrt.pop %v493
    %v582 = vmul.f32 %v493, %v581
    %vm583 = vcmp.eq.f32.partialorder %v493, inf
    %v584 = vsel %vm583, %v493, %v582
    %vm585 = vcmp.eq.f32.partialorder %v493, 0.0
    %v586 = vand.u32 %v493, 2147483648
    %v587 = vsel %vm585, %v586, %v584
    %v588 = vrsqrt.pop %v494
    %v589 = vmul.f32 %v494, %v588
    %vm590 = vcmp.eq.f32.partialorder %v494, inf
    %v591 = vsel %vm590, %v494, %v589
    %vm592 = vcmp.eq.f32.partialorder %v494, 0.0
    %v593 = vand.u32 %v494, 2147483648
    %v594 = vsel %vm592, %v593, %v591
    %v595 = vrsqrt.pop %v495
    %v596 = vmul.f32 %v495, %v595
    %vm597 = vcmp.eq.f32.partialorder %v495, inf
    %v598 = vsel %vm597, %v495, %v596
    %vm599 = vcmp.eq.f32.partialorder %v495, 0.0
    %v600 = vand.u32 %v495, 2147483648
    %v601 = vsel %vm599, %v600, %v598
    %v602 = vrsqrt.pop %v496
    %v603 = vmul.f32 %v496, %v602
    %vm604 = vcmp.eq.f32.partialorder %v496, inf
    %v605 = vsel %vm604, %v496, %v603
    %vm606 = vcmp.eq.f32.partialorder %v496, 0.0
    %v607 = vand.u32 %v496, 2147483648
    %v608 = vsel %vm606, %v607, %v605
    %v609 = vmul.f32 %v433, 6.2831855
    %v610 = vmul.f32 %v434, 6.2831855
    %v611 = vmul.f32 %v435, 6.2831855
    %v612 = vmul.f32 %v436, 6.2831855
    %v613 = vmul.f32 %v437, 6.2831855
    %v614 = vmul.f32 %v438, 6.2831855
    %v615 = vmul.f32 %v439, 6.2831855
    %v616 = vmul.f32 %v440, 6.2831855
    %v617 = vmul.f32 %v441, 6.2831855
    %v618 = vmul.f32 %v442, 6.2831855
    %v619 = vmul.f32 %v443, 6.2831855
    %v620 = vmul.f32 %v444, 6.2831855
    %v621 = vmul.f32 %v445, 6.2831855
    %v622 = vmul.f32 %v446, 6.2831855
    %v623 = vmul.f32 %v447, 6.2831855
    %v624 = vmul.f32 %v448, 6.2831855
    %v625 = vand.u32 2147483647, %v609
    %vm626 = vcmp.le.f32.partialorder %v625, 0.7853982
    %vm627 = vcmp.lt.s32.totalorder %v609, 0
    %v628 = vand.u32 %v609, 2139095040
    %v629 = vshrl.u32 %v628, 23
    %v630 = vsub.s32 %v629, 127
    %v631 = vand.u32 2147483647, %v609
    %v632 = vand.u32 %v631, 8388607
    %v633 = vor.u32 %v632, 8388608
    %v634 = vsub.s32 0, %v633
    %v635 = vadd.s32 %v630, 1
    %vm636 = vcmp.gt.s32.totalorder %v635, 0
    %v637 = vsel %vm636, %v635, 0
    %v638 = vshrl.u32 %v637, 5
    %v639 = vand.u32 %v637, 31
    %v640 = vsub.s32 32, %v639
    %v641 = vshrl.u32 683565275, %v640
    %v642 = vshll.u32 683565275, %v639
    %v643 = vshrl.u32 2475754826, %v640
    %v644 = vor.u32 %v642, %v643
    %v645 = vshll.u32 2475754826, %v639
    %v646 = vshrl.u32 2131351028, %v640
    %v647 = vor.u32 %v645, %v646
    %v648 = vshll.u32 2131351028, %v639
    %v649 = vshrl.u32 2102212464, %v640
    %v650 = vor.u32 %v648, %v649
    %v651 = vshll.u32 2102212464, %v639
    %v652 = vshrl.u32 920167782, %v640
    %v653 = vor.u32 %v651, %v652
    %v654 = vshll.u32 920167782, %v639
    %v655 = vshrl.u32 1326507024, %v640
    %v656 = vor.u32 %v654, %v655
    %vm657 = vcmp.lt.s32.totalorder %v638, 1
    %vm658 = vcmp.lt.s32.totalorder %v638, 2
    %vm659 = vcmp.lt.s32.totalorder %v638, 3
    %vm660 = vcmp.lt.s32.totalorder %v638, 4
    %v661 = vsel %vm657, %v641, %v644
    %v662 = vsel %vm660, %v650, 2102212464
    %v663 = vsel %vm659, %v647, %v662
    %v664 = vsel %vm658, %v661, %v663
    %v665 = vsel %vm657, %v644, %v647
    %v666 = vsel %vm660, %v653, 920167782
    %v667 = vsel %vm659, %v650, %v666
    %v668 = vsel %vm658, %v665, %v667
    %v669 = vsel %vm657, %v647, %v650
    %v670 = vsel %vm660, %v656, 1326507024
    %v671 = vsel %vm659, %v653, %v670
    %v672 = vsel %vm658, %v669, %v671
    %v673 = vshll.u32 %v633, 8
    %v674 = vmul.u32.u64.compose %v673, %v672
    %v675 = vextract.low.u32 %v674
    %v676 = vextract.high.u32 %v674
    %v677 = vmul.u32.u64.compose %v673, %v668
    %v678 = vextract.low.u32 %v677
    %v679 = vextract.high.u32 %v677
    %v680 = vmul.u32 %v673, %v664
    %v681 = vadd.s32 %v676, %v678
    %vm682 = vc.u32 %v676, %v678
    %v683 = vadd.s32 %v679, 1
    %v684 = vsel %vm682, %v683, %v679
    %v685 = vadd.s32 %v680, %v684
    %v686 = vadd.s32 %v685, 536870912
    %v687 = vshrl.u32 %v686, 30
    %v688 = vshll.u32 %v687, 30
    %v689 = vsub.s32 %v685, %v688
    %vm690 = vcmp.lt.s32.totalorder %v689, 0
    %v691 = vsub.s32 0, %v689
    %v692 = vsel %vm690, %v691, %v689
    %v693 = vclz %v692
    %v694 = vsub.s32 %v693, 2
    %vm695 = vcmp.gt.s32.totalorder 0, %v694
    %v696 = vsel %vm695, 0, %v694
    %v697 = vsub.s32 32, %v696
    %v698 = vshll.u32 %v689, %v696
    %v699 = vshrl.u32 %v681, %v697
    %v700 = vor.u32 %v698, %v699
    %v701 = vsub.s32 4294967266, %v696
    %v702 = vadd.s32 %v701, 127
    %v703 = vshll.u32 %v702, 23
    %v704 = vor.u32 4788187, %v703
    %v705 = vand.u32 2147483647, %v704
    %v707 = vcvt.s32.f32 %v700
    %v708 = vmul.f32 %v707, %v705
    %v709 = vxor.u32 %v708, 2147483648
    %v710 = vsel %vm627, %v709, %v708
    %v711 = vsub.s32 4, %v687
    %v712 = vsel %vm627, %v711, %v687
    %v713 = vsel %vm626, %v609, %v710
    %v714 = vsel %vm626, 0, %v712
    %v715 = vcosq.f32.pop %v713
    %v716 = vsinq.f32.pop %v713
    %vm717 = vweird.f32 %v609
    %v718 = vand.u32 %v714, 3
    %vm719 = vcmp.lt.s32.totalorder %v718, 2
    %vm720 = vcmp.eq.s32.totalorder %v718, 0
    %v721 = vxor.u32 %v716, 2147483648
    %v722 = vsel %vm720, %v715, %v721
    %vm723 = vcmp.eq.s32.totalorder %v718, 2
    %v724 = vxor.u32 %v715, 2147483648
    %v725 = vsel %vm723, %v724, %v716
    %v726 = vsel %vm719, %v722, %v725
    %v727 = vsel %vm717, nan, %v726
    %v728 = vand.u32 2147483647, %v610
    %vm729 = vcmp.le.f32.partialorder %v728, 0.7853982
    %vm730 = vcmp.lt.s32.totalorder %v610, 0
    %v731 = vand.u32 %v610, 2139095040
    %v732 = vshrl.u32 %v731, 23
    %v733 = vsub.s32 %v732, 127
    %v734 = vand.u32 2147483647, %v610
    %v735 = vand.u32 %v734, 8388607
    %v736 = vor.u32 %v735, 8388608
    %v737 = vsub.s32 0, %v736
    %v738 = vadd.s32 %v733, 1
    %vm739 = vcmp.gt.s32.totalorder %v738, 0
    %v740 = vsel %vm739, %v738, 0
    %v741 = vshrl.u32 %v740, 5
    %v742 = vand.u32 %v740, 31
    %v743 = vsub.s32 32, %v742
    %v744 = vshrl.u32 683565275, %v743
    %v745 = vshll.u32 683565275, %v742
    %v746 = vshrl.u32 2475754826, %v743
    %v747 = vor.u32 %v745, %v746
    %v748 = vshll.u32 2475754826, %v742
    %v749 = vshrl.u32 2131351028, %v743
    %v750 = vor.u32 %v748, %v749
    %v751 = vshll.u32 2131351028, %v742
    %v752 = vshrl.u32 2102212464, %v743
    %v753 = vor.u32 %v751, %v752
    %v754 = vshll.u32 2102212464, %v742
    %v755 = vshrl.u32 920167782, %v743
    %v756 = vor.u32 %v754, %v755
    %v757 = vshll.u32 920167782, %v742
    %v758 = vshrl.u32 1326507024, %v743
    %v759 = vor.u32 %v757, %v758
    %vm760 = vcmp.lt.s32.totalorder %v741, 1
    %vm761 = vcmp.lt.s32.totalorder %v741, 2
    %vm762 = vcmp.lt.s32.totalorder %v741, 3
    %vm763 = vcmp.lt.s32.totalorder %v741, 4
    %v764 = vsel %vm760, %v744, %v747
    %v765 = vsel %vm763, %v753, 2102212464
    %v766 = vsel %vm762, %v750, %v765
    %v767 = vsel %vm761, %v764, %v766
    %v768 = vsel %vm760, %v747, %v750
    %v769 = vsel %vm763, %v756, 920167782
    %v770 = vsel %vm762, %v753, %v769
    %v771 = vsel %vm761, %v768, %v770
    %v772 = vsel %vm760, %v750, %v753
    %v773 = vsel %vm763, %v759, 1326507024
    %v774 = vsel %vm762, %v756, %v773
    %v775 = vsel %vm761, %v772, %v774
    %v776 = vshll.u32 %v736, 8
    %v777 = vmul.u32.u64.compose %v776, %v775
    %v778 = vextract.low.u32 %v777
    %v779 = vextract.high.u32 %v777
    %v780 = vmul.u32.u64.compose %v776, %v771
    %v781 = vextract.low.u32 %v780
    %v782 = vextract.high.u32 %v780
    %v783 = vmul.u32 %v776, %v767
    %v784 = vadd.s32 %v779, %v781
    %vm785 = vc.u32 %v779, %v781
    %v786 = vadd.s32 %v782, 1
    %v787 = vsel %vm785, %v786, %v782
    %v788 = vadd.s32 %v783, %v787
    %v789 = vadd.s32 %v788, 536870912
    %v790 = vshrl.u32 %v789, 30
    %v791 = vshll.u32 %v790, 30
    %v792 = vsub.s32 %v788, %v791
    %vm793 = vcmp.lt.s32.totalorder %v792, 0
    %v794 = vsub.s32 0, %v792
    %v795 = vsel %vm793, %v794, %v792
    %v796 = vclz %v795
    %v797 = vsub.s32 %v796, 2
    %vm798 = vcmp.gt.s32.totalorder 0, %v797
    %v799 = vsel %vm798, 0, %v797
    %v800 = vsub.s32 32, %v799
    %v801 = vshll.u32 %v792, %v799
    %v802 = vshrl.u32 %v784, %v800
    %v803 = vor.u32 %v801, %v802
    %v804 = vsub.s32 4294967266, %v799
    %v805 = vadd.s32 %v804, 127
    %v806 = vshll.u32 %v805, 23
    %v807 = vor.u32 4788187, %v806
    %v808 = vand.u32 2147483647, %v807
    %v810 = vcvt.s32.f32 %v803
    %v811 = vmul.f32 %v810, %v808
    %v812 = vxor.u32 %v811, 2147483648
    %v813 = vsel %vm730, %v812, %v811
    %v814 = vsub.s32 4, %v790
    %v815 = vsel %vm730, %v814, %v790
    %v816 = vsel %vm729, %v610, %v813
    %v817 = vsel %vm729, 0, %v815
    %v818 = vcosq.f32.pop %v816
    %v819 = vsinq.f32.pop %v816
    %vm820 = vweird.f32 %v610
    %v821 = vand.u32 %v817, 3
    %vm822 = vcmp.lt.s32.totalorder %v821, 2
    %vm823 = vcmp.eq.s32.totalorder %v821, 0
    %v824 = vxor.u32 %v819, 2147483648
    %v825 = vsel %vm823, %v818, %v824
    %vm826 = vcmp.eq.s32.totalorder %v821, 2
    %v827 = vxor.u32 %v818, 2147483648
    %v828 = vsel %vm826, %v827, %v819
    %v829 = vsel %vm822, %v825, %v828
    %v830 = vsel %vm820, nan, %v829
    %v831 = vand.u32 2147483647, %v611
    %vm832 = vcmp.le.f32.partialorder %v831, 0.7853982
    %vm833 = vcmp.lt.s32.totalorder %v611, 0
    %v834 = vand.u32 %v611, 2139095040
    %v835 = vshrl.u32 %v834, 23
    %v836 = vsub.s32 %v835, 127
    %v837 = vand.u32 2147483647, %v611
    %v838 = vand.u32 %v837, 8388607
    %v839 = vor.u32 %v838, 8388608
    %v840 = vsub.s32 0, %v839
    %v841 = vadd.s32 %v836, 1
    %vm842 = vcmp.gt.s32.totalorder %v841, 0
    %v843 = vsel %vm842, %v841, 0
    %v844 = vshrl.u32 %v843, 5
    %v845 = vand.u32 %v843, 31
    %v846 = vsub.s32 32, %v845
    %v847 = vshrl.u32 683565275, %v846
    %v848 = vshll.u32 683565275, %v845
    %v849 = vshrl.u32 2475754826, %v846
    %v850 = vor.u32 %v848, %v849
    %v851 = vshll.u32 2475754826, %v845
    %v852 = vshrl.u32 2131351028, %v846
    %v853 = vor.u32 %v851, %v852
    %v854 = vshll.u32 2131351028, %v845
    %v855 = vshrl.u32 2102212464, %v846
    %v856 = vor.u32 %v854, %v855
    %v857 = vshll.u32 2102212464, %v845
    %v858 = vshrl.u32 920167782, %v846
    %v859 = vor.u32 %v857, %v858
    %v860 = vshll.u32 920167782, %v845
    %v861 = vshrl.u32 1326507024, %v846
    %v862 = vor.u32 %v860, %v861
    %vm863 = vcmp.lt.s32.totalorder %v844, 1
    %vm864 = vcmp.lt.s32.totalorder %v844, 2
    %vm865 = vcmp.lt.s32.totalorder %v844, 3
    %vm866 = vcmp.lt.s32.totalorder %v844, 4
    %v867 = vsel %vm863, %v847, %v850
    %v868 = vsel %vm866, %v856, 2102212464
    %v869 = vsel %vm865, %v853, %v868
    %v870 = vsel %vm864, %v867, %v869
    %v871 = vsel %vm863, %v850, %v853
    %v872 = vsel %vm866, %v859, 920167782
    %v873 = vsel %vm865, %v856, %v872
    %v874 = vsel %vm864, %v871, %v873
    %v875 = vsel %vm863, %v853, %v856
    %v876 = vsel %vm866, %v862, 1326507024
    %v877 = vsel %vm865, %v859, %v876
    %v878 = vsel %vm864, %v875, %v877
    %v879 = vshll.u32 %v839, 8
    %v880 = vmul.u32.u64.compose %v879, %v878
    %v881 = vextract.low.u32 %v880
    %v882 = vextract.high.u32 %v880
    %v883 = vmul.u32.u64.compose %v879, %v874
    %v884 = vextract.low.u32 %v883
    %v885 = vextract.high.u32 %v883
    %v886 = vmul.u32 %v879, %v870
    %v887 = vadd.s32 %v882, %v884
    %vm888 = vc.u32 %v882, %v884
    %v889 = vadd.s32 %v885, 1
    %v890 = vsel %vm888, %v889, %v885
    %v891 = vadd.s32 %v886, %v890
    %v892 = vadd.s32 %v891, 536870912
    %v893 = vshrl.u32 %v892, 30
    %v894 = vshll.u32 %v893, 30
    %v895 = vsub.s32 %v891, %v894
    %vm896 = vcmp.lt.s32.totalorder %v895, 0
    %v897 = vsub.s32 0, %v895
    %v898 = vsel %vm896, %v897, %v895
    %v899 = vclz %v898
    %v900 = vsub.s32 %v899, 2
    %vm901 = vcmp.gt.s32.totalorder 0, %v900
    %v902 = vsel %vm901, 0, %v900
    %v903 = vsub.s32 32, %v902
    %v904 = vshll.u32 %v895, %v902
    %v905 = vshrl.u32 %v887, %v903
    %v906 = vor.u32 %v904, %v905
    %v907 = vsub.s32 4294967266, %v902
    %v908 = vadd.s32 %v907, 127
    %v909 = vshll.u32 %v908, 23
    %v910 = vor.u32 4788187, %v909
    %v911 = vand.u32 2147483647, %v910
    %v913 = vcvt.s32.f32 %v906
    %v914 = vmul.f32 %v913, %v911
    %v915 = vxor.u32 %v914, 2147483648
    %v916 = vsel %vm833, %v915, %v914
    %v917 = vsub.s32 4, %v893
    %v918 = vsel %vm833, %v917, %v893
    %v919 = vsel %vm832, %v611, %v916
    %v920 = vsel %vm832, 0, %v918
    %v921 = vcosq.f32.pop %v919
    %v922 = vsinq.f32.pop %v919
    %vm923 = vweird.f32 %v611
    %v924 = vand.u32 %v920, 3
    %vm925 = vcmp.lt.s32.totalorder %v924, 2
    %vm926 = vcmp.eq.s32.totalorder %v924, 0
    %v927 = vxor.u32 %v922, 2147483648
    %v928 = vsel %vm926, %v921, %v927
    %vm929 = vcmp.eq.s32.totalorder %v924, 2
    %v930 = vxor.u32 %v921, 2147483648
    %v931 = vsel %vm929, %v930, %v922
    %v932 = vsel %vm925, %v928, %v931
    %v933 = vsel %vm923, nan, %v932
    %v934 = vand.u32 2147483647, %v612
    %vm935 = vcmp.le.f32.partialorder %v934, 0.7853982
    %vm936 = vcmp.lt.s32.totalorder %v612, 0
    %v937 = vand.u32 %v612, 2139095040
    %v938 = vshrl.u32 %v937, 23
    %v939 = vsub.s32 %v938, 127
    %v940 = vand.u32 2147483647, %v612
    %v941 = vand.u32 %v940, 8388607
    %v942 = vor.u32 %v941, 8388608
    %v943 = vsub.s32 0, %v942
    %v944 = vadd.s32 %v939, 1
    %vm945 = vcmp.gt.s32.totalorder %v944, 0
    %v946 = vsel %vm945, %v944, 0
    %v947 = vshrl.u32 %v946, 5
    %v948 = vand.u32 %v946, 31
    %v949 = vsub.s32 32, %v948
    %v950 = vshrl.u32 683565275, %v949
    %v951 = vshll.u32 683565275, %v948
    %v952 = vshrl.u32 2475754826, %v949
    %v953 = vor.u32 %v951, %v952
    %v954 = vshll.u32 2475754826, %v948
    %v955 = vshrl.u32 2131351028, %v949
    %v956 = vor.u32 %v954, %v955
    %v957 = vshll.u32 2131351028, %v948
    %v958 = vshrl.u32 2102212464, %v949
    %v959 = vor.u32 %v957, %v958
    %v960 = vshll.u32 2102212464, %v948
    %v961 = vshrl.u32 920167782, %v949
    %v962 = vor.u32 %v960, %v961
    %v963 = vshll.u32 920167782, %v948
    %v964 = vshrl.u32 1326507024, %v949
    %v965 = vor.u32 %v963, %v964
    %vm966 = vcmp.lt.s32.totalorder %v947, 1
    %vm967 = vcmp.lt.s32.totalorder %v947, 2
    %vm968 = vcmp.lt.s32.totalorder %v947, 3
    %vm969 = vcmp.lt.s32.totalorder %v947, 4
    %v970 = vsel %vm966, %v950, %v953
    %v971 = vsel %vm969, %v959, 2102212464
    %v972 = vsel %vm968, %v956, %v971
    %v973 = vsel %vm967, %v970, %v972
    %v974 = vsel %vm966, %v953, %v956
    %v975 = vsel %vm969, %v962, 920167782
    %v976 = vsel %vm968, %v959, %v975
    %v977 = vsel %vm967, %v974, %v976
    %v978 = vsel %vm966, %v956, %v959
    %v979 = vsel %vm969, %v965, 1326507024
    %v980 = vsel %vm968, %v962, %v979
    %v981 = vsel %vm967, %v978, %v980
    %v982 = vshll.u32 %v942, 8
    %v983 = vmul.u32.u64.compose %v982, %v981
    %v984 = vextract.low.u32 %v983
    %v985 = vextract.high.u32 %v983
    %v986 = vmul.u32.u64.compose %v982, %v977
    %v987 = vextract.low.u32 %v986
    %v988 = vextract.high.u32 %v986
    %v989 = vmul.u32 %v982, %v973
    %v990 = vadd.s32 %v985, %v987
    %vm991 = vc.u32 %v985, %v987
    %v992 = vadd.s32 %v988, 1
    %v993 = vsel %vm991, %v992, %v988
    %v994 = vadd.s32 %v989, %v993
    %v995 = vadd.s32 %v994, 536870912
    %v996 = vshrl.u32 %v995, 30
    %v997 = vshll.u32 %v996, 30
    %v998 = vsub.s32 %v994, %v997
    %vm999 = vcmp.lt.s32.totalorder %v998, 0
    %v1000 = vsub.s32 0, %v998
    %v1001 = vsel %vm999, %v1000, %v998
    %v1002 = vclz %v1001
    %v1003 = vsub.s32 %v1002, 2
    %vm1004 = vcmp.gt.s32.totalorder 0, %v1003
    %v1005 = vsel %vm1004, 0, %v1003
    %v1006 = vsub.s32 32, %v1005
    %v1007 = vshll.u32 %v998, %v1005
    %v1008 = vshrl.u32 %v990, %v1006
    %v1009 = vor.u32 %v1007, %v1008
    %v1010 = vsub.s32 4294967266, %v1005
    %v1011 = vadd.s32 %v1010, 127
    %v1012 = vshll.u32 %v1011, 23
    %v1013 = vor.u32 4788187, %v1012
    %v1014 = vand.u32 2147483647, %v1013
    %v1016 = vcvt.s32.f32 %v1009
    %v1017 = vmul.f32 %v1016, %v1014
    %v1018 = vxor.u32 %v1017, 2147483648
    %v1019 = vsel %vm936, %v1018, %v1017
    %v1020 = vsub.s32 4, %v996
    %v1021 = vsel %vm936, %v1020, %v996
    %v1022 = vsel %vm935, %v612, %v1019
    %v1023 = vsel %vm935, 0, %v1021
    %v1024 = vcosq.f32.pop %v1022
    %v1025 = vsinq.f32.pop %v1022
    %vm1026 = vweird.f32 %v612
    %v1027 = vand.u32 %v1023, 3
    %vm1028 = vcmp.lt.s32.totalorder %v1027, 2
    %vm1029 = vcmp.eq.s32.totalorder %v1027, 0
    %v1030 = vxor.u32 %v1025, 2147483648
    %v1031 = vsel %vm1029, %v1024, %v1030
    %vm1032 = vcmp.eq.s32.totalorder %v1027, 2
    %v1033 = vxor.u32 %v1024, 2147483648
    %v1034 = vsel %vm1032, %v1033, %v1025
    %v1035 = vsel %vm1028, %v1031, %v1034
    %v1036 = vsel %vm1026, nan, %v1035
    %v1037 = vand.u32 2147483647, %v613
    %vm1038 = vcmp.le.f32.partialorder %v1037, 0.7853982
    %vm1039 = vcmp.lt.s32.totalorder %v613, 0
    %v1040 = vand.u32 %v613, 2139095040
    %v1041 = vshrl.u32 %v1040, 23
    %v1042 = vsub.s32 %v1041, 127
    %v1043 = vand.u32 2147483647, %v613
    %v1044 = vand.u32 %v1043, 8388607
    %v1045 = vor.u32 %v1044, 8388608
    %v1046 = vsub.s32 0, %v1045
    %v1047 = vadd.s32 %v1042, 1
    %vm1048 = vcmp.gt.s32.totalorder %v1047, 0
    %v1049 = vsel %vm1048, %v1047, 0
    %v1050 = vshrl.u32 %v1049, 5
    %v1051 = vand.u32 %v1049, 31
    %v1052 = vsub.s32 32, %v1051
    %v1053 = vshrl.u32 683565275, %v1052
    %v1054 = vshll.u32 683565275, %v1051
    %v1055 = vshrl.u32 2475754826, %v1052
    %v1056 = vor.u32 %v1054, %v1055
    %v1057 = vshll.u32 2475754826, %v1051
    %v1058 = vshrl.u32 2131351028, %v1052
    %v1059 = vor.u32 %v1057, %v1058
    %v1060 = vshll.u32 2131351028, %v1051
    %v1061 = vshrl.u32 2102212464, %v1052
    %v1062 = vor.u32 %v1060, %v1061
    %v1063 = vshll.u32 2102212464, %v1051
    %v1064 = vshrl.u32 920167782, %v1052
    %v1065 = vor.u32 %v1063, %v1064
    %v1066 = vshll.u32 920167782, %v1051
    %v1067 = vshrl.u32 1326507024, %v1052
    %v1068 = vor.u32 %v1066, %v1067
    %vm1069 = vcmp.lt.s32.totalorder %v1050, 1
    %vm1070 = vcmp.lt.s32.totalorder %v1050, 2
    %vm1071 = vcmp.lt.s32.totalorder %v1050, 3
    %vm1072 = vcmp.lt.s32.totalorder %v1050, 4
    %v1073 = vsel %vm1069, %v1053, %v1056
    %v1074 = vsel %vm1072, %v1062, 2102212464
    %v1075 = vsel %vm1071, %v1059, %v1074
    %v1076 = vsel %vm1070, %v1073, %v1075
    %v1077 = vsel %vm1069, %v1056, %v1059
    %v1078 = vsel %vm1072, %v1065, 920167782
    %v1079 = vsel %vm1071, %v1062, %v1078
    %v1080 = vsel %vm1070, %v1077, %v1079
    %v1081 = vsel %vm1069, %v1059, %v1062
    %v1082 = vsel %vm1072, %v1068, 1326507024
    %v1083 = vsel %vm1071, %v1065, %v1082
    %v1084 = vsel %vm1070, %v1081, %v1083
    %v1085 = vshll.u32 %v1045, 8
    %v1086 = vmul.u32.u64.compose %v1085, %v1084
    %v1087 = vextract.low.u32 %v1086
    %v1088 = vextract.high.u32 %v1086
    %v1089 = vmul.u32.u64.compose %v1085, %v1080
    %v1090 = vextract.low.u32 %v1089
    %v1091 = vextract.high.u32 %v1089
    %v1092 = vmul.u32 %v1085, %v1076
    %v1093 = vadd.s32 %v1088, %v1090
    %vm1094 = vc.u32 %v1088, %v1090
    %v1095 = vadd.s32 %v1091, 1
    %v1096 = vsel %vm1094, %v1095, %v1091
    %v1097 = vadd.s32 %v1092, %v1096
    %v1098 = vadd.s32 %v1097, 536870912
    %v1099 = vshrl.u32 %v1098, 30
    %v1100 = vshll.u32 %v1099, 30
    %v1101 = vsub.s32 %v1097, %v1100
    %vm1102 = vcmp.lt.s32.totalorder %v1101, 0
    %v1103 = vsub.s32 0, %v1101
    %v1104 = vsel %vm1102, %v1103, %v1101
    %v1105 = vclz %v1104
    %v1106 = vsub.s32 %v1105, 2
    %vm1107 = vcmp.gt.s32.totalorder 0, %v1106
    %v1108 = vsel %vm1107, 0, %v1106
    %v1109 = vsub.s32 32, %v1108
    %v1110 = vshll.u32 %v1101, %v1108
    %v1111 = vshrl.u32 %v1093, %v1109
    %v1112 = vor.u32 %v1110, %v1111
    %v1113 = vsub.s32 4294967266, %v1108
    %v1114 = vadd.s32 %v1113, 127
    %v1115 = vshll.u32 %v1114, 23
    %v1116 = vor.u32 4788187, %v1115
    %v1117 = vand.u32 2147483647, %v1116
    %v1119 = vcvt.s32.f32 %v1112
    %v1120 = vmul.f32 %v1119, %v1117
    %v1121 = vxor.u32 %v1120, 2147483648
    %v1122 = vsel %vm1039, %v1121, %v1120
    %v1123 = vsub.s32 4, %v1099
    %v1124 = vsel %vm1039, %v1123, %v1099
    %v1125 = vsel %vm1038, %v613, %v1122
    %v1126 = vsel %vm1038, 0, %v1124
    %v1127 = vcosq.f32.pop %v1125
    %v1128 = vsinq.f32.pop %v1125
    %vm1129 = vweird.f32 %v613
    %v1130 = vand.u32 %v1126, 3
    %vm1131 = vcmp.lt.s32.totalorder %v1130, 2
    %vm1132 = vcmp.eq.s32.totalorder %v1130, 0
    %v1133 = vxor.u32 %v1128, 2147483648
    %v1134 = vsel %vm1132, %v1127, %v1133
    %vm1135 = vcmp.eq.s32.totalorder %v1130, 2
    %v1136 = vxor.u32 %v1127, 2147483648
    %v1137 = vsel %vm1135, %v1136, %v1128
    %v1138 = vsel %vm1131, %v1134, %v1137
    %v1139 = vsel %vm1129, nan, %v1138
    %v1140 = vand.u32 2147483647, %v614
    %vm1141 = vcmp.le.f32.partialorder %v1140, 0.7853982
    %vm1142 = vcmp.lt.s32.totalorder %v614, 0
    %v1143 = vand.u32 %v614, 2139095040
    %v1144 = vshrl.u32 %v1143, 23
    %v1145 = vsub.s32 %v1144, 127
    %v1146 = vand.u32 2147483647, %v614
    %v1147 = vand.u32 %v1146, 8388607
    %v1148 = vor.u32 %v1147, 8388608
    %v1149 = vsub.s32 0, %v1148
    %v1150 = vadd.s32 %v1145, 1
    %vm1151 = vcmp.gt.s32.totalorder %v1150, 0
    %v1152 = vsel %vm1151, %v1150, 0
    %v1153 = vshrl.u32 %v1152, 5
    %v1154 = vand.u32 %v1152, 31
    %v1155 = vsub.s32 32, %v1154
    %v1156 = vshrl.u32 683565275, %v1155
    %v1157 = vshll.u32 683565275, %v1154
    %v1158 = vshrl.u32 2475754826, %v1155
    %v1159 = vor.u32 %v1157, %v1158
    %v1160 = vshll.u32 2475754826, %v1154
    %v1161 = vshrl.u32 2131351028, %v1155
    %v1162 = vor.u32 %v1160, %v1161
    %v1163 = vshll.u32 2131351028, %v1154
    %v1164 = vshrl.u32 2102212464, %v1155
    %v1165 = vor.u32 %v1163, %v1164
    %v1166 = vshll.u32 2102212464, %v1154
    %v1167 = vshrl.u32 920167782, %v1155
    %v1168 = vor.u32 %v1166, %v1167
    %v1169 = vshll.u32 920167782, %v1154
    %v1170 = vshrl.u32 1326507024, %v1155
    %v1171 = vor.u32 %v1169, %v1170
    %vm1172 = vcmp.lt.s32.totalorder %v1153, 1
    %vm1173 = vcmp.lt.s32.totalorder %v1153, 2
    %vm1174 = vcmp.lt.s32.totalorder %v1153, 3
    %vm1175 = vcmp.lt.s32.totalorder %v1153, 4
    %v1176 = vsel %vm1172, %v1156, %v1159
    %v1177 = vsel %vm1175, %v1165, 2102212464
    %v1178 = vsel %vm1174, %v1162, %v1177
    %v1179 = vsel %vm1173, %v1176, %v1178
    %v1180 = vsel %vm1172, %v1159, %v1162
    %v1181 = vsel %vm1175, %v1168, 920167782
    %v1182 = vsel %vm1174, %v1165, %v1181
    %v1183 = vsel %vm1173, %v1180, %v1182
    %v1184 = vsel %vm1172, %v1162, %v1165
    %v1185 = vsel %vm1175, %v1171, 1326507024
    %v1186 = vsel %vm1174, %v1168, %v1185
    %v1187 = vsel %vm1173, %v1184, %v1186
    %v1188 = vshll.u32 %v1148, 8
    %v1189 = vmul.u32.u64.compose %v1188, %v1187
    %v1190 = vextract.low.u32 %v1189
    %v1191 = vextract.high.u32 %v1189
    %v1192 = vmul.u32.u64.compose %v1188, %v1183
    %v1193 = vextract.low.u32 %v1192
    %v1194 = vextract.high.u32 %v1192
    %v1195 = vmul.u32 %v1188, %v1179
    %v1196 = vadd.s32 %v1191, %v1193
    %vm1197 = vc.u32 %v1191, %v1193
    %v1198 = vadd.s32 %v1194, 1
    %v1199 = vsel %vm1197, %v1198, %v1194
    %v1200 = vadd.s32 %v1195, %v1199
    %v1201 = vadd.s32 %v1200, 536870912
    %v1202 = vshrl.u32 %v1201, 30
    %v1203 = vshll.u32 %v1202, 30
    %v1204 = vsub.s32 %v1200, %v1203
    %vm1205 = vcmp.lt.s32.totalorder %v1204, 0
    %v1206 = vsub.s32 0, %v1204
    %v1207 = vsel %vm1205, %v1206, %v1204
    %v1208 = vclz %v1207
    %v1209 = vsub.s32 %v1208, 2
    %vm1210 = vcmp.gt.s32.totalorder 0, %v1209
    %v1211 = vsel %vm1210, 0, %v1209
    %v1212 = vsub.s32 32, %v1211
    %v1213 = vshll.u32 %v1204, %v1211
    %v1214 = vshrl.u32 %v1196, %v1212
    %v1215 = vor.u32 %v1213, %v1214
    %v1216 = vsub.s32 4294967266, %v1211
    %v1217 = vadd.s32 %v1216, 127
    %v1218 = vshll.u32 %v1217, 23
    %v1219 = vor.u32 4788187, %v1218
    %v1220 = vand.u32 2147483647, %v1219
    %v1222 = vcvt.s32.f32 %v1215
    %v1223 = vmul.f32 %v1222, %v1220
    %v1224 = vxor.u32 %v1223, 2147483648
    %v1225 = vsel %vm1142, %v1224, %v1223
    %v1226 = vsub.s32 4, %v1202
    %v1227 = vsel %vm1142, %v1226, %v1202
    %v1228 = vsel %vm1141, %v614, %v1225
    %v1229 = vsel %vm1141, 0, %v1227
    %v1230 = vcosq.f32.pop %v1228
    %v1231 = vsinq.f32.pop %v1228
    %vm1232 = vweird.f32 %v614
    %v1233 = vand.u32 %v1229, 3
    %vm1234 = vcmp.lt.s32.totalorder %v1233, 2
    %vm1235 = vcmp.eq.s32.totalorder %v1233, 0
    %v1236 = vxor.u32 %v1231, 2147483648
    %v1237 = vsel %vm1235, %v1230, %v1236
    %vm1238 = vcmp.eq.s32.totalorder %v1233, 2
    %v1239 = vxor.u32 %v1230, 2147483648
    %v1240 = vsel %vm1238, %v1239, %v1231
    %v1241 = vsel %vm1234, %v1237, %v1240
    %v1242 = vsel %vm1232, nan, %v1241
    %v1243 = vand.u32 2147483647, %v615
    %vm1244 = vcmp.le.f32.partialorder %v1243, 0.7853982
    %vm1245 = vcmp.lt.s32.totalorder %v615, 0
    %v1246 = vand.u32 %v615, 2139095040
    %v1247 = vshrl.u32 %v1246, 23
    %v1248 = vsub.s32 %v1247, 127
    %v1249 = vand.u32 2147483647, %v615
    %v1250 = vand.u32 %v1249, 8388607
    %v1251 = vor.u32 %v1250, 8388608
    %v1252 = vsub.s32 0, %v1251
    %v1253 = vadd.s32 %v1248, 1
    %vm1254 = vcmp.gt.s32.totalorder %v1253, 0
    %v1255 = vsel %vm1254, %v1253, 0
    %v1256 = vshrl.u32 %v1255, 5
    %v1257 = vand.u32 %v1255, 31
    %v1258 = vsub.s32 32, %v1257
    %v1259 = vshrl.u32 683565275, %v1258
    %v1260 = vshll.u32 683565275, %v1257
    %v1261 = vshrl.u32 2475754826, %v1258
    %v1262 = vor.u32 %v1260, %v1261
    %v1263 = vshll.u32 2475754826, %v1257
    %v1264 = vshrl.u32 2131351028, %v1258
    %v1265 = vor.u32 %v1263, %v1264
    %v1266 = vshll.u32 2131351028, %v1257
    %v1267 = vshrl.u32 2102212464, %v1258
    %v1268 = vor.u32 %v1266, %v1267
    %v1269 = vshll.u32 2102212464, %v1257
    %v1270 = vshrl.u32 920167782, %v1258
    %v1271 = vor.u32 %v1269, %v1270
    %v1272 = vshll.u32 920167782, %v1257
    %v1273 = vshrl.u32 1326507024, %v1258
    %v1274 = vor.u32 %v1272, %v1273
    %vm1275 = vcmp.lt.s32.totalorder %v1256, 1
    %vm1276 = vcmp.lt.s32.totalorder %v1256, 2
    %vm1277 = vcmp.lt.s32.totalorder %v1256, 3
    %vm1278 = vcmp.lt.s32.totalorder %v1256, 4
    %v1279 = vsel %vm1275, %v1259, %v1262
    %v1280 = vsel %vm1278, %v1268, 2102212464
    %v1281 = vsel %vm1277, %v1265, %v1280
    %v1282 = vsel %vm1276, %v1279, %v1281
    %v1283 = vsel %vm1275, %v1262, %v1265
    %v1284 = vsel %vm1278, %v1271, 920167782
    %v1285 = vsel %vm1277, %v1268, %v1284
    %v1286 = vsel %vm1276, %v1283, %v1285
    %v1287 = vsel %vm1275, %v1265, %v1268
    %v1288 = vsel %vm1278, %v1274, 1326507024
    %v1289 = vsel %vm1277, %v1271, %v1288
    %v1290 = vsel %vm1276, %v1287, %v1289
    %v1291 = vshll.u32 %v1251, 8
    %v1292 = vmul.u32.u64.compose %v1291, %v1290
    %v1293 = vextract.low.u32 %v1292
    %v1294 = vextract.high.u32 %v1292
    %v1295 = vmul.u32.u64.compose %v1291, %v1286
    %v1296 = vextract.low.u32 %v1295
    %v1297 = vextract.high.u32 %v1295
    %v1298 = vmul.u32 %v1291, %v1282
    %v1299 = vadd.s32 %v1294, %v1296
    %vm1300 = vc.u32 %v1294, %v1296
    %v1301 = vadd.s32 %v1297, 1
    %v1302 = vsel %vm1300, %v1301, %v1297
    %v1303 = vadd.s32 %v1298, %v1302
    %v1304 = vadd.s32 %v1303, 536870912
    %v1305 = vshrl.u32 %v1304, 30
    %v1306 = vshll.u32 %v1305, 30
    %v1307 = vsub.s32 %v1303, %v1306
    %vm1308 = vcmp.lt.s32.totalorder %v1307, 0
    %v1309 = vsub.s32 0, %v1307
    %v1310 = vsel %vm1308, %v1309, %v1307
    %v1311 = vclz %v1310
    %v1312 = vsub.s32 %v1311, 2
    %vm1313 = vcmp.gt.s32.totalorder 0, %v1312
    %v1314 = vsel %vm1313, 0, %v1312
    %v1315 = vsub.s32 32, %v1314
    %v1316 = vshll.u32 %v1307, %v1314
    %v1317 = vshrl.u32 %v1299, %v1315
    %v1318 = vor.u32 %v1316, %v1317
    %v1319 = vsub.s32 4294967266, %v1314
    %v1320 = vadd.s32 %v1319, 127
    %v1321 = vshll.u32 %v1320, 23
    %v1322 = vor.u32 4788187, %v1321
    %v1323 = vand.u32 2147483647, %v1322
    %v1325 = vcvt.s32.f32 %v1318
    %v1326 = vmul.f32 %v1325, %v1323
    %v1327 = vxor.u32 %v1326, 2147483648
    %v1328 = vsel %vm1245, %v1327, %v1326
    %v1329 = vsub.s32 4, %v1305
    %v1330 = vsel %vm1245, %v1329, %v1305
    %v1331 = vsel %vm1244, %v615, %v1328
    %v1332 = vsel %vm1244, 0, %v1330
    %v1333 = vcosq.f32.pop %v1331
    %v1334 = vsinq.f32.pop %v1331
    %vm1335 = vweird.f32 %v615
    %v1336 = vand.u32 %v1332, 3
    %vm1337 = vcmp.lt.s32.totalorder %v1336, 2
    %vm1338 = vcmp.eq.s32.totalorder %v1336, 0
    %v1339 = vxor.u32 %v1334, 2147483648
    %v1340 = vsel %vm1338, %v1333, %v1339
    %vm1341 = vcmp.eq.s32.totalorder %v1336, 2
    %v1342 = vxor.u32 %v1333, 2147483648
    %v1343 = vsel %vm1341, %v1342, %v1334
    %v1344 = vsel %vm1337, %v1340, %v1343
    %v1345 = vsel %vm1335, nan, %v1344
    %v1346 = vand.u32 2147483647, %v616
    %vm1347 = vcmp.le.f32.partialorder %v1346, 0.7853982
    %vm1348 = vcmp.lt.s32.totalorder %v616, 0
    %v1349 = vand.u32 %v616, 2139095040
    %v1350 = vshrl.u32 %v1349, 23
    %v1351 = vsub.s32 %v1350, 127
    %v1352 = vand.u32 2147483647, %v616
    %v1353 = vand.u32 %v1352, 8388607
    %v1354 = vor.u32 %v1353, 8388608
    %v1355 = vsub.s32 0, %v1354
    %v1356 = vadd.s32 %v1351, 1
    %vm1357 = vcmp.gt.s32.totalorder %v1356, 0
    %v1358 = vsel %vm1357, %v1356, 0
    %v1359 = vshrl.u32 %v1358, 5
    %v1360 = vand.u32 %v1358, 31
    %v1361 = vsub.s32 32, %v1360
    %v1362 = vshrl.u32 683565275, %v1361
    %v1363 = vshll.u32 683565275, %v1360
    %v1364 = vshrl.u32 2475754826, %v1361
    %v1365 = vor.u32 %v1363, %v1364
    %v1366 = vshll.u32 2475754826, %v1360
    %v1367 = vshrl.u32 2131351028, %v1361
    %v1368 = vor.u32 %v1366, %v1367
    %v1369 = vshll.u32 2131351028, %v1360
    %v1370 = vshrl.u32 2102212464, %v1361
    %v1371 = vor.u32 %v1369, %v1370
    %v1372 = vshll.u32 2102212464, %v1360
    %v1373 = vshrl.u32 920167782, %v1361
    %v1374 = vor.u32 %v1372, %v1373
    %v1375 = vshll.u32 920167782, %v1360
    %v1376 = vshrl.u32 1326507024, %v1361
    %v1377 = vor.u32 %v1375, %v1376
    %vm1378 = vcmp.lt.s32.totalorder %v1359, 1
    %vm1379 = vcmp.lt.s32.totalorder %v1359, 2
    %vm1380 = vcmp.lt.s32.totalorder %v1359, 3
    %vm1381 = vcmp.lt.s32.totalorder %v1359, 4
    %v1382 = vsel %vm1378, %v1362, %v1365
    %v1383 = vsel %vm1381, %v1371, 2102212464
    %v1384 = vsel %vm1380, %v1368, %v1383
    %v1385 = vsel %vm1379, %v1382, %v1384
    %v1386 = vsel %vm1378, %v1365, %v1368
    %v1387 = vsel %vm1381, %v1374, 920167782
    %v1388 = vsel %vm1380, %v1371, %v1387
    %v1389 = vsel %vm1379, %v1386, %v1388
    %v1390 = vsel %vm1378, %v1368, %v1371
    %v1391 = vsel %vm1381, %v1377, 1326507024
    %v1392 = vsel %vm1380, %v1374, %v1391
    %v1393 = vsel %vm1379, %v1390, %v1392
    %v1394 = vshll.u32 %v1354, 8
    %v1395 = vmul.u32.u64.compose %v1394, %v1393
    %v1396 = vextract.low.u32 %v1395
    %v1397 = vextract.high.u32 %v1395
    %v1398 = vmul.u32.u64.compose %v1394, %v1389
    %v1399 = vextract.low.u32 %v1398
    %v1400 = vextract.high.u32 %v1398
    %v1401 = vmul.u32 %v1394, %v1385
    %v1402 = vadd.s32 %v1397, %v1399
    %vm1403 = vc.u32 %v1397, %v1399
    %v1404 = vadd.s32 %v1400, 1
    %v1405 = vsel %vm1403, %v1404, %v1400
    %v1406 = vadd.s32 %v1401, %v1405
    %v1407 = vadd.s32 %v1406, 536870912
    %v1408 = vshrl.u32 %v1407, 30
    %v1409 = vshll.u32 %v1408, 30
    %v1410 = vsub.s32 %v1406, %v1409
    %vm1411 = vcmp.lt.s32.totalorder %v1410, 0
    %v1412 = vsub.s32 0, %v1410
    %v1413 = vsel %vm1411, %v1412, %v1410
    %v1414 = vclz %v1413
    %v1415 = vsub.s32 %v1414, 2
    %vm1416 = vcmp.gt.s32.totalorder 0, %v1415
    %v1417 = vsel %vm1416, 0, %v1415
    %v1418 = vsub.s32 32, %v1417
    %v1419 = vshll.u32 %v1410, %v1417
    %v1420 = vshrl.u32 %v1402, %v1418
    %v1421 = vor.u32 %v1419, %v1420
    %v1422 = vsub.s32 4294967266, %v1417
    %v1423 = vadd.s32 %v1422, 127
    %v1424 = vshll.u32 %v1423, 23
    %v1425 = vor.u32 4788187, %v1424
    %v1426 = vand.u32 2147483647, %v1425
    %v1428 = vcvt.s32.f32 %v1421
    %v1429 = vmul.f32 %v1428, %v1426
    %v1430 = vxor.u32 %v1429, 2147483648
    %v1431 = vsel %vm1348, %v1430, %v1429
    %v1432 = vsub.s32 4, %v1408
    %v1433 = vsel %vm1348, %v1432, %v1408
    %v1434 = vsel %vm1347, %v616, %v1431
    %v1435 = vsel %vm1347, 0, %v1433
    %v1436 = vcosq.f32.pop %v1434
    %v1437 = vsinq.f32.pop %v1434
    %vm1438 = vweird.f32 %v616
    %v1439 = vand.u32 %v1435, 3
    %vm1440 = vcmp.lt.s32.totalorder %v1439, 2
    %vm1441 = vcmp.eq.s32.totalorder %v1439, 0
    %v1442 = vxor.u32 %v1437, 2147483648
    %v1443 = vsel %vm1441, %v1436, %v1442
    %vm1444 = vcmp.eq.s32.totalorder %v1439, 2
    %v1445 = vxor.u32 %v1436, 2147483648
    %v1446 = vsel %vm1444, %v1445, %v1437
    %v1447 = vsel %vm1440, %v1443, %v1446
    %v1448 = vsel %vm1438, nan, %v1447
    %v1449 = vand.u32 2147483647, %v617
    %vm1450 = vcmp.le.f32.partialorder %v1449, 0.7853982
    %vm1451 = vcmp.lt.s32.totalorder %v617, 0
    %v1452 = vand.u32 %v617, 2139095040
    %v1453 = vshrl.u32 %v1452, 23
    %v1454 = vsub.s32 %v1453, 127
    %v1455 = vand.u32 2147483647, %v617
    %v1456 = vand.u32 %v1455, 8388607
    %v1457 = vor.u32 %v1456, 8388608
    %v1458 = vsub.s32 0, %v1457
    %v1459 = vadd.s32 %v1454, 1
    %vm1460 = vcmp.gt.s32.totalorder %v1459, 0
    %v1461 = vsel %vm1460, %v1459, 0
    %v1462 = vshrl.u32 %v1461, 5
    %v1463 = vand.u32 %v1461, 31
    %v1464 = vsub.s32 32, %v1463
    %v1465 = vshrl.u32 683565275, %v1464
    %v1466 = vshll.u32 683565275, %v1463
    %v1467 = vshrl.u32 2475754826, %v1464
    %v1468 = vor.u32 %v1466, %v1467
    %v1469 = vshll.u32 2475754826, %v1463
    %v1470 = vshrl.u32 2131351028, %v1464
    %v1471 = vor.u32 %v1469, %v1470
    %v1472 = vshll.u32 2131351028, %v1463
    %v1473 = vshrl.u32 2102212464, %v1464
    %v1474 = vor.u32 %v1472, %v1473
    %v1475 = vshll.u32 2102212464, %v1463
    %v1476 = vshrl.u32 920167782, %v1464
    %v1477 = vor.u32 %v1475, %v1476
    %v1478 = vshll.u32 920167782, %v1463
    %v1479 = vshrl.u32 1326507024, %v1464
    %v1480 = vor.u32 %v1478, %v1479
    %vm1481 = vcmp.lt.s32.totalorder %v1462, 1
    %vm1482 = vcmp.lt.s32.totalorder %v1462, 2
    %vm1483 = vcmp.lt.s32.totalorder %v1462, 3
    %vm1484 = vcmp.lt.s32.totalorder %v1462, 4
    %v1485 = vsel %vm1481, %v1465, %v1468
    %v1486 = vsel %vm1484, %v1474, 2102212464
    %v1487 = vsel %vm1483, %v1471, %v1486
    %v1488 = vsel %vm1482, %v1485, %v1487
    %v1489 = vsel %vm1481, %v1468, %v1471
    %v1490 = vsel %vm1484, %v1477, 920167782
    %v1491 = vsel %vm1483, %v1474, %v1490
    %v1492 = vsel %vm1482, %v1489, %v1491
    %v1493 = vsel %vm1481, %v1471, %v1474
    %v1494 = vsel %vm1484, %v1480, 1326507024
    %v1495 = vsel %vm1483, %v1477, %v1494
    %v1496 = vsel %vm1482, %v1493, %v1495
    %v1497 = vshll.u32 %v1457, 8
    %v1498 = vmul.u32.u64.compose %v1497, %v1496
    %v1499 = vextract.low.u32 %v1498
    %v1500 = vextract.high.u32 %v1498
    %v1501 = vmul.u32.u64.compose %v1497, %v1492
    %v1502 = vextract.low.u32 %v1501
    %v1503 = vextract.high.u32 %v1501
    %v1504 = vmul.u32 %v1497, %v1488
    %v1505 = vadd.s32 %v1500, %v1502
    %vm1506 = vc.u32 %v1500, %v1502
    %v1507 = vadd.s32 %v1503, 1
    %v1508 = vsel %vm1506, %v1507, %v1503
    %v1509 = vadd.s32 %v1504, %v1508
    %v1510 = vadd.s32 %v1509, 536870912
    %v1511 = vshrl.u32 %v1510, 30
    %v1512 = vshll.u32 %v1511, 30
    %v1513 = vsub.s32 %v1509, %v1512
    %vm1514 = vcmp.lt.s32.totalorder %v1513, 0
    %v1515 = vsub.s32 0, %v1513
    %v1516 = vsel %vm1514, %v1515, %v1513
    %v1517 = vclz %v1516
    %v1518 = vsub.s32 %v1517, 2
    %vm1519 = vcmp.gt.s32.totalorder 0, %v1518
    %v1520 = vsel %vm1519, 0, %v1518
    %v1521 = vsub.s32 32, %v1520
    %v1522 = vshll.u32 %v1513, %v1520
    %v1523 = vshrl.u32 %v1505, %v1521
    %v1524 = vor.u32 %v1522, %v1523
    %v1525 = vsub.s32 4294967266, %v1520
    %v1526 = vadd.s32 %v1525, 127
    %v1527 = vshll.u32 %v1526, 23
    %v1528 = vor.u32 4788187, %v1527
    %v1529 = vand.u32 2147483647, %v1528
    %v1531 = vcvt.s32.f32 %v1524
    %v1532 = vmul.f32 %v1531, %v1529
    %v1533 = vxor.u32 %v1532, 2147483648
    %v1534 = vsel %vm1451, %v1533, %v1532
    %v1535 = vsub.s32 4, %v1511
    %v1536 = vsel %vm1451, %v1535, %v1511
    %v1537 = vsel %vm1450, %v617, %v1534
    %v1538 = vsel %vm1450, 0, %v1536
    %v1539 = vcosq.f32.pop %v1537
    %v1540 = vsinq.f32.pop %v1537
    %vm1541 = vweird.f32 %v617
    %v1542 = vand.u32 %v1538, 3
    %vm1543 = vcmp.lt.s32.totalorder %v1542, 2
    %vm1544 = vcmp.eq.s32.totalorder %v1542, 0
    %v1545 = vxor.u32 %v1540, 2147483648
    %v1546 = vsel %vm1544, %v1539, %v1545
    %vm1547 = vcmp.eq.s32.totalorder %v1542, 2
    %v1548 = vxor.u32 %v1539, 2147483648
    %v1549 = vsel %vm1547, %v1548, %v1540
    %v1550 = vsel %vm1543, %v1546, %v1549
    %v1551 = vsel %vm1541, nan, %v1550
    %v1552 = vand.u32 2147483647, %v618
    %vm1553 = vcmp.le.f32.partialorder %v1552, 0.7853982
    %vm1554 = vcmp.lt.s32.totalorder %v618, 0
    %v1555 = vand.u32 %v618, 2139095040
    %v1556 = vshrl.u32 %v1555, 23
    %v1557 = vsub.s32 %v1556, 127
    %v1558 = vand.u32 2147483647, %v618
    %v1559 = vand.u32 %v1558, 8388607
    %v1560 = vor.u32 %v1559, 8388608
    %v1561 = vsub.s32 0, %v1560
    %v1562 = vadd.s32 %v1557, 1
    %vm1563 = vcmp.gt.s32.totalorder %v1562, 0
    %v1564 = vsel %vm1563, %v1562, 0
    %v1565 = vshrl.u32 %v1564, 5
    %v1566 = vand.u32 %v1564, 31
    %v1567 = vsub.s32 32, %v1566
    %v1568 = vshrl.u32 683565275, %v1567
    %v1569 = vshll.u32 683565275, %v1566
    %v1570 = vshrl.u32 2475754826, %v1567
    %v1571 = vor.u32 %v1569, %v1570
    %v1572 = vshll.u32 2475754826, %v1566
    %v1573 = vshrl.u32 2131351028, %v1567
    %v1574 = vor.u32 %v1572, %v1573
    %v1575 = vshll.u32 2131351028, %v1566
    %v1576 = vshrl.u32 2102212464, %v1567
    %v1577 = vor.u32 %v1575, %v1576
    %v1578 = vshll.u32 2102212464, %v1566
    %v1579 = vshrl.u32 920167782, %v1567
    %v1580 = vor.u32 %v1578, %v1579
    %v1581 = vshll.u32 920167782, %v1566
    %v1582 = vshrl.u32 1326507024, %v1567
    %v1583 = vor.u32 %v1581, %v1582
    %vm1584 = vcmp.lt.s32.totalorder %v1565, 1
    %vm1585 = vcmp.lt.s32.totalorder %v1565, 2
    %vm1586 = vcmp.lt.s32.totalorder %v1565, 3
    %vm1587 = vcmp.lt.s32.totalorder %v1565, 4
    %v1588 = vsel %vm1584, %v1568, %v1571
    %v1589 = vsel %vm1587, %v1577, 2102212464
    %v1590 = vsel %vm1586, %v1574, %v1589
    %v1591 = vsel %vm1585, %v1588, %v1590
    %v1592 = vsel %vm1584, %v1571, %v1574
    %v1593 = vsel %vm1587, %v1580, 920167782
    %v1594 = vsel %vm1586, %v1577, %v1593
    %v1595 = vsel %vm1585, %v1592, %v1594
    %v1596 = vsel %vm1584, %v1574, %v1577
    %v1597 = vsel %vm1587, %v1583, 1326507024
    %v1598 = vsel %vm1586, %v1580, %v1597
    %v1599 = vsel %vm1585, %v1596, %v1598
    %v1600 = vshll.u32 %v1560, 8
    %v1601 = vmul.u32.u64.compose %v1600, %v1599
    %v1602 = vextract.low.u32 %v1601
    %v1603 = vextract.high.u32 %v1601
    %v1604 = vmul.u32.u64.compose %v1600, %v1595
    %v1605 = vextract.low.u32 %v1604
    %v1606 = vextract.high.u32 %v1604
    %v1607 = vmul.u32 %v1600, %v1591
    %v1608 = vadd.s32 %v1603, %v1605
    %vm1609 = vc.u32 %v1603, %v1605
    %v1610 = vadd.s32 %v1606, 1
    %v1611 = vsel %vm1609, %v1610, %v1606
    %v1612 = vadd.s32 %v1607, %v1611
    %v1613 = vadd.s32 %v1612, 536870912
    %v1614 = vshrl.u32 %v1613, 30
    %v1615 = vshll.u32 %v1614, 30
    %v1616 = vsub.s32 %v1612, %v1615
    %vm1617 = vcmp.lt.s32.totalorder %v1616, 0
    %v1618 = vsub.s32 0, %v1616
    %v1619 = vsel %vm1617, %v1618, %v1616
    %v1620 = vclz %v1619
    %v1621 = vsub.s32 %v1620, 2
    %vm1622 = vcmp.gt.s32.totalorder 0, %v1621
    %v1623 = vsel %vm1622, 0, %v1621
    %v1624 = vsub.s32 32, %v1623
    %v1625 = vshll.u32 %v1616, %v1623
    %v1626 = vshrl.u32 %v1608, %v1624
    %v1627 = vor.u32 %v1625, %v1626
    %v1628 = vsub.s32 4294967266, %v1623
    %v1629 = vadd.s32 %v1628, 127
    %v1630 = vshll.u32 %v1629, 23
    %v1631 = vor.u32 4788187, %v1630
    %v1632 = vand.u32 2147483647, %v1631
    %v1634 = vcvt.s32.f32 %v1627
    %v1635 = vmul.f32 %v1634, %v1632
    %v1636 = vxor.u32 %v1635, 2147483648
    %v1637 = vsel %vm1554, %v1636, %v1635
    %v1638 = vsub.s32 4, %v1614
    %v1639 = vsel %vm1554, %v1638, %v1614
    %v1640 = vsel %vm1553, %v618, %v1637
    %v1641 = vsel %vm1553, 0, %v1639
    %v1642 = vcosq.f32.pop %v1640
    %v1643 = vsinq.f32.pop %v1640
    %vm1644 = vweird.f32 %v618
    %v1645 = vand.u32 %v1641, 3
    %vm1646 = vcmp.lt.s32.totalorder %v1645, 2
    %vm1647 = vcmp.eq.s32.totalorder %v1645, 0
    %v1648 = vxor.u32 %v1643, 2147483648
    %v1649 = vsel %vm1647, %v1642, %v1648
    %vm1650 = vcmp.eq.s32.totalorder %v1645, 2
    %v1651 = vxor.u32 %v1642, 2147483648
    %v1652 = vsel %vm1650, %v1651, %v1643
    %v1653 = vsel %vm1646, %v1649, %v1652
    %v1654 = vsel %vm1644, nan, %v1653
    %v1655 = vand.u32 2147483647, %v619
    %vm1656 = vcmp.le.f32.partialorder %v1655, 0.7853982
    %vm1657 = vcmp.lt.s32.totalorder %v619, 0
    %v1658 = vand.u32 %v619, 2139095040
    %v1659 = vshrl.u32 %v1658, 23
    %v1660 = vsub.s32 %v1659, 127
    %v1661 = vand.u32 2147483647, %v619
    %v1662 = vand.u32 %v1661, 8388607
    %v1663 = vor.u32 %v1662, 8388608
    %v1664 = vsub.s32 0, %v1663
    %v1665 = vadd.s32 %v1660, 1
    %vm1666 = vcmp.gt.s32.totalorder %v1665, 0
    %v1667 = vsel %vm1666, %v1665, 0
    %v1668 = vshrl.u32 %v1667, 5
    %v1669 = vand.u32 %v1667, 31
    %v1670 = vsub.s32 32, %v1669
    %v1671 = vshrl.u32 683565275, %v1670
    %v1672 = vshll.u32 683565275, %v1669
    %v1673 = vshrl.u32 2475754826, %v1670
    %v1674 = vor.u32 %v1672, %v1673
    %v1675 = vshll.u32 2475754826, %v1669
    %v1676 = vshrl.u32 2131351028, %v1670
    %v1677 = vor.u32 %v1675, %v1676
    %v1678 = vshll.u32 2131351028, %v1669
    %v1679 = vshrl.u32 2102212464, %v1670
    %v1680 = vor.u32 %v1678, %v1679
    %v1681 = vshll.u32 2102212464, %v1669
    %v1682 = vshrl.u32 920167782, %v1670
    %v1683 = vor.u32 %v1681, %v1682
    %v1684 = vshll.u32 920167782, %v1669
    %v1685 = vshrl.u32 1326507024, %v1670
    %v1686 = vor.u32 %v1684, %v1685
    %vm1687 = vcmp.lt.s32.totalorder %v1668, 1
    %vm1688 = vcmp.lt.s32.totalorder %v1668, 2
    %vm1689 = vcmp.lt.s32.totalorder %v1668, 3
    %vm1690 = vcmp.lt.s32.totalorder %v1668, 4
    %v1691 = vsel %vm1687, %v1671, %v1674
    %v1692 = vsel %vm1690, %v1680, 2102212464
    %v1693 = vsel %vm1689, %v1677, %v1692
    %v1694 = vsel %vm1688, %v1691, %v1693
    %v1695 = vsel %vm1687, %v1674, %v1677
    %v1696 = vsel %vm1690, %v1683, 920167782
    %v1697 = vsel %vm1689, %v1680, %v1696
    %v1698 = vsel %vm1688, %v1695, %v1697
    %v1699 = vsel %vm1687, %v1677, %v1680
    %v1700 = vsel %vm1690, %v1686, 1326507024
    %v1701 = vsel %vm1689, %v1683, %v1700
    %v1702 = vsel %vm1688, %v1699, %v1701
    %v1703 = vshll.u32 %v1663, 8
    %v1704 = vmul.u32.u64.compose %v1703, %v1702
    %v1705 = vextract.low.u32 %v1704
    %v1706 = vextract.high.u32 %v1704
    %v1707 = vmul.u32.u64.compose %v1703, %v1698
    %v1708 = vextract.low.u32 %v1707
    %v1709 = vextract.high.u32 %v1707
    %v1710 = vmul.u32 %v1703, %v1694
    %v1711 = vadd.s32 %v1706, %v1708
    %vm1712 = vc.u32 %v1706, %v1708
    %v1713 = vadd.s32 %v1709, 1
    %v1714 = vsel %vm1712, %v1713, %v1709
    %v1715 = vadd.s32 %v1710, %v1714
    %v1716 = vadd.s32 %v1715, 536870912
    %v1717 = vshrl.u32 %v1716, 30
    %v1718 = vshll.u32 %v1717, 30
    %v1719 = vsub.s32 %v1715, %v1718
    %vm1720 = vcmp.lt.s32.totalorder %v1719, 0
    %v1721 = vsub.s32 0, %v1719
    %v1722 = vsel %vm1720, %v1721, %v1719
    %v1723 = vclz %v1722
    %v1724 = vsub.s32 %v1723, 2
    %vm1725 = vcmp.gt.s32.totalorder 0, %v1724
    %v1726 = vsel %vm1725, 0, %v1724
    %v1727 = vsub.s32 32, %v1726
    %v1728 = vshll.u32 %v1719, %v1726
    %v1729 = vshrl.u32 %v1711, %v1727
    %v1730 = vor.u32 %v1728, %v1729
    %v1731 = vsub.s32 4294967266, %v1726
    %v1732 = vadd.s32 %v1731, 127
    %v1733 = vshll.u32 %v1732, 23
    %v1734 = vor.u32 4788187, %v1733
    %v1735 = vand.u32 2147483647, %v1734
    %v1737 = vcvt.s32.f32 %v1730
    %v1738 = vmul.f32 %v1737, %v1735
    %v1739 = vxor.u32 %v1738, 2147483648
    %v1740 = vsel %vm1657, %v1739, %v1738
    %v1741 = vsub.s32 4, %v1717
    %v1742 = vsel %vm1657, %v1741, %v1717
    %v1743 = vsel %vm1656, %v619, %v1740
    %v1744 = vsel %vm1656, 0, %v1742
    %v1745 = vcosq.f32.pop %v1743
    %v1746 = vsinq.f32.pop %v1743
    %vm1747 = vweird.f32 %v619
    %v1748 = vand.u32 %v1744, 3
    %vm1749 = vcmp.lt.s32.totalorder %v1748, 2
    %vm1750 = vcmp.eq.s32.totalorder %v1748, 0
    %v1751 = vxor.u32 %v1746, 2147483648
    %v1752 = vsel %vm1750, %v1745, %v1751
    %vm1753 = vcmp.eq.s32.totalorder %v1748, 2
    %v1754 = vxor.u32 %v1745, 2147483648
    %v1755 = vsel %vm1753, %v1754, %v1746
    %v1756 = vsel %vm1749, %v1752, %v1755
    %v1757 = vsel %vm1747, nan, %v1756
    %v1758 = vand.u32 2147483647, %v620
    %vm1759 = vcmp.le.f32.partialorder %v1758, 0.7853982
    %vm1760 = vcmp.lt.s32.totalorder %v620, 0
    %v1761 = vand.u32 %v620, 2139095040
    %v1762 = vshrl.u32 %v1761, 23
    %v1763 = vsub.s32 %v1762, 127
    %v1764 = vand.u32 2147483647, %v620
    %v1765 = vand.u32 %v1764, 8388607
    %v1766 = vor.u32 %v1765, 8388608
    %v1767 = vsub.s32 0, %v1766
    %v1768 = vadd.s32 %v1763, 1
    %vm1769 = vcmp.gt.s32.totalorder %v1768, 0
    %v1770 = vsel %vm1769, %v1768, 0
    %v1771 = vshrl.u32 %v1770, 5
    %v1772 = vand.u32 %v1770, 31
    %v1773 = vsub.s32 32, %v1772
    %v1774 = vshrl.u32 683565275, %v1773
    %v1775 = vshll.u32 683565275, %v1772
    %v1776 = vshrl.u32 2475754826, %v1773
    %v1777 = vor.u32 %v1775, %v1776
    %v1778 = vshll.u32 2475754826, %v1772
    %v1779 = vshrl.u32 2131351028, %v1773
    %v1780 = vor.u32 %v1778, %v1779
    %v1781 = vshll.u32 2131351028, %v1772
    %v1782 = vshrl.u32 2102212464, %v1773
    %v1783 = vor.u32 %v1781, %v1782
    %v1784 = vshll.u32 2102212464, %v1772
    %v1785 = vshrl.u32 920167782, %v1773
    %v1786 = vor.u32 %v1784, %v1785
    %v1787 = vshll.u32 920167782, %v1772
    %v1788 = vshrl.u32 1326507024, %v1773
    %v1789 = vor.u32 %v1787, %v1788
    %vm1790 = vcmp.lt.s32.totalorder %v1771, 1
    %vm1791 = vcmp.lt.s32.totalorder %v1771, 2
    %vm1792 = vcmp.lt.s32.totalorder %v1771, 3
    %vm1793 = vcmp.lt.s32.totalorder %v1771, 4
    %v1794 = vsel %vm1790, %v1774, %v1777
    %v1795 = vsel %vm1793, %v1783, 2102212464
    %v1796 = vsel %vm1792, %v1780, %v1795
    %v1797 = vsel %vm1791, %v1794, %v1796
    %v1798 = vsel %vm1790, %v1777, %v1780
    %v1799 = vsel %vm1793, %v1786, 920167782
    %v1800 = vsel %vm1792, %v1783, %v1799
    %v1801 = vsel %vm1791, %v1798, %v1800
    %v1802 = vsel %vm1790, %v1780, %v1783
    %v1803 = vsel %vm1793, %v1789, 1326507024
    %v1804 = vsel %vm1792, %v1786, %v1803
    %v1805 = vsel %vm1791, %v1802, %v1804
    %v1806 = vshll.u32 %v1766, 8
    %v1807 = vmul.u32.u64.compose %v1806, %v1805
    %v1808 = vextract.low.u32 %v1807
    %v1809 = vextract.high.u32 %v1807
    %v1810 = vmul.u32.u64.compose %v1806, %v1801
    %v1811 = vextract.low.u32 %v1810
    %v1812 = vextract.high.u32 %v1810
    %v1813 = vmul.u32 %v1806, %v1797
    %v1814 = vadd.s32 %v1809, %v1811
    %vm1815 = vc.u32 %v1809, %v1811
    %v1816 = vadd.s32 %v1812, 1
    %v1817 = vsel %vm1815, %v1816, %v1812
    %v1818 = vadd.s32 %v1813, %v1817
    %v1819 = vadd.s32 %v1818, 536870912
    %v1820 = vshrl.u32 %v1819, 30
    %v1821 = vshll.u32 %v1820, 30
    %v1822 = vsub.s32 %v1818, %v1821
    %vm1823 = vcmp.lt.s32.totalorder %v1822, 0
    %v1824 = vsub.s32 0, %v1822
    %v1825 = vsel %vm1823, %v1824, %v1822
    %v1826 = vclz %v1825
    %v1827 = vsub.s32 %v1826, 2
    %vm1828 = vcmp.gt.s32.totalorder 0, %v1827
    %v1829 = vsel %vm1828, 0, %v1827
    %v1830 = vsub.s32 32, %v1829
    %v1831 = vshll.u32 %v1822, %v1829
    %v1832 = vshrl.u32 %v1814, %v1830
    %v1833 = vor.u32 %v1831, %v1832
    %v1834 = vsub.s32 4294967266, %v1829
    %v1835 = vadd.s32 %v1834, 127
    %v1836 = vshll.u32 %v1835, 23
    %v1837 = vor.u32 4788187, %v1836
    %v1838 = vand.u32 2147483647, %v1837
    %v1840 = vcvt.s32.f32 %v1833
    %v1841 = vmul.f32 %v1840, %v1838
    %v1842 = vxor.u32 %v1841, 2147483648
    %v1843 = vsel %vm1760, %v1842, %v1841
    %v1844 = vsub.s32 4, %v1820
    %v1845 = vsel %vm1760, %v1844, %v1820
    %v1846 = vsel %vm1759, %v620, %v1843
    %v1847 = vsel %vm1759, 0, %v1845
    %v1848 = vcosq.f32.pop %v1846
    %v1849 = vsinq.f32.pop %v1846
    %vm1850 = vweird.f32 %v620
    %v1851 = vand.u32 %v1847, 3
    %vm1852 = vcmp.lt.s32.totalorder %v1851, 2
    %vm1853 = vcmp.eq.s32.totalorder %v1851, 0
    %v1854 = vxor.u32 %v1849, 2147483648
    %v1855 = vsel %vm1853, %v1848, %v1854
    %vm1856 = vcmp.eq.s32.totalorder %v1851, 2
    %v1857 = vxor.u32 %v1848, 2147483648
    %v1858 = vsel %vm1856, %v1857, %v1849
    %v1859 = vsel %vm1852, %v1855, %v1858
    %v1860 = vsel %vm1850, nan, %v1859
    %v1861 = vand.u32 2147483647, %v621
    %vm1862 = vcmp.le.f32.partialorder %v1861, 0.7853982
    %vm1863 = vcmp.lt.s32.totalorder %v621, 0
    %v1864 = vand.u32 %v621, 2139095040
    %v1865 = vshrl.u32 %v1864, 23
    %v1866 = vsub.s32 %v1865, 127
    %v1867 = vand.u32 2147483647, %v621
    %v1868 = vand.u32 %v1867, 8388607
    %v1869 = vor.u32 %v1868, 8388608
    %v1870 = vsub.s32 0, %v1869
    %v1871 = vadd.s32 %v1866, 1
    %vm1872 = vcmp.gt.s32.totalorder %v1871, 0
    %v1873 = vsel %vm1872, %v1871, 0
    %v1874 = vshrl.u32 %v1873, 5
    %v1875 = vand.u32 %v1873, 31
    %v1876 = vsub.s32 32, %v1875
    %v1877 = vshrl.u32 683565275, %v1876
    %v1878 = vshll.u32 683565275, %v1875
    %v1879 = vshrl.u32 2475754826, %v1876
    %v1880 = vor.u32 %v1878, %v1879
    %v1881 = vshll.u32 2475754826, %v1875
    %v1882 = vshrl.u32 2131351028, %v1876
    %v1883 = vor.u32 %v1881, %v1882
    %v1884 = vshll.u32 2131351028, %v1875
    %v1885 = vshrl.u32 2102212464, %v1876
    %v1886 = vor.u32 %v1884, %v1885
    %v1887 = vshll.u32 2102212464, %v1875
    %v1888 = vshrl.u32 920167782, %v1876
    %v1889 = vor.u32 %v1887, %v1888
    %v1890 = vshll.u32 920167782, %v1875
    %v1891 = vshrl.u32 1326507024, %v1876
    %v1892 = vor.u32 %v1890, %v1891
    %vm1893 = vcmp.lt.s32.totalorder %v1874, 1
    %vm1894 = vcmp.lt.s32.totalorder %v1874, 2
    %vm1895 = vcmp.lt.s32.totalorder %v1874, 3
    %vm1896 = vcmp.lt.s32.totalorder %v1874, 4
    %v1897 = vsel %vm1893, %v1877, %v1880
    %v1898 = vsel %vm1896, %v1886, 2102212464
    %v1899 = vsel %vm1895, %v1883, %v1898
    %v1900 = vsel %vm1894, %v1897, %v1899
    %v1901 = vsel %vm1893, %v1880, %v1883
    %v1902 = vsel %vm1896, %v1889, 920167782
    %v1903 = vsel %vm1895, %v1886, %v1902
    %v1904 = vsel %vm1894, %v1901, %v1903
    %v1905 = vsel %vm1893, %v1883, %v1886
    %v1906 = vsel %vm1896, %v1892, 1326507024
    %v1907 = vsel %vm1895, %v1889, %v1906
    %v1908 = vsel %vm1894, %v1905, %v1907
    %v1909 = vshll.u32 %v1869, 8
    %v1910 = vmul.u32.u64.compose %v1909, %v1908
    %v1911 = vextract.low.u32 %v1910
    %v1912 = vextract.high.u32 %v1910
    %v1913 = vmul.u32.u64.compose %v1909, %v1904
    %v1914 = vextract.low.u32 %v1913
    %v1915 = vextract.high.u32 %v1913
    %v1916 = vmul.u32 %v1909, %v1900
    %v1917 = vadd.s32 %v1912, %v1914
    %vm1918 = vc.u32 %v1912, %v1914
    %v1919 = vadd.s32 %v1915, 1
    %v1920 = vsel %vm1918, %v1919, %v1915
    %v1921 = vadd.s32 %v1916, %v1920
    %v1922 = vadd.s32 %v1921, 536870912
    %v1923 = vshrl.u32 %v1922, 30
    %v1924 = vshll.u32 %v1923, 30
    %v1925 = vsub.s32 %v1921, %v1924
    %vm1926 = vcmp.lt.s32.totalorder %v1925, 0
    %v1927 = vsub.s32 0, %v1925
    %v1928 = vsel %vm1926, %v1927, %v1925
    %v1929 = vclz %v1928
    %v1930 = vsub.s32 %v1929, 2
    %vm1931 = vcmp.gt.s32.totalorder 0, %v1930
    %v1932 = vsel %vm1931, 0, %v1930
    %v1933 = vsub.s32 32, %v1932
    %v1934 = vshll.u32 %v1925, %v1932
    %v1935 = vshrl.u32 %v1917, %v1933
    %v1936 = vor.u32 %v1934, %v1935
    %v1937 = vsub.s32 4294967266, %v1932
    %v1938 = vadd.s32 %v1937, 127
    %v1939 = vshll.u32 %v1938, 23
    %v1940 = vor.u32 4788187, %v1939
    %v1941 = vand.u32 2147483647, %v1940
    %v1943 = vcvt.s32.f32 %v1936
    %v1944 = vmul.f32 %v1943, %v1941
    %v1945 = vxor.u32 %v1944, 2147483648
    %v1946 = vsel %vm1863, %v1945, %v1944
    %v1947 = vsub.s32 4, %v1923
    %v1948 = vsel %vm1863, %v1947, %v1923
    %v1949 = vsel %vm1862, %v621, %v1946
    %v1950 = vsel %vm1862, 0, %v1948
    %v1951 = vcosq.f32.pop %v1949
    %v1952 = vsinq.f32.pop %v1949
    %vm1953 = vweird.f32 %v621
    %v1954 = vand.u32 %v1950, 3
    %vm1955 = vcmp.lt.s32.totalorder %v1954, 2
    %vm1956 = vcmp.eq.s32.totalorder %v1954, 0
    %v1957 = vxor.u32 %v1952, 2147483648
    %v1958 = vsel %vm1956, %v1951, %v1957
    %vm1959 = vcmp.eq.s32.totalorder %v1954, 2
    %v1960 = vxor.u32 %v1951, 2147483648
    %v1961 = vsel %vm1959, %v1960, %v1952
    %v1962 = vsel %vm1955, %v1958, %v1961
    %v1963 = vsel %vm1953, nan, %v1962
    %v1964 = vand.u32 2147483647, %v622
    %vm1965 = vcmp.le.f32.partialorder %v1964, 0.7853982
    %vm1966 = vcmp.lt.s32.totalorder %v622, 0
    %v1967 = vand.u32 %v622, 2139095040
    %v1968 = vshrl.u32 %v1967, 23
    %v1969 = vsub.s32 %v1968, 127
    %v1970 = vand.u32 2147483647, %v622
    %v1971 = vand.u32 %v1970, 8388607
    %v1972 = vor.u32 %v1971, 8388608
    %v1973 = vsub.s32 0, %v1972
    %v1974 = vadd.s32 %v1969, 1
    %vm1975 = vcmp.gt.s32.totalorder %v1974, 0
    %v1976 = vsel %vm1975, %v1974, 0
    %v1977 = vshrl.u32 %v1976, 5
    %v1978 = vand.u32 %v1976, 31
    %v1979 = vsub.s32 32, %v1978
    %v1980 = vshrl.u32 683565275, %v1979
    %v1981 = vshll.u32 683565275, %v1978
    %v1982 = vshrl.u32 2475754826, %v1979
    %v1983 = vor.u32 %v1981, %v1982
    %v1984 = vshll.u32 2475754826, %v1978
    %v1985 = vshrl.u32 2131351028, %v1979
    %v1986 = vor.u32 %v1984, %v1985
    %v1987 = vshll.u32 2131351028, %v1978
    %v1988 = vshrl.u32 2102212464, %v1979
    %v1989 = vor.u32 %v1987, %v1988
    %v1990 = vshll.u32 2102212464, %v1978
    %v1991 = vshrl.u32 920167782, %v1979
    %v1992 = vor.u32 %v1990, %v1991
    %v1993 = vshll.u32 920167782, %v1978
    %v1994 = vshrl.u32 1326507024, %v1979
    %v1995 = vor.u32 %v1993, %v1994
    %vm1996 = vcmp.lt.s32.totalorder %v1977, 1
    %vm1997 = vcmp.lt.s32.totalorder %v1977, 2
    %vm1998 = vcmp.lt.s32.totalorder %v1977, 3
    %vm1999 = vcmp.lt.s32.totalorder %v1977, 4
    %v2000 = vsel %vm1996, %v1980, %v1983
    %v2001 = vsel %vm1999, %v1989, 2102212464
    %v2002 = vsel %vm1998, %v1986, %v2001
    %v2003 = vsel %vm1997, %v2000, %v2002
    %v2004 = vsel %vm1996, %v1983, %v1986
    %v2005 = vsel %vm1999, %v1992, 920167782
    %v2006 = vsel %vm1998, %v1989, %v2005
    %v2007 = vsel %vm1997, %v2004, %v2006
    %v2008 = vsel %vm1996, %v1986, %v1989
    %v2009 = vsel %vm1999, %v1995, 1326507024
    %v2010 = vsel %vm1998, %v1992, %v2009
    %v2011 = vsel %vm1997, %v2008, %v2010
    %v2012 = vshll.u32 %v1972, 8
    %v2013 = vmul.u32.u64.compose %v2012, %v2011
    %v2014 = vextract.low.u32 %v2013
    %v2015 = vextract.high.u32 %v2013
    %v2016 = vmul.u32.u64.compose %v2012, %v2007
    %v2017 = vextract.low.u32 %v2016
    %v2018 = vextract.high.u32 %v2016
    %v2019 = vmul.u32 %v2012, %v2003
    %v2020 = vadd.s32 %v2015, %v2017
    %vm2021 = vc.u32 %v2015, %v2017
    %v2022 = vadd.s32 %v2018, 1
    %v2023 = vsel %vm2021, %v2022, %v2018
    %v2024 = vadd.s32 %v2019, %v2023
    %v2025 = vadd.s32 %v2024, 536870912
    %v2026 = vshrl.u32 %v2025, 30
    %v2027 = vshll.u32 %v2026, 30
    %v2028 = vsub.s32 %v2024, %v2027
    %vm2029 = vcmp.lt.s32.totalorder %v2028, 0
    %v2030 = vsub.s32 0, %v2028
    %v2031 = vsel %vm2029, %v2030, %v2028
    %v2032 = vclz %v2031
    %v2033 = vsub.s32 %v2032, 2
    %vm2034 = vcmp.gt.s32.totalorder 0, %v2033
    %v2035 = vsel %vm2034, 0, %v2033
    %v2036 = vsub.s32 32, %v2035
    %v2037 = vshll.u32 %v2028, %v2035
    %v2038 = vshrl.u32 %v2020, %v2036
    %v2039 = vor.u32 %v2037, %v2038
    %v2040 = vsub.s32 4294967266, %v2035
    %v2041 = vadd.s32 %v2040, 127
    %v2042 = vshll.u32 %v2041, 23
    %v2043 = vor.u32 4788187, %v2042
    %v2044 = vand.u32 2147483647, %v2043
    %v2046 = vcvt.s32.f32 %v2039
    %v2047 = vmul.f32 %v2046, %v2044
    %v2048 = vxor.u32 %v2047, 2147483648
    %v2049 = vsel %vm1966, %v2048, %v2047
    %v2050 = vsub.s32 4, %v2026
    %v2051 = vsel %vm1966, %v2050, %v2026
    %v2052 = vsel %vm1965, %v622, %v2049
    %v2053 = vsel %vm1965, 0, %v2051
    %v2054 = vcosq.f32.pop %v2052
    %v2055 = vsinq.f32.pop %v2052
    %vm2056 = vweird.f32 %v622
    %v2057 = vand.u32 %v2053, 3
    %vm2058 = vcmp.lt.s32.totalorder %v2057, 2
    %vm2059 = vcmp.eq.s32.totalorder %v2057, 0
    %v2060 = vxor.u32 %v2055, 2147483648
    %v2061 = vsel %vm2059, %v2054, %v2060
    %vm2062 = vcmp.eq.s32.totalorder %v2057, 2
    %v2063 = vxor.u32 %v2054, 2147483648
    %v2064 = vsel %vm2062, %v2063, %v2055
    %v2065 = vsel %vm2058, %v2061, %v2064
    %v2066 = vsel %vm2056, nan, %v2065
    %v2067 = vand.u32 2147483647, %v623
    %vm2068 = vcmp.le.f32.partialorder %v2067, 0.7853982
    %vm2069 = vcmp.lt.s32.totalorder %v623, 0
    %v2070 = vand.u32 %v623, 2139095040
    %v2071 = vshrl.u32 %v2070, 23
    %v2072 = vsub.s32 %v2071, 127
    %v2073 = vand.u32 2147483647, %v623
    %v2074 = vand.u32 %v2073, 8388607
    %v2075 = vor.u32 %v2074, 8388608
    %v2076 = vsub.s32 0, %v2075
    %v2077 = vadd.s32 %v2072, 1
    %vm2078 = vcmp.gt.s32.totalorder %v2077, 0
    %v2079 = vsel %vm2078, %v2077, 0
    %v2080 = vshrl.u32 %v2079, 5
    %v2081 = vand.u32 %v2079, 31
    %v2082 = vsub.s32 32, %v2081
    %v2083 = vshrl.u32 683565275, %v2082
    %v2084 = vshll.u32 683565275, %v2081
    %v2085 = vshrl.u32 2475754826, %v2082
    %v2086 = vor.u32 %v2084, %v2085
    %v2087 = vshll.u32 2475754826, %v2081
    %v2088 = vshrl.u32 2131351028, %v2082
    %v2089 = vor.u32 %v2087, %v2088
    %v2090 = vshll.u32 2131351028, %v2081
    %v2091 = vshrl.u32 2102212464, %v2082
    %v2092 = vor.u32 %v2090, %v2091
    %v2093 = vshll.u32 2102212464, %v2081
    %v2094 = vshrl.u32 920167782, %v2082
    %v2095 = vor.u32 %v2093, %v2094
    %v2096 = vshll.u32 920167782, %v2081
    %v2097 = vshrl.u32 1326507024, %v2082
    %v2098 = vor.u32 %v2096, %v2097
    %vm2099 = vcmp.lt.s32.totalorder %v2080, 1
    %vm2100 = vcmp.lt.s32.totalorder %v2080, 2
    %vm2101 = vcmp.lt.s32.totalorder %v2080, 3
    %vm2102 = vcmp.lt.s32.totalorder %v2080, 4
    %v2103 = vsel %vm2099, %v2083, %v2086
    %v2104 = vsel %vm2102, %v2092, 2102212464
    %v2105 = vsel %vm2101, %v2089, %v2104
    %v2106 = vsel %vm2100, %v2103, %v2105
    %v2107 = vsel %vm2099, %v2086, %v2089
    %v2108 = vsel %vm2102, %v2095, 920167782
    %v2109 = vsel %vm2101, %v2092, %v2108
    %v2110 = vsel %vm2100, %v2107, %v2109
    %v2111 = vsel %vm2099, %v2089, %v2092
    %v2112 = vsel %vm2102, %v2098, 1326507024
    %v2113 = vsel %vm2101, %v2095, %v2112
    %v2114 = vsel %vm2100, %v2111, %v2113
    %v2115 = vshll.u32 %v2075, 8
    %v2116 = vmul.u32.u64.compose %v2115, %v2114
    %v2117 = vextract.low.u32 %v2116
    %v2118 = vextract.high.u32 %v2116
    %v2119 = vmul.u32.u64.compose %v2115, %v2110
    %v2120 = vextract.low.u32 %v2119
    %v2121 = vextract.high.u32 %v2119
    %v2122 = vmul.u32 %v2115, %v2106
    %v2123 = vadd.s32 %v2118, %v2120
    %vm2124 = vc.u32 %v2118, %v2120
    %v2125 = vadd.s32 %v2121, 1
    %v2126 = vsel %vm2124, %v2125, %v2121
    %v2127 = vadd.s32 %v2122, %v2126
    %v2128 = vadd.s32 %v2127, 536870912
    %v2129 = vshrl.u32 %v2128, 30
    %v2130 = vshll.u32 %v2129, 30
    %v2131 = vsub.s32 %v2127, %v2130
    %vm2132 = vcmp.lt.s32.totalorder %v2131, 0
    %v2133 = vsub.s32 0, %v2131
    %v2134 = vsel %vm2132, %v2133, %v2131
    %v2135 = vclz %v2134
    %v2136 = vsub.s32 %v2135, 2
    %vm2137 = vcmp.gt.s32.totalorder 0, %v2136
    %v2138 = vsel %vm2137, 0, %v2136
    %v2139 = vsub.s32 32, %v2138
    %v2140 = vshll.u32 %v2131, %v2138
    %v2141 = vshrl.u32 %v2123, %v2139
    %v2142 = vor.u32 %v2140, %v2141
    %v2143 = vsub.s32 4294967266, %v2138
    %v2144 = vadd.s32 %v2143, 127
    %v2145 = vshll.u32 %v2144, 23
    %v2146 = vor.u32 4788187, %v2145
    %v2147 = vand.u32 2147483647, %v2146
    %v2149 = vcvt.s32.f32 %v2142
    %v2150 = vmul.f32 %v2149, %v2147
    %v2151 = vxor.u32 %v2150, 2147483648
    %v2152 = vsel %vm2069, %v2151, %v2150
    %v2153 = vsub.s32 4, %v2129
    %v2154 = vsel %vm2069, %v2153, %v2129
    %v2155 = vsel %vm2068, %v623, %v2152
    %v2156 = vsel %vm2068, 0, %v2154
    %v2157 = vcosq.f32.pop %v2155
    %v2158 = vsinq.f32.pop %v2155
    %vm2159 = vweird.f32 %v623
    %v2160 = vand.u32 %v2156, 3
    %vm2161 = vcmp.lt.s32.totalorder %v2160, 2
    %vm2162 = vcmp.eq.s32.totalorder %v2160, 0
    %v2163 = vxor.u32 %v2158, 2147483648
    %v2164 = vsel %vm2162, %v2157, %v2163
    %vm2165 = vcmp.eq.s32.totalorder %v2160, 2
    %v2166 = vxor.u32 %v2157, 2147483648
    %v2167 = vsel %vm2165, %v2166, %v2158
    %v2168 = vsel %vm2161, %v2164, %v2167
    %v2169 = vsel %vm2159, nan, %v2168
    %v2170 = vand.u32 2147483647, %v624
    %vm2171 = vcmp.le.f32.partialorder %v2170, 0.7853982
    %vm2172 = vcmp.lt.s32.totalorder %v624, 0
    %v2173 = vand.u32 %v624, 2139095040
    %v2174 = vshrl.u32 %v2173, 23
    %v2175 = vsub.s32 %v2174, 127
    %v2176 = vand.u32 2147483647, %v624
    %v2177 = vand.u32 %v2176, 8388607
    %v2178 = vor.u32 %v2177, 8388608
    %v2179 = vsub.s32 0, %v2178
    %v2180 = vadd.s32 %v2175, 1
    %vm2181 = vcmp.gt.s32.totalorder %v2180, 0
    %v2182 = vsel %vm2181, %v2180, 0
    %v2183 = vshrl.u32 %v2182, 5
    %v2184 = vand.u32 %v2182, 31
    %v2185 = vsub.s32 32, %v2184
    %v2186 = vshrl.u32 683565275, %v2185
    %v2187 = vshll.u32 683565275, %v2184
    %v2188 = vshrl.u32 2475754826, %v2185
    %v2189 = vor.u32 %v2187, %v2188
    %v2190 = vshll.u32 2475754826, %v2184
    %v2191 = vshrl.u32 2131351028, %v2185
    %v2192 = vor.u32 %v2190, %v2191
    %v2193 = vshll.u32 2131351028, %v2184
    %v2194 = vshrl.u32 2102212464, %v2185
    %v2195 = vor.u32 %v2193, %v2194
    %v2196 = vshll.u32 2102212464, %v2184
    %v2197 = vshrl.u32 920167782, %v2185
    %v2198 = vor.u32 %v2196, %v2197
    %v2199 = vshll.u32 920167782, %v2184
    %v2200 = vshrl.u32 1326507024, %v2185
    %v2201 = vor.u32 %v2199, %v2200
    %vm2202 = vcmp.lt.s32.totalorder %v2183, 1
    %vm2203 = vcmp.lt.s32.totalorder %v2183, 2
    %vm2204 = vcmp.lt.s32.totalorder %v2183, 3
    %vm2205 = vcmp.lt.s32.totalorder %v2183, 4
    %v2206 = vsel %vm2202, %v2186, %v2189
    %v2207 = vsel %vm2205, %v2195, 2102212464
    %v2208 = vsel %vm2204, %v2192, %v2207
    %v2209 = vsel %vm2203, %v2206, %v2208
    %v2210 = vsel %vm2202, %v2189, %v2192
    %v2211 = vsel %vm2205, %v2198, 920167782
    %v2212 = vsel %vm2204, %v2195, %v2211
    %v2213 = vsel %vm2203, %v2210, %v2212
    %v2214 = vsel %vm2202, %v2192, %v2195
    %v2215 = vsel %vm2205, %v2201, 1326507024
    %v2216 = vsel %vm2204, %v2198, %v2215
    %v2217 = vsel %vm2203, %v2214, %v2216
    %v2218 = vshll.u32 %v2178, 8
    %v2219 = vmul.u32.u64.compose %v2218, %v2217
    %v2220 = vextract.low.u32 %v2219
    %v2221 = vextract.high.u32 %v2219
    %v2222 = vmul.u32.u64.compose %v2218, %v2213
    %v2223 = vextract.low.u32 %v2222
    %v2224 = vextract.high.u32 %v2222
    %v2225 = vmul.u32 %v2218, %v2209
    %v2226 = vadd.s32 %v2221, %v2223
    %vm2227 = vc.u32 %v2221, %v2223
    %v2228 = vadd.s32 %v2224, 1
    %v2229 = vsel %vm2227, %v2228, %v2224
    %v2230 = vadd.s32 %v2225, %v2229
    %v2231 = vadd.s32 %v2230, 536870912
    %v2232 = vshrl.u32 %v2231, 30
    %v2233 = vshll.u32 %v2232, 30
    %v2234 = vsub.s32 %v2230, %v2233
    %vm2235 = vcmp.lt.s32.totalorder %v2234, 0
    %v2236 = vsub.s32 0, %v2234
    %v2237 = vsel %vm2235, %v2236, %v2234
    %v2238 = vclz %v2237
    %v2239 = vsub.s32 %v2238, 2
    %vm2240 = vcmp.gt.s32.totalorder 0, %v2239
    %v2241 = vsel %vm2240, 0, %v2239
    %v2242 = vsub.s32 32, %v2241
    %v2243 = vshll.u32 %v2234, %v2241
    %v2244 = vshrl.u32 %v2226, %v2242
    %v2245 = vor.u32 %v2243, %v2244
    %v2246 = vsub.s32 4294967266, %v2241
    %v2247 = vadd.s32 %v2246, 127
    %v2248 = vshll.u32 %v2247, 23
    %v2249 = vor.u32 4788187, %v2248
    %v2250 = vand.u32 2147483647, %v2249
    %v2252 = vcvt.s32.f32 %v2245
    %v2253 = vmul.f32 %v2252, %v2250
    %v2254 = vxor.u32 %v2253, 2147483648
    %v2255 = vsel %vm2172, %v2254, %v2253
    %v2256 = vsub.s32 4, %v2232
    %v2257 = vsel %vm2172, %v2256, %v2232
    %v2258 = vsel %vm2171, %v624, %v2255
    %v2259 = vsel %vm2171, 0, %v2257
    %v2260 = vcosq.f32.pop %v2258
    %v2261 = vsinq.f32.pop %v2258
    %vm2262 = vweird.f32 %v624
    %v2263 = vand.u32 %v2259, 3
    %vm2264 = vcmp.lt.s32.totalorder %v2263, 2
    %vm2265 = vcmp.eq.s32.totalorder %v2263, 0
    %v2266 = vxor.u32 %v2261, 2147483648
    %v2267 = vsel %vm2265, %v2260, %v2266
    %vm2268 = vcmp.eq.s32.totalorder %v2263, 2
    %v2269 = vxor.u32 %v2260, 2147483648
    %v2270 = vsel %vm2268, %v2269, %v2261
    %v2271 = vsel %vm2264, %v2267, %v2270
    %v2272 = vsel %vm2262, nan, %v2271
    %v2273 = vmul.f32 %v503, %v727
    %v2274 = vmul.f32 %v510, %v830
    %v2275 = vmul.f32 %v517, %v933
    %v2276 = vmul.f32 %v524, %v1036
    %v2277 = vmul.f32 %v531, %v1139
    %v2278 = vmul.f32 %v538, %v1242
    %v2279 = vmul.f32 %v545, %v1345
    %v2280 = vmul.f32 %v552, %v1448
    %v2281 = vmul.f32 %v559, %v1551
    %v2282 = vmul.f32 %v566, %v1654
    %v2283 = vmul.f32 %v573, %v1757
    %v2284 = vmul.f32 %v580, %v1860
    %v2285 = vmul.f32 %v587, %v1963
    %v2286 = vmul.f32 %v594, %v2066
    %v2287 = vmul.f32 %v601, %v2169
    %v2288 = vmul.f32 %v608, %v2272
    %v2289 = vand.u32 2147483647, %v609
    %vm2290 = vcmp.le.f32.partialorder %v2289, 0.7853982
    %vm2291 = vcmp.lt.s32.totalorder %v609, 0
    %v2292 = vand.u32 %v609, 2139095040
    %v2293 = vshrl.u32 %v2292, 23
    %v2294 = vsub.s32 %v2293, 127
    %v2295 = vand.u32 2147483647, %v609
    %v2296 = vand.u32 %v2295, 8388607
    %v2297 = vor.u32 %v2296, 8388608
    %v2298 = vsub.s32 0, %v2297
    %v2299 = vadd.s32 %v2294, 1
    %vm2300 = vcmp.gt.s32.totalorder %v2299, 0
    %v2301 = vsel %vm2300, %v2299, 0
    %v2302 = vshrl.u32 %v2301, 5
    %v2303 = vand.u32 %v2301, 31
    %v2304 = vsub.s32 32, %v2303
    %v2305 = vshrl.u32 683565275, %v2304
    %v2306 = vshll.u32 683565275, %v2303
    %v2307 = vshrl.u32 2475754826, %v2304
    %v2308 = vor.u32 %v2306, %v2307
    %v2309 = vshll.u32 2475754826, %v2303
    %v2310 = vshrl.u32 2131351028, %v2304
    %v2311 = vor.u32 %v2309, %v2310
    %v2312 = vshll.u32 2131351028, %v2303
    %v2313 = vshrl.u32 2102212464, %v2304
    %v2314 = vor.u32 %v2312, %v2313
    %v2315 = vshll.u32 2102212464, %v2303
    %v2316 = vshrl.u32 920167782, %v2304
    %v2317 = vor.u32 %v2315, %v2316
    %v2318 = vshll.u32 920167782, %v2303
    %v2319 = vshrl.u32 1326507024, %v2304
    %v2320 = vor.u32 %v2318, %v2319
    %vm2321 = vcmp.lt.s32.totalorder %v2302, 1
    %vm2322 = vcmp.lt.s32.totalorder %v2302, 2
    %vm2323 = vcmp.lt.s32.totalorder %v2302, 3
    %vm2324 = vcmp.lt.s32.totalorder %v2302, 4
    %v2325 = vsel %vm2321, %v2305, %v2308
    %v2326 = vsel %vm2324, %v2314, 2102212464
    %v2327 = vsel %vm2323, %v2311, %v2326
    %v2328 = vsel %vm2322, %v2325, %v2327
    %v2329 = vsel %vm2321, %v2308, %v2311
    %v2330 = vsel %vm2324, %v2317, 920167782
    %v2331 = vsel %vm2323, %v2314, %v2330
    %v2332 = vsel %vm2322, %v2329, %v2331
    %v2333 = vsel %vm2321, %v2311, %v2314
    %v2334 = vsel %vm2324, %v2320, 1326507024
    %v2335 = vsel %vm2323, %v2317, %v2334
    %v2336 = vsel %vm2322, %v2333, %v2335
    %v2337 = vshll.u32 %v2297, 8
    %v2338 = vmul.u32.u64.compose %v2337, %v2336
    %v2339 = vextract.low.u32 %v2338
    %v2340 = vextract.high.u32 %v2338
    %v2341 = vmul.u32.u64.compose %v2337, %v2332
    %v2342 = vextract.low.u32 %v2341
    %v2343 = vextract.high.u32 %v2341
    %v2344 = vmul.u32 %v2337, %v2328
    %v2345 = vadd.s32 %v2340, %v2342
    %vm2346 = vc.u32 %v2340, %v2342
    %v2347 = vadd.s32 %v2343, 1
    %v2348 = vsel %vm2346, %v2347, %v2343
    %v2349 = vadd.s32 %v2344, %v2348
    %v2350 = vadd.s32 %v2349, 536870912
    %v2351 = vshrl.u32 %v2350, 30
    %v2352 = vshll.u32 %v2351, 30
    %v2353 = vsub.s32 %v2349, %v2352
    %vm2354 = vcmp.lt.s32.totalorder %v2353, 0
    %v2355 = vsub.s32 0, %v2353
    %v2356 = vsel %vm2354, %v2355, %v2353
    %v2357 = vclz %v2356
    %v2358 = vsub.s32 %v2357, 2
    %vm2359 = vcmp.gt.s32.totalorder 0, %v2358
    %v2360 = vsel %vm2359, 0, %v2358
    %v2361 = vsub.s32 32, %v2360
    %v2362 = vshll.u32 %v2353, %v2360
    %v2363 = vshrl.u32 %v2345, %v2361
    %v2364 = vor.u32 %v2362, %v2363
    %v2365 = vsub.s32 4294967266, %v2360
    %v2366 = vadd.s32 %v2365, 127
    %v2367 = vshll.u32 %v2366, 23
    %v2368 = vor.u32 4788187, %v2367
    %v2369 = vand.u32 2147483647, %v2368
    %v2371 = vcvt.s32.f32 %v2364
    %v2372 = vmul.f32 %v2371, %v2369
    %v2373 = vxor.u32 %v2372, 2147483648
    %v2374 = vsel %vm2291, %v2373, %v2372
    %v2375 = vsub.s32 4, %v2351
    %v2376 = vsel %vm2291, %v2375, %v2351
    %v2377 = vsel %vm2290, %v609, %v2374
    %v2378 = vsel %vm2290, 0, %v2376
    %v2379 = vcosq.f32.pop %v2377
    %v2380 = vsinq.f32.pop %v2377
    %vm2381 = vweird.f32 %v609
    %v2382 = vadd.s32 %v2378, 3
    %v2383 = vand.u32 %v2382, 3
    %vm2384 = vcmp.lt.s32.totalorder %v2383, 2
    %vm2385 = vcmp.eq.s32.totalorder %v2383, 0
    %v2386 = vxor.u32 %v2380, 2147483648
    %v2387 = vsel %vm2385, %v2379, %v2386
    %vm2388 = vcmp.eq.s32.totalorder %v2383, 2
    %v2389 = vxor.u32 %v2379, 2147483648
    %v2390 = vsel %vm2388, %v2389, %v2380
    %v2391 = vsel %vm2384, %v2387, %v2390
    %v2392 = vsel %vm2381, nan, %v2391
    %v2393 = vand.u32 2147483647, %v610
    %vm2394 = vcmp.le.f32.partialorder %v2393, 0.7853982
    %vm2395 = vcmp.lt.s32.totalorder %v610, 0
    %v2396 = vand.u32 %v610, 2139095040
    %v2397 = vshrl.u32 %v2396, 23
    %v2398 = vsub.s32 %v2397, 127
    %v2399 = vand.u32 2147483647, %v610
    %v2400 = vand.u32 %v2399, 8388607
    %v2401 = vor.u32 %v2400, 8388608
    %v2402 = vsub.s32 0, %v2401
    %v2403 = vadd.s32 %v2398, 1
    %vm2404 = vcmp.gt.s32.totalorder %v2403, 0
    %v2405 = vsel %vm2404, %v2403, 0
    %v2406 = vshrl.u32 %v2405, 5
    %v2407 = vand.u32 %v2405, 31
    %v2408 = vsub.s32 32, %v2407
    %v2409 = vshrl.u32 683565275, %v2408
    %v2410 = vshll.u32 683565275, %v2407
    %v2411 = vshrl.u32 2475754826, %v2408
    %v2412 = vor.u32 %v2410, %v2411
    %v2413 = vshll.u32 2475754826, %v2407
    %v2414 = vshrl.u32 2131351028, %v2408
    %v2415 = vor.u32 %v2413, %v2414
    %v2416 = vshll.u32 2131351028, %v2407
    %v2417 = vshrl.u32 2102212464, %v2408
    %v2418 = vor.u32 %v2416, %v2417
    %v2419 = vshll.u32 2102212464, %v2407
    %v2420 = vshrl.u32 920167782, %v2408
    %v2421 = vor.u32 %v2419, %v2420
    %v2422 = vshll.u32 920167782, %v2407
    %v2423 = vshrl.u32 1326507024, %v2408
    %v2424 = vor.u32 %v2422, %v2423
    %vm2425 = vcmp.lt.s32.totalorder %v2406, 1
    %vm2426 = vcmp.lt.s32.totalorder %v2406, 2
    %vm2427 = vcmp.lt.s32.totalorder %v2406, 3
    %vm2428 = vcmp.lt.s32.totalorder %v2406, 4
    %v2429 = vsel %vm2425, %v2409, %v2412
    %v2430 = vsel %vm2428, %v2418, 2102212464
    %v2431 = vsel %vm2427, %v2415, %v2430
    %v2432 = vsel %vm2426, %v2429, %v2431
    %v2433 = vsel %vm2425, %v2412, %v2415
    %v2434 = vsel %vm2428, %v2421, 920167782
    %v2435 = vsel %vm2427, %v2418, %v2434
    %v2436 = vsel %vm2426, %v2433, %v2435
    %v2437 = vsel %vm2425, %v2415, %v2418
    %v2438 = vsel %vm2428, %v2424, 1326507024
    %v2439 = vsel %vm2427, %v2421, %v2438
    %v2440 = vsel %vm2426, %v2437, %v2439
    %v2441 = vshll.u32 %v2401, 8
    %v2442 = vmul.u32.u64.compose %v2441, %v2440
    %v2443 = vextract.low.u32 %v2442
    %v2444 = vextract.high.u32 %v2442
    %v2445 = vmul.u32.u64.compose %v2441, %v2436
    %v2446 = vextract.low.u32 %v2445
    %v2447 = vextract.high.u32 %v2445
    %v2448 = vmul.u32 %v2441, %v2432
    %v2449 = vadd.s32 %v2444, %v2446
    %vm2450 = vc.u32 %v2444, %v2446
    %v2451 = vadd.s32 %v2447, 1
    %v2452 = vsel %vm2450, %v2451, %v2447
    %v2453 = vadd.s32 %v2448, %v2452
    %v2454 = vadd.s32 %v2453, 536870912
    %v2455 = vshrl.u32 %v2454, 30
    %v2456 = vshll.u32 %v2455, 30
    %v2457 = vsub.s32 %v2453, %v2456
    %vm2458 = vcmp.lt.s32.totalorder %v2457, 0
    %v2459 = vsub.s32 0, %v2457
    %v2460 = vsel %vm2458, %v2459, %v2457
    %v2461 = vclz %v2460
    %v2462 = vsub.s32 %v2461, 2
    %vm2463 = vcmp.gt.s32.totalorder 0, %v2462
    %v2464 = vsel %vm2463, 0, %v2462
    %v2465 = vsub.s32 32, %v2464
    %v2466 = vshll.u32 %v2457, %v2464
    %v2467 = vshrl.u32 %v2449, %v2465
    %v2468 = vor.u32 %v2466, %v2467
    %v2469 = vsub.s32 4294967266, %v2464
    %v2470 = vadd.s32 %v2469, 127
    %v2471 = vshll.u32 %v2470, 23
    %v2472 = vor.u32 4788187, %v2471
    %v2473 = vand.u32 2147483647, %v2472
    %v2475 = vcvt.s32.f32 %v2468
    %v2476 = vmul.f32 %v2475, %v2473
    %v2477 = vxor.u32 %v2476, 2147483648
    %v2478 = vsel %vm2395, %v2477, %v2476
    %v2479 = vsub.s32 4, %v2455
    %v2480 = vsel %vm2395, %v2479, %v2455
    %v2481 = vsel %vm2394, %v610, %v2478
    %v2482 = vsel %vm2394, 0, %v2480
    %v2483 = vcosq.f32.pop %v2481
    %v2484 = vsinq.f32.pop %v2481
    %vm2485 = vweird.f32 %v610
    %v2486 = vadd.s32 %v2482, 3
    %v2487 = vand.u32 %v2486, 3
    %vm2488 = vcmp.lt.s32.totalorder %v2487, 2
    %vm2489 = vcmp.eq.s32.totalorder %v2487, 0
    %v2490 = vxor.u32 %v2484, 2147483648
    %v2491 = vsel %vm2489, %v2483, %v2490
    %vm2492 = vcmp.eq.s32.totalorder %v2487, 2
    %v2493 = vxor.u32 %v2483, 2147483648
    %v2494 = vsel %vm2492, %v2493, %v2484
    %v2495 = vsel %vm2488, %v2491, %v2494
    %v2496 = vsel %vm2485, nan, %v2495
    %v2497 = vand.u32 2147483647, %v611
    %vm2498 = vcmp.le.f32.partialorder %v2497, 0.7853982
    %vm2499 = vcmp.lt.s32.totalorder %v611, 0
    %v2500 = vand.u32 %v611, 2139095040
    %v2501 = vshrl.u32 %v2500, 23
    %v2502 = vsub.s32 %v2501, 127
    %v2503 = vand.u32 2147483647, %v611
    %v2504 = vand.u32 %v2503, 8388607
    %v2505 = vor.u32 %v2504, 8388608
    %v2506 = vsub.s32 0, %v2505
    %v2507 = vadd.s32 %v2502, 1
    %vm2508 = vcmp.gt.s32.totalorder %v2507, 0
    %v2509 = vsel %vm2508, %v2507, 0
    %v2510 = vshrl.u32 %v2509, 5
    %v2511 = vand.u32 %v2509, 31
    %v2512 = vsub.s32 32, %v2511
    %v2513 = vshrl.u32 683565275, %v2512
    %v2514 = vshll.u32 683565275, %v2511
    %v2515 = vshrl.u32 2475754826, %v2512
    %v2516 = vor.u32 %v2514, %v2515
    %v2517 = vshll.u32 2475754826, %v2511
    %v2518 = vshrl.u32 2131351028, %v2512
    %v2519 = vor.u32 %v2517, %v2518
    %v2520 = vshll.u32 2131351028, %v2511
    %v2521 = vshrl.u32 2102212464, %v2512
    %v2522 = vor.u32 %v2520, %v2521
    %v2523 = vshll.u32 2102212464, %v2511
    %v2524 = vshrl.u32 920167782, %v2512
    %v2525 = vor.u32 %v2523, %v2524
    %v2526 = vshll.u32 920167782, %v2511
    %v2527 = vshrl.u32 1326507024, %v2512
    %v2528 = vor.u32 %v2526, %v2527
    %vm2529 = vcmp.lt.s32.totalorder %v2510, 1
    %vm2530 = vcmp.lt.s32.totalorder %v2510, 2
    %vm2531 = vcmp.lt.s32.totalorder %v2510, 3
    %vm2532 = vcmp.lt.s32.totalorder %v2510, 4
    %v2533 = vsel %vm2529, %v2513, %v2516
    %v2534 = vsel %vm2532, %v2522, 2102212464
    %v2535 = vsel %vm2531, %v2519, %v2534
    %v2536 = vsel %vm2530, %v2533, %v2535
    %v2537 = vsel %vm2529, %v2516, %v2519
    %v2538 = vsel %vm2532, %v2525, 920167782
    %v2539 = vsel %vm2531, %v2522, %v2538
    %v2540 = vsel %vm2530, %v2537, %v2539
    %v2541 = vsel %vm2529, %v2519, %v2522
    %v2542 = vsel %vm2532, %v2528, 1326507024
    %v2543 = vsel %vm2531, %v2525, %v2542
    %v2544 = vsel %vm2530, %v2541, %v2543
    %v2545 = vshll.u32 %v2505, 8
    %v2546 = vmul.u32.u64.compose %v2545, %v2544
    %v2547 = vextract.low.u32 %v2546
    %v2548 = vextract.high.u32 %v2546
    %v2549 = vmul.u32.u64.compose %v2545, %v2540
    %v2550 = vextract.low.u32 %v2549
    %v2551 = vextract.high.u32 %v2549
    %v2552 = vmul.u32 %v2545, %v2536
    %v2553 = vadd.s32 %v2548, %v2550
    %vm2554 = vc.u32 %v2548, %v2550
    %v2555 = vadd.s32 %v2551, 1
    %v2556 = vsel %vm2554, %v2555, %v2551
    %v2557 = vadd.s32 %v2552, %v2556
    %v2558 = vadd.s32 %v2557, 536870912
    %v2559 = vshrl.u32 %v2558, 30
    %v2560 = vshll.u32 %v2559, 30
    %v2561 = vsub.s32 %v2557, %v2560
    %vm2562 = vcmp.lt.s32.totalorder %v2561, 0
    %v2563 = vsub.s32 0, %v2561
    %v2564 = vsel %vm2562, %v2563, %v2561
    %v2565 = vclz %v2564
    %v2566 = vsub.s32 %v2565, 2
    %vm2567 = vcmp.gt.s32.totalorder 0, %v2566
    %v2568 = vsel %vm2567, 0, %v2566
    %v2569 = vsub.s32 32, %v2568
    %v2570 = vshll.u32 %v2561, %v2568
    %v2571 = vshrl.u32 %v2553, %v2569
    %v2572 = vor.u32 %v2570, %v2571
    %v2573 = vsub.s32 4294967266, %v2568
    %v2574 = vadd.s32 %v2573, 127
    %v2575 = vshll.u32 %v2574, 23
    %v2576 = vor.u32 4788187, %v2575
    %v2577 = vand.u32 2147483647, %v2576
    %v2579 = vcvt.s32.f32 %v2572
    %v2580 = vmul.f32 %v2579, %v2577
    %v2581 = vxor.u32 %v2580, 2147483648
    %v2582 = vsel %vm2499, %v2581, %v2580
    %v2583 = vsub.s32 4, %v2559
    %v2584 = vsel %vm2499, %v2583, %v2559
    %v2585 = vsel %vm2498, %v611, %v2582
    %v2586 = vsel %vm2498, 0, %v2584
    %v2587 = vcosq.f32.pop %v2585
    %v2588 = vsinq.f32.pop %v2585
    %vm2589 = vweird.f32 %v611
    %v2590 = vadd.s32 %v2586, 3
    %v2591 = vand.u32 %v2590, 3
    %vm2592 = vcmp.lt.s32.totalorder %v2591, 2
    %vm2593 = vcmp.eq.s32.totalorder %v2591, 0
    %v2594 = vxor.u32 %v2588, 2147483648
    %v2595 = vsel %vm2593, %v2587, %v2594
    %vm2596 = vcmp.eq.s32.totalorder %v2591, 2
    %v2597 = vxor.u32 %v2587, 2147483648
    %v2598 = vsel %vm2596, %v2597, %v2588
    %v2599 = vsel %vm2592, %v2595, %v2598
    %v2600 = vsel %vm2589, nan, %v2599
    %v2601 = vand.u32 2147483647, %v612
    %vm2602 = vcmp.le.f32.partialorder %v2601, 0.7853982
    %vm2603 = vcmp.lt.s32.totalorder %v612, 0
    %v2604 = vand.u32 %v612, 2139095040
    %v2605 = vshrl.u32 %v2604, 23
    %v2606 = vsub.s32 %v2605, 127
    %v2607 = vand.u32 2147483647, %v612
    %v2608 = vand.u32 %v2607, 8388607
    %v2609 = vor.u32 %v2608, 8388608
    %v2610 = vsub.s32 0, %v2609
    %v2611 = vadd.s32 %v2606, 1
    %vm2612 = vcmp.gt.s32.totalorder %v2611, 0
    %v2613 = vsel %vm2612, %v2611, 0
    %v2614 = vshrl.u32 %v2613, 5
    %v2615 = vand.u32 %v2613, 31
    %v2616 = vsub.s32 32, %v2615
    %v2617 = vshrl.u32 683565275, %v2616
    %v2618 = vshll.u32 683565275, %v2615
    %v2619 = vshrl.u32 2475754826, %v2616
    %v2620 = vor.u32 %v2618, %v2619
    %v2621 = vshll.u32 2475754826, %v2615
    %v2622 = vshrl.u32 2131351028, %v2616
    %v2623 = vor.u32 %v2621, %v2622
    %v2624 = vshll.u32 2131351028, %v2615
    %v2625 = vshrl.u32 2102212464, %v2616
    %v2626 = vor.u32 %v2624, %v2625
    %v2627 = vshll.u32 2102212464, %v2615
    %v2628 = vshrl.u32 920167782, %v2616
    %v2629 = vor.u32 %v2627, %v2628
    %v2630 = vshll.u32 920167782, %v2615
    %v2631 = vshrl.u32 1326507024, %v2616
    %v2632 = vor.u32 %v2630, %v2631
    %vm2633 = vcmp.lt.s32.totalorder %v2614, 1
    %vm2634 = vcmp.lt.s32.totalorder %v2614, 2
    %vm2635 = vcmp.lt.s32.totalorder %v2614, 3
    %vm2636 = vcmp.lt.s32.totalorder %v2614, 4
    %v2637 = vsel %vm2633, %v2617, %v2620
    %v2638 = vsel %vm2636, %v2626, 2102212464
    %v2639 = vsel %vm2635, %v2623, %v2638
    %v2640 = vsel %vm2634, %v2637, %v2639
    %v2641 = vsel %vm2633, %v2620, %v2623
    %v2642 = vsel %vm2636, %v2629, 920167782
    %v2643 = vsel %vm2635, %v2626, %v2642
    %v2644 = vsel %vm2634, %v2641, %v2643
    %v2645 = vsel %vm2633, %v2623, %v2626
    %v2646 = vsel %vm2636, %v2632, 1326507024
    %v2647 = vsel %vm2635, %v2629, %v2646
    %v2648 = vsel %vm2634, %v2645, %v2647
    %v2649 = vshll.u32 %v2609, 8
    %v2650 = vmul.u32.u64.compose %v2649, %v2648
    %v2651 = vextract.low.u32 %v2650
    %v2652 = vextract.high.u32 %v2650
    %v2653 = vmul.u32.u64.compose %v2649, %v2644
    %v2654 = vextract.low.u32 %v2653
    %v2655 = vextract.high.u32 %v2653
    %v2656 = vmul.u32 %v2649, %v2640
    %v2657 = vadd.s32 %v2652, %v2654
    %vm2658 = vc.u32 %v2652, %v2654
    %v2659 = vadd.s32 %v2655, 1
    %v2660 = vsel %vm2658, %v2659, %v2655
    %v2661 = vadd.s32 %v2656, %v2660
    %v2662 = vadd.s32 %v2661, 536870912
    %v2663 = vshrl.u32 %v2662, 30
    %v2664 = vshll.u32 %v2663, 30
    %v2665 = vsub.s32 %v2661, %v2664
    %vm2666 = vcmp.lt.s32.totalorder %v2665, 0
    %v2667 = vsub.s32 0, %v2665
    %v2668 = vsel %vm2666, %v2667, %v2665
    %v2669 = vclz %v2668
    %v2670 = vsub.s32 %v2669, 2
    %vm2671 = vcmp.gt.s32.totalorder 0, %v2670
    %v2672 = vsel %vm2671, 0, %v2670
    %v2673 = vsub.s32 32, %v2672
    %v2674 = vshll.u32 %v2665, %v2672
    %v2675 = vshrl.u32 %v2657, %v2673
    %v2676 = vor.u32 %v2674, %v2675
    %v2677 = vsub.s32 4294967266, %v2672
    %v2678 = vadd.s32 %v2677, 127
    %v2679 = vshll.u32 %v2678, 23
    %v2680 = vor.u32 4788187, %v2679
    %v2681 = vand.u32 2147483647, %v2680
    %v2683 = vcvt.s32.f32 %v2676
    %v2684 = vmul.f32 %v2683, %v2681
    %v2685 = vxor.u32 %v2684, 2147483648
    %v2686 = vsel %vm2603, %v2685, %v2684
    %v2687 = vsub.s32 4, %v2663
    %v2688 = vsel %vm2603, %v2687, %v2663
    %v2689 = vsel %vm2602, %v612, %v2686
    %v2690 = vsel %vm2602, 0, %v2688
    %v2691 = vcosq.f32.pop %v2689
    %v2692 = vsinq.f32.pop %v2689
    %vm2693 = vweird.f32 %v612
    %v2694 = vadd.s32 %v2690, 3
    %v2695 = vand.u32 %v2694, 3
    %vm2696 = vcmp.lt.s32.totalorder %v2695, 2
    %vm2697 = vcmp.eq.s32.totalorder %v2695, 0
    %v2698 = vxor.u32 %v2692, 2147483648
    %v2699 = vsel %vm2697, %v2691, %v2698
    %vm2700 = vcmp.eq.s32.totalorder %v2695, 2
    %v2701 = vxor.u32 %v2691, 2147483648
    %v2702 = vsel %vm2700, %v2701, %v2692
    %v2703 = vsel %vm2696, %v2699, %v2702
    %v2704 = vsel %vm2693, nan, %v2703
    %v2705 = vand.u32 2147483647, %v613
    %vm2706 = vcmp.le.f32.partialorder %v2705, 0.7853982
    %vm2707 = vcmp.lt.s32.totalorder %v613, 0
    %v2708 = vand.u32 %v613, 2139095040
    %v2709 = vshrl.u32 %v2708, 23
    %v2710 = vsub.s32 %v2709, 127
    %v2711 = vand.u32 2147483647, %v613
    %v2712 = vand.u32 %v2711, 8388607
    %v2713 = vor.u32 %v2712, 8388608
    %v2714 = vsub.s32 0, %v2713
    %v2715 = vadd.s32 %v2710, 1
    %vm2716 = vcmp.gt.s32.totalorder %v2715, 0
    %v2717 = vsel %vm2716, %v2715, 0
    %v2718 = vshrl.u32 %v2717, 5
    %v2719 = vand.u32 %v2717, 31
    %v2720 = vsub.s32 32, %v2719
    %v2721 = vshrl.u32 683565275, %v2720
    %v2722 = vshll.u32 683565275, %v2719
    %v2723 = vshrl.u32 2475754826, %v2720
    %v2724 = vor.u32 %v2722, %v2723
    %v2725 = vshll.u32 2475754826, %v2719
    %v2726 = vshrl.u32 2131351028, %v2720
    %v2727 = vor.u32 %v2725, %v2726
    %v2728 = vshll.u32 2131351028, %v2719
    %v2729 = vshrl.u32 2102212464, %v2720
    %v2730 = vor.u32 %v2728, %v2729
    %v2731 = vshll.u32 2102212464, %v2719
    %v2732 = vshrl.u32 920167782, %v2720
    %v2733 = vor.u32 %v2731, %v2732
    %v2734 = vshll.u32 920167782, %v2719
    %v2735 = vshrl.u32 1326507024, %v2720
    %v2736 = vor.u32 %v2734, %v2735
    %vm2737 = vcmp.lt.s32.totalorder %v2718, 1
    %vm2738 = vcmp.lt.s32.totalorder %v2718, 2
    %vm2739 = vcmp.lt.s32.totalorder %v2718, 3
    %vm2740 = vcmp.lt.s32.totalorder %v2718, 4
    %v2741 = vsel %vm2737, %v2721, %v2724
    %v2742 = vsel %vm2740, %v2730, 2102212464
    %v2743 = vsel %vm2739, %v2727, %v2742
    %v2744 = vsel %vm2738, %v2741, %v2743
    %v2745 = vsel %vm2737, %v2724, %v2727
    %v2746 = vsel %vm2740, %v2733, 920167782
    %v2747 = vsel %vm2739, %v2730, %v2746
    %v2748 = vsel %vm2738, %v2745, %v2747
    %v2749 = vsel %vm2737, %v2727, %v2730
    %v2750 = vsel %vm2740, %v2736, 1326507024
    %v2751 = vsel %vm2739, %v2733, %v2750
    %v2752 = vsel %vm2738, %v2749, %v2751
    %v2753 = vshll.u32 %v2713, 8
    %v2754 = vmul.u32.u64.compose %v2753, %v2752
    %v2755 = vextract.low.u32 %v2754
    %v2756 = vextract.high.u32 %v2754
    %v2757 = vmul.u32.u64.compose %v2753, %v2748
    %v2758 = vextract.low.u32 %v2757
    %v2759 = vextract.high.u32 %v2757
    %v2760 = vmul.u32 %v2753, %v2744
    %v2761 = vadd.s32 %v2756, %v2758
    %vm2762 = vc.u32 %v2756, %v2758
    %v2763 = vadd.s32 %v2759, 1
    %v2764 = vsel %vm2762, %v2763, %v2759
    %v2765 = vadd.s32 %v2760, %v2764
    %v2766 = vadd.s32 %v2765, 536870912
    %v2767 = vshrl.u32 %v2766, 30
    %v2768 = vshll.u32 %v2767, 30
    %v2769 = vsub.s32 %v2765, %v2768
    %vm2770 = vcmp.lt.s32.totalorder %v2769, 0
    %v2771 = vsub.s32 0, %v2769
    %v2772 = vsel %vm2770, %v2771, %v2769
    %v2773 = vclz %v2772
    %v2774 = vsub.s32 %v2773, 2
    %vm2775 = vcmp.gt.s32.totalorder 0, %v2774
    %v2776 = vsel %vm2775, 0, %v2774
    %v2777 = vsub.s32 32, %v2776
    %v2778 = vshll.u32 %v2769, %v2776
    %v2779 = vshrl.u32 %v2761, %v2777
    %v2780 = vor.u32 %v2778, %v2779
    %v2781 = vsub.s32 4294967266, %v2776
    %v2782 = vadd.s32 %v2781, 127
    %v2783 = vshll.u32 %v2782, 23
    %v2784 = vor.u32 4788187, %v2783
    %v2785 = vand.u32 2147483647, %v2784
    %v2787 = vcvt.s32.f32 %v2780
    %v2788 = vmul.f32 %v2787, %v2785
    %v2789 = vxor.u32 %v2788, 2147483648
    %v2790 = vsel %vm2707, %v2789, %v2788
    %v2791 = vsub.s32 4, %v2767
    %v2792 = vsel %vm2707, %v2791, %v2767
    %v2793 = vsel %vm2706, %v613, %v2790
    %v2794 = vsel %vm2706, 0, %v2792
    %v2795 = vcosq.f32.pop %v2793
    %v2796 = vsinq.f32.pop %v2793
    %vm2797 = vweird.f32 %v613
    %v2798 = vadd.s32 %v2794, 3
    %v2799 = vand.u32 %v2798, 3
    %vm2800 = vcmp.lt.s32.totalorder %v2799, 2
    %vm2801 = vcmp.eq.s32.totalorder %v2799, 0
    %v2802 = vxor.u32 %v2796, 2147483648
    %v2803 = vsel %vm2801, %v2795, %v2802
    %vm2804 = vcmp.eq.s32.totalorder %v2799, 2
    %v2805 = vxor.u32 %v2795, 2147483648
    %v2806 = vsel %vm2804, %v2805, %v2796
    %v2807 = vsel %vm2800, %v2803, %v2806
    %v2808 = vsel %vm2797, nan, %v2807
    %v2809 = vand.u32 2147483647, %v614
    %vm2810 = vcmp.le.f32.partialorder %v2809, 0.7853982
    %vm2811 = vcmp.lt.s32.totalorder %v614, 0
    %v2812 = vand.u32 %v614, 2139095040
    %v2813 = vshrl.u32 %v2812, 23
    %v2814 = vsub.s32 %v2813, 127
    %v2815 = vand.u32 2147483647, %v614
    %v2816 = vand.u32 %v2815, 8388607
    %v2817 = vor.u32 %v2816, 8388608
    %v2818 = vsub.s32 0, %v2817
    %v2819 = vadd.s32 %v2814, 1
    %vm2820 = vcmp.gt.s32.totalorder %v2819, 0
    %v2821 = vsel %vm2820, %v2819, 0
    %v2822 = vshrl.u32 %v2821, 5
    %v2823 = vand.u32 %v2821, 31
    %v2824 = vsub.s32 32, %v2823
    %v2825 = vshrl.u32 683565275, %v2824
    %v2826 = vshll.u32 683565275, %v2823
    %v2827 = vshrl.u32 2475754826, %v2824
    %v2828 = vor.u32 %v2826, %v2827
    %v2829 = vshll.u32 2475754826, %v2823
    %v2830 = vshrl.u32 2131351028, %v2824
    %v2831 = vor.u32 %v2829, %v2830
    %v2832 = vshll.u32 2131351028, %v2823
    %v2833 = vshrl.u32 2102212464, %v2824
    %v2834 = vor.u32 %v2832, %v2833
    %v2835 = vshll.u32 2102212464, %v2823
    %v2836 = vshrl.u32 920167782, %v2824
    %v2837 = vor.u32 %v2835, %v2836
    %v2838 = vshll.u32 920167782, %v2823
    %v2839 = vshrl.u32 1326507024, %v2824
    %v2840 = vor.u32 %v2838, %v2839
    %vm2841 = vcmp.lt.s32.totalorder %v2822, 1
    %vm2842 = vcmp.lt.s32.totalorder %v2822, 2
    %vm2843 = vcmp.lt.s32.totalorder %v2822, 3
    %vm2844 = vcmp.lt.s32.totalorder %v2822, 4
    %v2845 = vsel %vm2841, %v2825, %v2828
    %v2846 = vsel %vm2844, %v2834, 2102212464
    %v2847 = vsel %vm2843, %v2831, %v2846
    %v2848 = vsel %vm2842, %v2845, %v2847
    %v2849 = vsel %vm2841, %v2828, %v2831
    %v2850 = vsel %vm2844, %v2837, 920167782
    %v2851 = vsel %vm2843, %v2834, %v2850
    %v2852 = vsel %vm2842, %v2849, %v2851
    %v2853 = vsel %vm2841, %v2831, %v2834
    %v2854 = vsel %vm2844, %v2840, 1326507024
    %v2855 = vsel %vm2843, %v2837, %v2854
    %v2856 = vsel %vm2842, %v2853, %v2855
    %v2857 = vshll.u32 %v2817, 8
    %v2858 = vmul.u32.u64.compose %v2857, %v2856
    %v2859 = vextract.low.u32 %v2858
    %v2860 = vextract.high.u32 %v2858
    %v2861 = vmul.u32.u64.compose %v2857, %v2852
    %v2862 = vextract.low.u32 %v2861
    %v2863 = vextract.high.u32 %v2861
    %v2864 = vmul.u32 %v2857, %v2848
    %v2865 = vadd.s32 %v2860, %v2862
    %vm2866 = vc.u32 %v2860, %v2862
    %v2867 = vadd.s32 %v2863, 1
    %v2868 = vsel %vm2866, %v2867, %v2863
    %v2869 = vadd.s32 %v2864, %v2868
    %v2870 = vadd.s32 %v2869, 536870912
    %v2871 = vshrl.u32 %v2870, 30
    %v2872 = vshll.u32 %v2871, 30
    %v2873 = vsub.s32 %v2869, %v2872
    %vm2874 = vcmp.lt.s32.totalorder %v2873, 0
    %v2875 = vsub.s32 0, %v2873
    %v2876 = vsel %vm2874, %v2875, %v2873
    %v2877 = vclz %v2876
    %v2878 = vsub.s32 %v2877, 2
    %vm2879 = vcmp.gt.s32.totalorder 0, %v2878
    %v2880 = vsel %vm2879, 0, %v2878
    %v2881 = vsub.s32 32, %v2880
    %v2882 = vshll.u32 %v2873, %v2880
    %v2883 = vshrl.u32 %v2865, %v2881
    %v2884 = vor.u32 %v2882, %v2883
    %v2885 = vsub.s32 4294967266, %v2880
    %v2886 = vadd.s32 %v2885, 127
    %v2887 = vshll.u32 %v2886, 23
    %v2888 = vor.u32 4788187, %v2887
    %v2889 = vand.u32 2147483647, %v2888
    %v2891 = vcvt.s32.f32 %v2884
    %v2892 = vmul.f32 %v2891, %v2889
    %v2893 = vxor.u32 %v2892, 2147483648
    %v2894 = vsel %vm2811, %v2893, %v2892
    %v2895 = vsub.s32 4, %v2871
    %v2896 = vsel %vm2811, %v2895, %v2871
    %v2897 = vsel %vm2810, %v614, %v2894
    %v2898 = vsel %vm2810, 0, %v2896
    %v2899 = vcosq.f32.pop %v2897
    %v2900 = vsinq.f32.pop %v2897
    %vm2901 = vweird.f32 %v614
    %v2902 = vadd.s32 %v2898, 3
    %v2903 = vand.u32 %v2902, 3
    %vm2904 = vcmp.lt.s32.totalorder %v2903, 2
    %vm2905 = vcmp.eq.s32.totalorder %v2903, 0
    %v2906 = vxor.u32 %v2900, 2147483648
    %v2907 = vsel %vm2905, %v2899, %v2906
    %vm2908 = vcmp.eq.s32.totalorder %v2903, 2
    %v2909 = vxor.u32 %v2899, 2147483648
    %v2910 = vsel %vm2908, %v2909, %v2900
    %v2911 = vsel %vm2904, %v2907, %v2910
    %v2912 = vsel %vm2901, nan, %v2911
    %v2913 = vand.u32 2147483647, %v615
    %vm2914 = vcmp.le.f32.partialorder %v2913, 0.7853982
    %vm2915 = vcmp.lt.s32.totalorder %v615, 0
    %v2916 = vand.u32 %v615, 2139095040
    %v2917 = vshrl.u32 %v2916, 23
    %v2918 = vsub.s32 %v2917, 127
    %v2919 = vand.u32 2147483647, %v615
    %v2920 = vand.u32 %v2919, 8388607
    %v2921 = vor.u32 %v2920, 8388608
    %v2922 = vsub.s32 0, %v2921
    %v2923 = vadd.s32 %v2918, 1
    %vm2924 = vcmp.gt.s32.totalorder %v2923, 0
    %v2925 = vsel %vm2924, %v2923, 0
    %v2926 = vshrl.u32 %v2925, 5
    %v2927 = vand.u32 %v2925, 31
    %v2928 = vsub.s32 32, %v2927
    %v2929 = vshrl.u32 683565275, %v2928
    %v2930 = vshll.u32 683565275, %v2927
    %v2931 = vshrl.u32 2475754826, %v2928
    %v2932 = vor.u32 %v2930, %v2931
    %v2933 = vshll.u32 2475754826, %v2927
    %v2934 = vshrl.u32 2131351028, %v2928
    %v2935 = vor.u32 %v2933, %v2934
    %v2936 = vshll.u32 2131351028, %v2927
    %v2937 = vshrl.u32 2102212464, %v2928
    %v2938 = vor.u32 %v2936, %v2937
    %v2939 = vshll.u32 2102212464, %v2927
    %v2940 = vshrl.u32 920167782, %v2928
    %v2941 = vor.u32 %v2939, %v2940
    %v2942 = vshll.u32 920167782, %v2927
    %v2943 = vshrl.u32 1326507024, %v2928
    %v2944 = vor.u32 %v2942, %v2943
    %vm2945 = vcmp.lt.s32.totalorder %v2926, 1
    %vm2946 = vcmp.lt.s32.totalorder %v2926, 2
    %vm2947 = vcmp.lt.s32.totalorder %v2926, 3
    %vm2948 = vcmp.lt.s32.totalorder %v2926, 4
    %v2949 = vsel %vm2945, %v2929, %v2932
    %v2950 = vsel %vm2948, %v2938, 2102212464
    %v2951 = vsel %vm2947, %v2935, %v2950
    %v2952 = vsel %vm2946, %v2949, %v2951
    %v2953 = vsel %vm2945, %v2932, %v2935
    %v2954 = vsel %vm2948, %v2941, 920167782
    %v2955 = vsel %vm2947, %v2938, %v2954
    %v2956 = vsel %vm2946, %v2953, %v2955
    %v2957 = vsel %vm2945, %v2935, %v2938
    %v2958 = vsel %vm2948, %v2944, 1326507024
    %v2959 = vsel %vm2947, %v2941, %v2958
    %v2960 = vsel %vm2946, %v2957, %v2959
    %v2961 = vshll.u32 %v2921, 8
    %v2962 = vmul.u32.u64.compose %v2961, %v2960
    %v2963 = vextract.low.u32 %v2962
    %v2964 = vextract.high.u32 %v2962
    %v2965 = vmul.u32.u64.compose %v2961, %v2956
    %v2966 = vextract.low.u32 %v2965
    %v2967 = vextract.high.u32 %v2965
    %v2968 = vmul.u32 %v2961, %v2952
    %v2969 = vadd.s32 %v2964, %v2966
    %vm2970 = vc.u32 %v2964, %v2966
    %v2971 = vadd.s32 %v2967, 1
    %v2972 = vsel %vm2970, %v2971, %v2967
    %v2973 = vadd.s32 %v2968, %v2972
    %v2974 = vadd.s32 %v2973, 536870912
    %v2975 = vshrl.u32 %v2974, 30
    %v2976 = vshll.u32 %v2975, 30
    %v2977 = vsub.s32 %v2973, %v2976
    %vm2978 = vcmp.lt.s32.totalorder %v2977, 0
    %v2979 = vsub.s32 0, %v2977
    %v2980 = vsel %vm2978, %v2979, %v2977
    %v2981 = vclz %v2980
    %v2982 = vsub.s32 %v2981, 2
    %vm2983 = vcmp.gt.s32.totalorder 0, %v2982
    %v2984 = vsel %vm2983, 0, %v2982
    %v2985 = vsub.s32 32, %v2984
    %v2986 = vshll.u32 %v2977, %v2984
    %v2987 = vshrl.u32 %v2969, %v2985
    %v2988 = vor.u32 %v2986, %v2987
    %v2989 = vsub.s32 4294967266, %v2984
    %v2990 = vadd.s32 %v2989, 127
    %v2991 = vshll.u32 %v2990, 23
    %v2992 = vor.u32 4788187, %v2991
    %v2993 = vand.u32 2147483647, %v2992
    %v2995 = vcvt.s32.f32 %v2988
    %v2996 = vmul.f32 %v2995, %v2993
    %v2997 = vxor.u32 %v2996, 2147483648
    %v2998 = vsel %vm2915, %v2997, %v2996
    %v2999 = vsub.s32 4, %v2975
    %v3000 = vsel %vm2915, %v2999, %v2975
    %v3001 = vsel %vm2914, %v615, %v2998
    %v3002 = vsel %vm2914, 0, %v3000
    %v3003 = vcosq.f32.pop %v3001
    %v3004 = vsinq.f32.pop %v3001
    %vm3005 = vweird.f32 %v615
    %v3006 = vadd.s32 %v3002, 3
    %v3007 = vand.u32 %v3006, 3
    %vm3008 = vcmp.lt.s32.totalorder %v3007, 2
    %vm3009 = vcmp.eq.s32.totalorder %v3007, 0
    %v3010 = vxor.u32 %v3004, 2147483648
    %v3011 = vsel %vm3009, %v3003, %v3010
    %vm3012 = vcmp.eq.s32.totalorder %v3007, 2
    %v3013 = vxor.u32 %v3003, 2147483648
    %v3014 = vsel %vm3012, %v3013, %v3004
    %v3015 = vsel %vm3008, %v3011, %v3014
    %v3016 = vsel %vm3005, nan, %v3015
    %v3017 = vand.u32 2147483647, %v616
    %vm3018 = vcmp.le.f32.partialorder %v3017, 0.7853982
    %vm3019 = vcmp.lt.s32.totalorder %v616, 0
    %v3020 = vand.u32 %v616, 2139095040
    %v3021 = vshrl.u32 %v3020, 23
    %v3022 = vsub.s32 %v3021, 127
    %v3023 = vand.u32 2147483647, %v616
    %v3024 = vand.u32 %v3023, 8388607
    %v3025 = vor.u32 %v3024, 8388608
    %v3026 = vsub.s32 0, %v3025
    %v3027 = vadd.s32 %v3022, 1
    %vm3028 = vcmp.gt.s32.totalorder %v3027, 0
    %v3029 = vsel %vm3028, %v3027, 0
    %v3030 = vshrl.u32 %v3029, 5
    %v3031 = vand.u32 %v3029, 31
    %v3032 = vsub.s32 32, %v3031
    %v3033 = vshrl.u32 683565275, %v3032
    %v3034 = vshll.u32 683565275, %v3031
    %v3035 = vshrl.u32 2475754826, %v3032
    %v3036 = vor.u32 %v3034, %v3035
    %v3037 = vshll.u32 2475754826, %v3031
    %v3038 = vshrl.u32 2131351028, %v3032
    %v3039 = vor.u32 %v3037, %v3038
    %v3040 = vshll.u32 2131351028, %v3031
    %v3041 = vshrl.u32 2102212464, %v3032
    %v3042 = vor.u32 %v3040, %v3041
    %v3043 = vshll.u32 2102212464, %v3031
    %v3044 = vshrl.u32 920167782, %v3032
    %v3045 = vor.u32 %v3043, %v3044
    %v3046 = vshll.u32 920167782, %v3031
    %v3047 = vshrl.u32 1326507024, %v3032
    %v3048 = vor.u32 %v3046, %v3047
    %vm3049 = vcmp.lt.s32.totalorder %v3030, 1
    %vm3050 = vcmp.lt.s32.totalorder %v3030, 2
    %vm3051 = vcmp.lt.s32.totalorder %v3030, 3
    %vm3052 = vcmp.lt.s32.totalorder %v3030, 4
    %v3053 = vsel %vm3049, %v3033, %v3036
    %v3054 = vsel %vm3052, %v3042, 2102212464
    %v3055 = vsel %vm3051, %v3039, %v3054
    %v3056 = vsel %vm3050, %v3053, %v3055
    %v3057 = vsel %vm3049, %v3036, %v3039
    %v3058 = vsel %vm3052, %v3045, 920167782
    %v3059 = vsel %vm3051, %v3042, %v3058
    %v3060 = vsel %vm3050, %v3057, %v3059
    %v3061 = vsel %vm3049, %v3039, %v3042
    %v3062 = vsel %vm3052, %v3048, 1326507024
    %v3063 = vsel %vm3051, %v3045, %v3062
    %v3064 = vsel %vm3050, %v3061, %v3063
    %v3065 = vshll.u32 %v3025, 8
    %v3066 = vmul.u32.u64.compose %v3065, %v3064
    %v3067 = vextract.low.u32 %v3066
    %v3068 = vextract.high.u32 %v3066
    %v3069 = vmul.u32.u64.compose %v3065, %v3060
    %v3070 = vextract.low.u32 %v3069
    %v3071 = vextract.high.u32 %v3069
    %v3072 = vmul.u32 %v3065, %v3056
    %v3073 = vadd.s32 %v3068, %v3070
    %vm3074 = vc.u32 %v3068, %v3070
    %v3075 = vadd.s32 %v3071, 1
    %v3076 = vsel %vm3074, %v3075, %v3071
    %v3077 = vadd.s32 %v3072, %v3076
    %v3078 = vadd.s32 %v3077, 536870912
    %v3079 = vshrl.u32 %v3078, 30
    %v3080 = vshll.u32 %v3079, 30
    %v3081 = vsub.s32 %v3077, %v3080
    %vm3082 = vcmp.lt.s32.totalorder %v3081, 0
    %v3083 = vsub.s32 0, %v3081
    %v3084 = vsel %vm3082, %v3083, %v3081
    %v3085 = vclz %v3084
    %v3086 = vsub.s32 %v3085, 2
    %vm3087 = vcmp.gt.s32.totalorder 0, %v3086
    %v3088 = vsel %vm3087, 0, %v3086
    %v3089 = vsub.s32 32, %v3088
    %v3090 = vshll.u32 %v3081, %v3088
    %v3091 = vshrl.u32 %v3073, %v3089
    %v3092 = vor.u32 %v3090, %v3091
    %v3093 = vsub.s32 4294967266, %v3088
    %v3094 = vadd.s32 %v3093, 127
    %v3095 = vshll.u32 %v3094, 23
    %v3096 = vor.u32 4788187, %v3095
    %v3097 = vand.u32 2147483647, %v3096
    %v3099 = vcvt.s32.f32 %v3092
    %v3100 = vmul.f32 %v3099, %v3097
    %v3101 = vxor.u32 %v3100, 2147483648
    %v3102 = vsel %vm3019, %v3101, %v3100
    %v3103 = vsub.s32 4, %v3079
    %v3104 = vsel %vm3019, %v3103, %v3079
    %v3105 = vsel %vm3018, %v616, %v3102
    %v3106 = vsel %vm3018, 0, %v3104
    %v3107 = vcosq.f32.pop %v3105
    %v3108 = vsinq.f32.pop %v3105
    %vm3109 = vweird.f32 %v616
    %v3110 = vadd.s32 %v3106, 3
    %v3111 = vand.u32 %v3110, 3
    %vm3112 = vcmp.lt.s32.totalorder %v3111, 2
    %vm3113 = vcmp.eq.s32.totalorder %v3111, 0
    %v3114 = vxor.u32 %v3108, 2147483648
    %v3115 = vsel %vm3113, %v3107, %v3114
    %vm3116 = vcmp.eq.s32.totalorder %v3111, 2
    %v3117 = vxor.u32 %v3107, 2147483648
    %v3118 = vsel %vm3116, %v3117, %v3108
    %v3119 = vsel %vm3112, %v3115, %v3118
    %v3120 = vsel %vm3109, nan, %v3119
    %v3121 = vand.u32 2147483647, %v617
    %vm3122 = vcmp.le.f32.partialorder %v3121, 0.7853982
    %vm3123 = vcmp.lt.s32.totalorder %v617, 0
    %v3124 = vand.u32 %v617, 2139095040
    %v3125 = vshrl.u32 %v3124, 23
    %v3126 = vsub.s32 %v3125, 127
    %v3127 = vand.u32 2147483647, %v617
    %v3128 = vand.u32 %v3127, 8388607
    %v3129 = vor.u32 %v3128, 8388608
    %v3130 = vsub.s32 0, %v3129
    %v3131 = vadd.s32 %v3126, 1
    %vm3132 = vcmp.gt.s32.totalorder %v3131, 0
    %v3133 = vsel %vm3132, %v3131, 0
    %v3134 = vshrl.u32 %v3133, 5
    %v3135 = vand.u32 %v3133, 31
    %v3136 = vsub.s32 32, %v3135
    %v3137 = vshrl.u32 683565275, %v3136
    %v3138 = vshll.u32 683565275, %v3135
    %v3139 = vshrl.u32 2475754826, %v3136
    %v3140 = vor.u32 %v3138, %v3139
    %v3141 = vshll.u32 2475754826, %v3135
    %v3142 = vshrl.u32 2131351028, %v3136
    %v3143 = vor.u32 %v3141, %v3142
    %v3144 = vshll.u32 2131351028, %v3135
    %v3145 = vshrl.u32 2102212464, %v3136
    %v3146 = vor.u32 %v3144, %v3145
    %v3147 = vshll.u32 2102212464, %v3135
    %v3148 = vshrl.u32 920167782, %v3136
    %v3149 = vor.u32 %v3147, %v3148
    %v3150 = vshll.u32 920167782, %v3135
    %v3151 = vshrl.u32 1326507024, %v3136
    %v3152 = vor.u32 %v3150, %v3151
    %vm3153 = vcmp.lt.s32.totalorder %v3134, 1
    %vm3154 = vcmp.lt.s32.totalorder %v3134, 2
    %vm3155 = vcmp.lt.s32.totalorder %v3134, 3
    %vm3156 = vcmp.lt.s32.totalorder %v3134, 4
    %v3157 = vsel %vm3153, %v3137, %v3140
    %v3158 = vsel %vm3156, %v3146, 2102212464
    %v3159 = vsel %vm3155, %v3143, %v3158
    %v3160 = vsel %vm3154, %v3157, %v3159
    %v3161 = vsel %vm3153, %v3140, %v3143
    %v3162 = vsel %vm3156, %v3149, 920167782
    %v3163 = vsel %vm3155, %v3146, %v3162
    %v3164 = vsel %vm3154, %v3161, %v3163
    %v3165 = vsel %vm3153, %v3143, %v3146
    %v3166 = vsel %vm3156, %v3152, 1326507024
    %v3167 = vsel %vm3155, %v3149, %v3166
    %v3168 = vsel %vm3154, %v3165, %v3167
    %v3169 = vshll.u32 %v3129, 8
    %v3170 = vmul.u32.u64.compose %v3169, %v3168
    %v3171 = vextract.low.u32 %v3170
    %v3172 = vextract.high.u32 %v3170
    %v3173 = vmul.u32.u64.compose %v3169, %v3164
    %v3174 = vextract.low.u32 %v3173
    %v3175 = vextract.high.u32 %v3173
    %v3176 = vmul.u32 %v3169, %v3160
    %v3177 = vadd.s32 %v3172, %v3174
    %vm3178 = vc.u32 %v3172, %v3174
    %v3179 = vadd.s32 %v3175, 1
    %v3180 = vsel %vm3178, %v3179, %v3175
    %v3181 = vadd.s32 %v3176, %v3180
    %v3182 = vadd.s32 %v3181, 536870912
    %v3183 = vshrl.u32 %v3182, 30
    %v3184 = vshll.u32 %v3183, 30
    %v3185 = vsub.s32 %v3181, %v3184
    %vm3186 = vcmp.lt.s32.totalorder %v3185, 0
    %v3187 = vsub.s32 0, %v3185
    %v3188 = vsel %vm3186, %v3187, %v3185
    %v3189 = vclz %v3188
    %v3190 = vsub.s32 %v3189, 2
    %vm3191 = vcmp.gt.s32.totalorder 0, %v3190
    %v3192 = vsel %vm3191, 0, %v3190
    %v3193 = vsub.s32 32, %v3192
    %v3194 = vshll.u32 %v3185, %v3192
    %v3195 = vshrl.u32 %v3177, %v3193
    %v3196 = vor.u32 %v3194, %v3195
    %v3197 = vsub.s32 4294967266, %v3192
    %v3198 = vadd.s32 %v3197, 127
    %v3199 = vshll.u32 %v3198, 23
    %v3200 = vor.u32 4788187, %v3199
    %v3201 = vand.u32 2147483647, %v3200
    %v3203 = vcvt.s32.f32 %v3196
    %v3204 = vmul.f32 %v3203, %v3201
    %v3205 = vxor.u32 %v3204, 2147483648
    %v3206 = vsel %vm3123, %v3205, %v3204
    %v3207 = vsub.s32 4, %v3183
    %v3208 = vsel %vm3123, %v3207, %v3183
    %v3209 = vsel %vm3122, %v617, %v3206
    %v3210 = vsel %vm3122, 0, %v3208
    %v3211 = vcosq.f32.pop %v3209
    %v3212 = vsinq.f32.pop %v3209
    %vm3213 = vweird.f32 %v617
    %v3214 = vadd.s32 %v3210, 3
    %v3215 = vand.u32 %v3214, 3
    %vm3216 = vcmp.lt.s32.totalorder %v3215, 2
    %vm3217 = vcmp.eq.s32.totalorder %v3215, 0
    %v3218 = vxor.u32 %v3212, 2147483648
    %v3219 = vsel %vm3217, %v3211, %v3218
    %vm3220 = vcmp.eq.s32.totalorder %v3215, 2
    %v3221 = vxor.u32 %v3211, 2147483648
    %v3222 = vsel %vm3220, %v3221, %v3212
    %v3223 = vsel %vm3216, %v3219, %v3222
    %v3224 = vsel %vm3213, nan, %v3223
    %v3225 = vand.u32 2147483647, %v618
    %vm3226 = vcmp.le.f32.partialorder %v3225, 0.7853982
    %vm3227 = vcmp.lt.s32.totalorder %v618, 0
    %v3228 = vand.u32 %v618, 2139095040
    %v3229 = vshrl.u32 %v3228, 23
    %v3230 = vsub.s32 %v3229, 127
    %v3231 = vand.u32 2147483647, %v618
    %v3232 = vand.u32 %v3231, 8388607
    %v3233 = vor.u32 %v3232, 8388608
    %v3234 = vsub.s32 0, %v3233
    %v3235 = vadd.s32 %v3230, 1
    %vm3236 = vcmp.gt.s32.totalorder %v3235, 0
    %v3237 = vsel %vm3236, %v3235, 0
    %v3238 = vshrl.u32 %v3237, 5
    %v3239 = vand.u32 %v3237, 31
    %v3240 = vsub.s32 32, %v3239
    %v3241 = vshrl.u32 683565275, %v3240
    %v3242 = vshll.u32 683565275, %v3239
    %v3243 = vshrl.u32 2475754826, %v3240
    %v3244 = vor.u32 %v3242, %v3243
    %v3245 = vshll.u32 2475754826, %v3239
    %v3246 = vshrl.u32 2131351028, %v3240
    %v3247 = vor.u32 %v3245, %v3246
    %v3248 = vshll.u32 2131351028, %v3239
    %v3249 = vshrl.u32 2102212464, %v3240
    %v3250 = vor.u32 %v3248, %v3249
    %v3251 = vshll.u32 2102212464, %v3239
    %v3252 = vshrl.u32 920167782, %v3240
    %v3253 = vor.u32 %v3251, %v3252
    %v3254 = vshll.u32 920167782, %v3239
    %v3255 = vshrl.u32 1326507024, %v3240
    %v3256 = vor.u32 %v3254, %v3255
    %vm3257 = vcmp.lt.s32.totalorder %v3238, 1
    %vm3258 = vcmp.lt.s32.totalorder %v3238, 2
    %vm3259 = vcmp.lt.s32.totalorder %v3238, 3
    %vm3260 = vcmp.lt.s32.totalorder %v3238, 4
    %v3261 = vsel %vm3257, %v3241, %v3244
    %v3262 = vsel %vm3260, %v3250, 2102212464
    %v3263 = vsel %vm3259, %v3247, %v3262
    %v3264 = vsel %vm3258, %v3261, %v3263
    %v3265 = vsel %vm3257, %v3244, %v3247
    %v3266 = vsel %vm3260, %v3253, 920167782
    %v3267 = vsel %vm3259, %v3250, %v3266
    %v3268 = vsel %vm3258, %v3265, %v3267
    %v3269 = vsel %vm3257, %v3247, %v3250
    %v3270 = vsel %vm3260, %v3256, 1326507024
    %v3271 = vsel %vm3259, %v3253, %v3270
    %v3272 = vsel %vm3258, %v3269, %v3271
    %v3273 = vshll.u32 %v3233, 8
    %v3274 = vmul.u32.u64.compose %v3273, %v3272
    %v3275 = vextract.low.u32 %v3274
    %v3276 = vextract.high.u32 %v3274
    %v3277 = vmul.u32.u64.compose %v3273, %v3268
    %v3278 = vextract.low.u32 %v3277
    %v3279 = vextract.high.u32 %v3277
    %v3280 = vmul.u32 %v3273, %v3264
    %v3281 = vadd.s32 %v3276, %v3278
    %vm3282 = vc.u32 %v3276, %v3278
    %v3283 = vadd.s32 %v3279, 1
    %v3284 = vsel %vm3282, %v3283, %v3279
    %v3285 = vadd.s32 %v3280, %v3284
    %v3286 = vadd.s32 %v3285, 536870912
    %v3287 = vshrl.u32 %v3286, 30
    %v3288 = vshll.u32 %v3287, 30
    %v3289 = vsub.s32 %v3285, %v3288
    %vm3290 = vcmp.lt.s32.totalorder %v3289, 0
    %v3291 = vsub.s32 0, %v3289
    %v3292 = vsel %vm3290, %v3291, %v3289
    %v3293 = vclz %v3292
    %v3294 = vsub.s32 %v3293, 2
    %vm3295 = vcmp.gt.s32.totalorder 0, %v3294
    %v3296 = vsel %vm3295, 0, %v3294
    %v3297 = vsub.s32 32, %v3296
    %v3298 = vshll.u32 %v3289, %v3296
    %v3299 = vshrl.u32 %v3281, %v3297
    %v3300 = vor.u32 %v3298, %v3299
    %v3301 = vsub.s32 4294967266, %v3296
    %v3302 = vadd.s32 %v3301, 127
    %v3303 = vshll.u32 %v3302, 23
    %v3304 = vor.u32 4788187, %v3303
    %v3305 = vand.u32 2147483647, %v3304
    %v3307 = vcvt.s32.f32 %v3300
    %v3308 = vmul.f32 %v3307, %v3305
    %v3309 = vxor.u32 %v3308, 2147483648
    %v3310 = vsel %vm3227, %v3309, %v3308
    %v3311 = vsub.s32 4, %v3287
    %v3312 = vsel %vm3227, %v3311, %v3287
    %v3313 = vsel %vm3226, %v618, %v3310
    %v3314 = vsel %vm3226, 0, %v3312
    %v3315 = vcosq.f32.pop %v3313
    %v3316 = vsinq.f32.pop %v3313
    %vm3317 = vweird.f32 %v618
    %v3318 = vadd.s32 %v3314, 3
    %v3319 = vand.u32 %v3318, 3
    %vm3320 = vcmp.lt.s32.totalorder %v3319, 2
    %vm3321 = vcmp.eq.s32.totalorder %v3319, 0
    %v3322 = vxor.u32 %v3316, 2147483648
    %v3323 = vsel %vm3321, %v3315, %v3322
    %vm3324 = vcmp.eq.s32.totalorder %v3319, 2
    %v3325 = vxor.u32 %v3315, 2147483648
    %v3326 = vsel %vm3324, %v3325, %v3316
    %v3327 = vsel %vm3320, %v3323, %v3326
    %v3328 = vsel %vm3317, nan, %v3327
    %v3329 = vand.u32 2147483647, %v619
    %vm3330 = vcmp.le.f32.partialorder %v3329, 0.7853982
    %vm3331 = vcmp.lt.s32.totalorder %v619, 0
    %v3332 = vand.u32 %v619, 2139095040
    %v3333 = vshrl.u32 %v3332, 23
    %v3334 = vsub.s32 %v3333, 127
    %v3335 = vand.u32 2147483647, %v619
    %v3336 = vand.u32 %v3335, 8388607
    %v3337 = vor.u32 %v3336, 8388608
    %v3338 = vsub.s32 0, %v3337
    %v3339 = vadd.s32 %v3334, 1
    %vm3340 = vcmp.gt.s32.totalorder %v3339, 0
    %v3341 = vsel %vm3340, %v3339, 0
    %v3342 = vshrl.u32 %v3341, 5
    %v3343 = vand.u32 %v3341, 31
    %v3344 = vsub.s32 32, %v3343
    %v3345 = vshrl.u32 683565275, %v3344
    %v3346 = vshll.u32 683565275, %v3343
    %v3347 = vshrl.u32 2475754826, %v3344
    %v3348 = vor.u32 %v3346, %v3347
    %v3349 = vshll.u32 2475754826, %v3343
    %v3350 = vshrl.u32 2131351028, %v3344
    %v3351 = vor.u32 %v3349, %v3350
    %v3352 = vshll.u32 2131351028, %v3343
    %v3353 = vshrl.u32 2102212464, %v3344
    %v3354 = vor.u32 %v3352, %v3353
    %v3355 = vshll.u32 2102212464, %v3343
    %v3356 = vshrl.u32 920167782, %v3344
    %v3357 = vor.u32 %v3355, %v3356
    %v3358 = vshll.u32 920167782, %v3343
    %v3359 = vshrl.u32 1326507024, %v3344
    %v3360 = vor.u32 %v3358, %v3359
    %vm3361 = vcmp.lt.s32.totalorder %v3342, 1
    %vm3362 = vcmp.lt.s32.totalorder %v3342, 2
    %vm3363 = vcmp.lt.s32.totalorder %v3342, 3
    %vm3364 = vcmp.lt.s32.totalorder %v3342, 4
    %v3365 = vsel %vm3361, %v3345, %v3348
    %v3366 = vsel %vm3364, %v3354, 2102212464
    %v3367 = vsel %vm3363, %v3351, %v3366
    %v3368 = vsel %vm3362, %v3365, %v3367
    %v3369 = vsel %vm3361, %v3348, %v3351
    %v3370 = vsel %vm3364, %v3357, 920167782
    %v3371 = vsel %vm3363, %v3354, %v3370
    %v3372 = vsel %vm3362, %v3369, %v3371
    %v3373 = vsel %vm3361, %v3351, %v3354
    %v3374 = vsel %vm3364, %v3360, 1326507024
    %v3375 = vsel %vm3363, %v3357, %v3374
    %v3376 = vsel %vm3362, %v3373, %v3375
    %v3377 = vshll.u32 %v3337, 8
    %v3378 = vmul.u32.u64.compose %v3377, %v3376
    %v3379 = vextract.low.u32 %v3378
    %v3380 = vextract.high.u32 %v3378
    %v3381 = vmul.u32.u64.compose %v3377, %v3372
    %v3382 = vextract.low.u32 %v3381
    %v3383 = vextract.high.u32 %v3381
    %v3384 = vmul.u32 %v3377, %v3368
    %v3385 = vadd.s32 %v3380, %v3382
    %vm3386 = vc.u32 %v3380, %v3382
    %v3387 = vadd.s32 %v3383, 1
    %v3388 = vsel %vm3386, %v3387, %v3383
    %v3389 = vadd.s32 %v3384, %v3388
    %v3390 = vadd.s32 %v3389, 536870912
    %v3391 = vshrl.u32 %v3390, 30
    %v3392 = vshll.u32 %v3391, 30
    %v3393 = vsub.s32 %v3389, %v3392
    %vm3394 = vcmp.lt.s32.totalorder %v3393, 0
    %v3395 = vsub.s32 0, %v3393
    %v3396 = vsel %vm3394, %v3395, %v3393
    %v3397 = vclz %v3396
    %v3398 = vsub.s32 %v3397, 2
    %vm3399 = vcmp.gt.s32.totalorder 0, %v3398
    %v3400 = vsel %vm3399, 0, %v3398
    %v3401 = vsub.s32 32, %v3400
    %v3402 = vshll.u32 %v3393, %v3400
    %v3403 = vshrl.u32 %v3385, %v3401
    %v3404 = vor.u32 %v3402, %v3403
    %v3405 = vsub.s32 4294967266, %v3400
    %v3406 = vadd.s32 %v3405, 127
    %v3407 = vshll.u32 %v3406, 23
    %v3408 = vor.u32 4788187, %v3407
    %v3409 = vand.u32 2147483647, %v3408
    %v3411 = vcvt.s32.f32 %v3404
    %v3412 = vmul.f32 %v3411, %v3409
    %v3413 = vxor.u32 %v3412, 2147483648
    %v3414 = vsel %vm3331, %v3413, %v3412
    %v3415 = vsub.s32 4, %v3391
    %v3416 = vsel %vm3331, %v3415, %v3391
    %v3417 = vsel %vm3330, %v619, %v3414
    %v3418 = vsel %vm3330, 0, %v3416
    %v3419 = vcosq.f32.pop %v3417
    %v3420 = vsinq.f32.pop %v3417
    %vm3421 = vweird.f32 %v619
    %v3422 = vadd.s32 %v3418, 3
    %v3423 = vand.u32 %v3422, 3
    %vm3424 = vcmp.lt.s32.totalorder %v3423, 2
    %vm3425 = vcmp.eq.s32.totalorder %v3423, 0
    %v3426 = vxor.u32 %v3420, 2147483648
    %v3427 = vsel %vm3425, %v3419, %v3426
    %vm3428 = vcmp.eq.s32.totalorder %v3423, 2
    %v3429 = vxor.u32 %v3419, 2147483648
    %v3430 = vsel %vm3428, %v3429, %v3420
    %v3431 = vsel %vm3424, %v3427, %v3430
    %v3432 = vsel %vm3421, nan, %v3431
    %v3433 = vand.u32 2147483647, %v620
    %vm3434 = vcmp.le.f32.partialorder %v3433, 0.7853982
    %vm3435 = vcmp.lt.s32.totalorder %v620, 0
    %v3436 = vand.u32 %v620, 2139095040
    %v3437 = vshrl.u32 %v3436, 23
    %v3438 = vsub.s32 %v3437, 127
    %v3439 = vand.u32 2147483647, %v620
    %v3440 = vand.u32 %v3439, 8388607
    %v3441 = vor.u32 %v3440, 8388608
    %v3442 = vsub.s32 0, %v3441
    %v3443 = vadd.s32 %v3438, 1
    %vm3444 = vcmp.gt.s32.totalorder %v3443, 0
    %v3445 = vsel %vm3444, %v3443, 0
    %v3446 = vshrl.u32 %v3445, 5
    %v3447 = vand.u32 %v3445, 31
    %v3448 = vsub.s32 32, %v3447
    %v3449 = vshrl.u32 683565275, %v3448
    %v3450 = vshll.u32 683565275, %v3447
    %v3451 = vshrl.u32 2475754826, %v3448
    %v3452 = vor.u32 %v3450, %v3451
    %v3453 = vshll.u32 2475754826, %v3447
    %v3454 = vshrl.u32 2131351028, %v3448
    %v3455 = vor.u32 %v3453, %v3454
    %v3456 = vshll.u32 2131351028, %v3447
    %v3457 = vshrl.u32 2102212464, %v3448
    %v3458 = vor.u32 %v3456, %v3457
    %v3459 = vshll.u32 2102212464, %v3447
    %v3460 = vshrl.u32 920167782, %v3448
    %v3461 = vor.u32 %v3459, %v3460
    %v3462 = vshll.u32 920167782, %v3447
    %v3463 = vshrl.u32 1326507024, %v3448
    %v3464 = vor.u32 %v3462, %v3463
    %vm3465 = vcmp.lt.s32.totalorder %v3446, 1
    %vm3466 = vcmp.lt.s32.totalorder %v3446, 2
    %vm3467 = vcmp.lt.s32.totalorder %v3446, 3
    %vm3468 = vcmp.lt.s32.totalorder %v3446, 4
    %v3469 = vsel %vm3465, %v3449, %v3452
    %v3470 = vsel %vm3468, %v3458, 2102212464
    %v3471 = vsel %vm3467, %v3455, %v3470
    %v3472 = vsel %vm3466, %v3469, %v3471
    %v3473 = vsel %vm3465, %v3452, %v3455
    %v3474 = vsel %vm3468, %v3461, 920167782
    %v3475 = vsel %vm3467, %v3458, %v3474
    %v3476 = vsel %vm3466, %v3473, %v3475
    %v3477 = vsel %vm3465, %v3455, %v3458
    %v3478 = vsel %vm3468, %v3464, 1326507024
    %v3479 = vsel %vm3467, %v3461, %v3478
    %v3480 = vsel %vm3466, %v3477, %v3479
    %v3481 = vshll.u32 %v3441, 8
    %v3482 = vmul.u32.u64.compose %v3481, %v3480
    %v3483 = vextract.low.u32 %v3482
    %v3484 = vextract.high.u32 %v3482
    %v3485 = vmul.u32.u64.compose %v3481, %v3476
    %v3486 = vextract.low.u32 %v3485
    %v3487 = vextract.high.u32 %v3485
    %v3488 = vmul.u32 %v3481, %v3472
    %v3489 = vadd.s32 %v3484, %v3486
    %vm3490 = vc.u32 %v3484, %v3486
    %v3491 = vadd.s32 %v3487, 1
    %v3492 = vsel %vm3490, %v3491, %v3487
    %v3493 = vadd.s32 %v3488, %v3492
    %v3494 = vadd.s32 %v3493, 536870912
    %v3495 = vshrl.u32 %v3494, 30
    %v3496 = vshll.u32 %v3495, 30
    %v3497 = vsub.s32 %v3493, %v3496
    %vm3498 = vcmp.lt.s32.totalorder %v3497, 0
    %v3499 = vsub.s32 0, %v3497
    %v3500 = vsel %vm3498, %v3499, %v3497
    %v3501 = vclz %v3500
    %v3502 = vsub.s32 %v3501, 2
    %vm3503 = vcmp.gt.s32.totalorder 0, %v3502
    %v3504 = vsel %vm3503, 0, %v3502
    %v3505 = vsub.s32 32, %v3504
    %v3506 = vshll.u32 %v3497, %v3504
    %v3507 = vshrl.u32 %v3489, %v3505
    %v3508 = vor.u32 %v3506, %v3507
    %v3509 = vsub.s32 4294967266, %v3504
    %v3510 = vadd.s32 %v3509, 127
    %v3511 = vshll.u32 %v3510, 23
    %v3512 = vor.u32 4788187, %v3511
    %v3513 = vand.u32 2147483647, %v3512
    %v3515 = vcvt.s32.f32 %v3508
    %v3516 = vmul.f32 %v3515, %v3513
    %v3517 = vxor.u32 %v3516, 2147483648
    %v3518 = vsel %vm3435, %v3517, %v3516
    %v3519 = vsub.s32 4, %v3495
    %v3520 = vsel %vm3435, %v3519, %v3495
    %v3521 = vsel %vm3434, %v620, %v3518
    %v3522 = vsel %vm3434, 0, %v3520
    %v3523 = vcosq.f32.pop %v3521
    %v3524 = vsinq.f32.pop %v3521
    %vm3525 = vweird.f32 %v620
    %v3526 = vadd.s32 %v3522, 3
    %v3527 = vand.u32 %v3526, 3
    %vm3528 = vcmp.lt.s32.totalorder %v3527, 2
    %vm3529 = vcmp.eq.s32.totalorder %v3527, 0
    %v3530 = vxor.u32 %v3524, 2147483648
    %v3531 = vsel %vm3529, %v3523, %v3530
    %vm3532 = vcmp.eq.s32.totalorder %v3527, 2
    %v3533 = vxor.u32 %v3523, 2147483648
    %v3534 = vsel %vm3532, %v3533, %v3524
    %v3535 = vsel %vm3528, %v3531, %v3534
    %v3536 = vsel %vm3525, nan, %v3535
    %v3537 = vand.u32 2147483647, %v621
    %vm3538 = vcmp.le.f32.partialorder %v3537, 0.7853982
    %vm3539 = vcmp.lt.s32.totalorder %v621, 0
    %v3540 = vand.u32 %v621, 2139095040
    %v3541 = vshrl.u32 %v3540, 23
    %v3542 = vsub.s32 %v3541, 127
    %v3543 = vand.u32 2147483647, %v621
    %v3544 = vand.u32 %v3543, 8388607
    %v3545 = vor.u32 %v3544, 8388608
    %v3546 = vsub.s32 0, %v3545
    %v3547 = vadd.s32 %v3542, 1
    %vm3548 = vcmp.gt.s32.totalorder %v3547, 0
    %v3549 = vsel %vm3548, %v3547, 0
    %v3550 = vshrl.u32 %v3549, 5
    %v3551 = vand.u32 %v3549, 31
    %v3552 = vsub.s32 32, %v3551
    %v3553 = vshrl.u32 683565275, %v3552
    %v3554 = vshll.u32 683565275, %v3551
    %v3555 = vshrl.u32 2475754826, %v3552
    %v3556 = vor.u32 %v3554, %v3555
    %v3557 = vshll.u32 2475754826, %v3551
    %v3558 = vshrl.u32 2131351028, %v3552
    %v3559 = vor.u32 %v3557, %v3558
    %v3560 = vshll.u32 2131351028, %v3551
    %v3561 = vshrl.u32 2102212464, %v3552
    %v3562 = vor.u32 %v3560, %v3561
    %v3563 = vshll.u32 2102212464, %v3551
    %v3564 = vshrl.u32 920167782, %v3552
    %v3565 = vor.u32 %v3563, %v3564
    %v3566 = vshll.u32 920167782, %v3551
    %v3567 = vshrl.u32 1326507024, %v3552
    %v3568 = vor.u32 %v3566, %v3567
    %vm3569 = vcmp.lt.s32.totalorder %v3550, 1
    %vm3570 = vcmp.lt.s32.totalorder %v3550, 2
    %vm3571 = vcmp.lt.s32.totalorder %v3550, 3
    %vm3572 = vcmp.lt.s32.totalorder %v3550, 4
    %v3573 = vsel %vm3569, %v3553, %v3556
    %v3574 = vsel %vm3572, %v3562, 2102212464
    %v3575 = vsel %vm3571, %v3559, %v3574
    %v3576 = vsel %vm3570, %v3573, %v3575
    %v3577 = vsel %vm3569, %v3556, %v3559
    %v3578 = vsel %vm3572, %v3565, 920167782
    %v3579 = vsel %vm3571, %v3562, %v3578
    %v3580 = vsel %vm3570, %v3577, %v3579
    %v3581 = vsel %vm3569, %v3559, %v3562
    %v3582 = vsel %vm3572, %v3568, 1326507024
    %v3583 = vsel %vm3571, %v3565, %v3582
    %v3584 = vsel %vm3570, %v3581, %v3583
    %v3585 = vshll.u32 %v3545, 8
    %v3586 = vmul.u32.u64.compose %v3585, %v3584
    %v3587 = vextract.low.u32 %v3586
    %v3588 = vextract.high.u32 %v3586
    %v3589 = vmul.u32.u64.compose %v3585, %v3580
    %v3590 = vextract.low.u32 %v3589
    %v3591 = vextract.high.u32 %v3589
    %v3592 = vmul.u32 %v3585, %v3576
    %v3593 = vadd.s32 %v3588, %v3590
    %vm3594 = vc.u32 %v3588, %v3590
    %v3595 = vadd.s32 %v3591, 1
    %v3596 = vsel %vm3594, %v3595, %v3591
    %v3597 = vadd.s32 %v3592, %v3596
    %v3598 = vadd.s32 %v3597, 536870912
    %v3599 = vshrl.u32 %v3598, 30
    %v3600 = vshll.u32 %v3599, 30
    %v3601 = vsub.s32 %v3597, %v3600
    %vm3602 = vcmp.lt.s32.totalorder %v3601, 0
    %v3603 = vsub.s32 0, %v3601
    %v3604 = vsel %vm3602, %v3603, %v3601
    %v3605 = vclz %v3604
    %v3606 = vsub.s32 %v3605, 2
    %vm3607 = vcmp.gt.s32.totalorder 0, %v3606
    %v3608 = vsel %vm3607, 0, %v3606
    %v3609 = vsub.s32 32, %v3608
    %v3610 = vshll.u32 %v3601, %v3608
    %v3611 = vshrl.u32 %v3593, %v3609
    %v3612 = vor.u32 %v3610, %v3611
    %v3613 = vsub.s32 4294967266, %v3608
    %v3614 = vadd.s32 %v3613, 127
    %v3615 = vshll.u32 %v3614, 23
    %v3616 = vor.u32 4788187, %v3615
    %v3617 = vand.u32 2147483647, %v3616
    %v3619 = vcvt.s32.f32 %v3612
    %v3620 = vmul.f32 %v3619, %v3617
    %v3621 = vxor.u32 %v3620, 2147483648
    %v3622 = vsel %vm3539, %v3621, %v3620
    %v3623 = vsub.s32 4, %v3599
    %v3624 = vsel %vm3539, %v3623, %v3599
    %v3625 = vsel %vm3538, %v621, %v3622
    %v3626 = vsel %vm3538, 0, %v3624
    %v3627 = vcosq.f32.pop %v3625
    %v3628 = vsinq.f32.pop %v3625
    %vm3629 = vweird.f32 %v621
    %v3630 = vadd.s32 %v3626, 3
    %v3631 = vand.u32 %v3630, 3
    %vm3632 = vcmp.lt.s32.totalorder %v3631, 2
    %vm3633 = vcmp.eq.s32.totalorder %v3631, 0
    %v3634 = vxor.u32 %v3628, 2147483648
    %v3635 = vsel %vm3633, %v3627, %v3634
    %vm3636 = vcmp.eq.s32.totalorder %v3631, 2
    %v3637 = vxor.u32 %v3627, 2147483648
    %v3638 = vsel %vm3636, %v3637, %v3628
    %v3639 = vsel %vm3632, %v3635, %v3638
    %v3640 = vsel %vm3629, nan, %v3639
    %v3641 = vand.u32 2147483647, %v622
    %vm3642 = vcmp.le.f32.partialorder %v3641, 0.7853982
    %vm3643 = vcmp.lt.s32.totalorder %v622, 0
    %v3644 = vand.u32 %v622, 2139095040
    %v3645 = vshrl.u32 %v3644, 23
    %v3646 = vsub.s32 %v3645, 127
    %v3647 = vand.u32 2147483647, %v622
    %v3648 = vand.u32 %v3647, 8388607
    %v3649 = vor.u32 %v3648, 8388608
    %v3650 = vsub.s32 0, %v3649
    %v3651 = vadd.s32 %v3646, 1
    %vm3652 = vcmp.gt.s32.totalorder %v3651, 0
    %v3653 = vsel %vm3652, %v3651, 0
    %v3654 = vshrl.u32 %v3653, 5
    %v3655 = vand.u32 %v3653, 31
    %v3656 = vsub.s32 32, %v3655
    %v3657 = vshrl.u32 683565275, %v3656
    %v3658 = vshll.u32 683565275, %v3655
    %v3659 = vshrl.u32 2475754826, %v3656
    %v3660 = vor.u32 %v3658, %v3659
    %v3661 = vshll.u32 2475754826, %v3655
    %v3662 = vshrl.u32 2131351028, %v3656
    %v3663 = vor.u32 %v3661, %v3662
    %v3664 = vshll.u32 2131351028, %v3655
    %v3665 = vshrl.u32 2102212464, %v3656
    %v3666 = vor.u32 %v3664, %v3665
    %v3667 = vshll.u32 2102212464, %v3655
    %v3668 = vshrl.u32 920167782, %v3656
    %v3669 = vor.u32 %v3667, %v3668
    %v3670 = vshll.u32 920167782, %v3655
    %v3671 = vshrl.u32 1326507024, %v3656
    %v3672 = vor.u32 %v3670, %v3671
    %vm3673 = vcmp.lt.s32.totalorder %v3654, 1
    %vm3674 = vcmp.lt.s32.totalorder %v3654, 2
    %vm3675 = vcmp.lt.s32.totalorder %v3654, 3
    %vm3676 = vcmp.lt.s32.totalorder %v3654, 4
    %v3677 = vsel %vm3673, %v3657, %v3660
    %v3678 = vsel %vm3676, %v3666, 2102212464
    %v3679 = vsel %vm3675, %v3663, %v3678
    %v3680 = vsel %vm3674, %v3677, %v3679
    %v3681 = vsel %vm3673, %v3660, %v3663
    %v3682 = vsel %vm3676, %v3669, 920167782
    %v3683 = vsel %vm3675, %v3666, %v3682
    %v3684 = vsel %vm3674, %v3681, %v3683
    %v3685 = vsel %vm3673, %v3663, %v3666
    %v3686 = vsel %vm3676, %v3672, 1326507024
    %v3687 = vsel %vm3675, %v3669, %v3686
    %v3688 = vsel %vm3674, %v3685, %v3687
    %v3689 = vshll.u32 %v3649, 8
    %v3690 = vmul.u32.u64.compose %v3689, %v3688
    %v3691 = vextract.low.u32 %v3690
    %v3692 = vextract.high.u32 %v3690
    %v3693 = vmul.u32.u64.compose %v3689, %v3684
    %v3694 = vextract.low.u32 %v3693
    %v3695 = vextract.high.u32 %v3693
    %v3696 = vmul.u32 %v3689, %v3680
    %v3697 = vadd.s32 %v3692, %v3694
    %vm3698 = vc.u32 %v3692, %v3694
    %v3699 = vadd.s32 %v3695, 1
    %v3700 = vsel %vm3698, %v3699, %v3695
    %v3701 = vadd.s32 %v3696, %v3700
    %v3702 = vadd.s32 %v3701, 536870912
    %v3703 = vshrl.u32 %v3702, 30
    %v3704 = vshll.u32 %v3703, 30
    %v3705 = vsub.s32 %v3701, %v3704
    %vm3706 = vcmp.lt.s32.totalorder %v3705, 0
    %v3707 = vsub.s32 0, %v3705
    %v3708 = vsel %vm3706, %v3707, %v3705
    %v3709 = vclz %v3708
    %v3710 = vsub.s32 %v3709, 2
    %vm3711 = vcmp.gt.s32.totalorder 0, %v3710
    %v3712 = vsel %vm3711, 0, %v3710
    %v3713 = vsub.s32 32, %v3712
    %v3714 = vshll.u32 %v3705, %v3712
    %v3715 = vshrl.u32 %v3697, %v3713
    %v3716 = vor.u32 %v3714, %v3715
    %v3717 = vsub.s32 4294967266, %v3712
    %v3718 = vadd.s32 %v3717, 127
    %v3719 = vshll.u32 %v3718, 23
    %v3720 = vor.u32 4788187, %v3719
    %v3721 = vand.u32 2147483647, %v3720
    %v3723 = vcvt.s32.f32 %v3716
    %v3724 = vmul.f32 %v3723, %v3721
    %v3725 = vxor.u32 %v3724, 2147483648
    %v3726 = vsel %vm3643, %v3725, %v3724
    %v3727 = vsub.s32 4, %v3703
    %v3728 = vsel %vm3643, %v3727, %v3703
    %v3729 = vsel %vm3642, %v622, %v3726
    %v3730 = vsel %vm3642, 0, %v3728
    %v3731 = vcosq.f32.pop %v3729
    %v3732 = vsinq.f32.pop %v3729
    %vm3733 = vweird.f32 %v622
    %v3734 = vadd.s32 %v3730, 3
    %v3735 = vand.u32 %v3734, 3
    %vm3736 = vcmp.lt.s32.totalorder %v3735, 2
    %vm3737 = vcmp.eq.s32.totalorder %v3735, 0
    %v3738 = vxor.u32 %v3732, 2147483648
    %v3739 = vsel %vm3737, %v3731, %v3738
    %vm3740 = vcmp.eq.s32.totalorder %v3735, 2
    %v3741 = vxor.u32 %v3731, 2147483648
    %v3742 = vsel %vm3740, %v3741, %v3732
    %v3743 = vsel %vm3736, %v3739, %v3742
    %v3744 = vsel %vm3733, nan, %v3743
    %v3745 = vand.u32 2147483647, %v623
    %vm3746 = vcmp.le.f32.partialorder %v3745, 0.7853982
    %vm3747 = vcmp.lt.s32.totalorder %v623, 0
    %v3748 = vand.u32 %v623, 2139095040
    %v3749 = vshrl.u32 %v3748, 23
    %v3750 = vsub.s32 %v3749, 127
    %v3751 = vand.u32 2147483647, %v623
    %v3752 = vand.u32 %v3751, 8388607
    %v3753 = vor.u32 %v3752, 8388608
    %v3754 = vsub.s32 0, %v3753
    %v3755 = vadd.s32 %v3750, 1
    %vm3756 = vcmp.gt.s32.totalorder %v3755, 0
    %v3757 = vsel %vm3756, %v3755, 0
    %v3758 = vshrl.u32 %v3757, 5
    %v3759 = vand.u32 %v3757, 31
    %v3760 = vsub.s32 32, %v3759
    %v3761 = vshrl.u32 683565275, %v3760
    %v3762 = vshll.u32 683565275, %v3759
    %v3763 = vshrl.u32 2475754826, %v3760
    %v3764 = vor.u32 %v3762, %v3763
    %v3765 = vshll.u32 2475754826, %v3759
    %v3766 = vshrl.u32 2131351028, %v3760
    %v3767 = vor.u32 %v3765, %v3766
    %v3768 = vshll.u32 2131351028, %v3759
    %v3769 = vshrl.u32 2102212464, %v3760
    %v3770 = vor.u32 %v3768, %v3769
    %v3771 = vshll.u32 2102212464, %v3759
    %v3772 = vshrl.u32 920167782, %v3760
    %v3773 = vor.u32 %v3771, %v3772
    %v3774 = vshll.u32 920167782, %v3759
    %v3775 = vshrl.u32 1326507024, %v3760
    %v3776 = vor.u32 %v3774, %v3775
    %vm3777 = vcmp.lt.s32.totalorder %v3758, 1
    %vm3778 = vcmp.lt.s32.totalorder %v3758, 2
    %vm3779 = vcmp.lt.s32.totalorder %v3758, 3
    %vm3780 = vcmp.lt.s32.totalorder %v3758, 4
    %v3781 = vsel %vm3777, %v3761, %v3764
    %v3782 = vsel %vm3780, %v3770, 2102212464
    %v3783 = vsel %vm3779, %v3767, %v3782
    %v3784 = vsel %vm3778, %v3781, %v3783
    %v3785 = vsel %vm3777, %v3764, %v3767
    %v3786 = vsel %vm3780, %v3773, 920167782
    %v3787 = vsel %vm3779, %v3770, %v3786
    %v3788 = vsel %vm3778, %v3785, %v3787
    %v3789 = vsel %vm3777, %v3767, %v3770
    %v3790 = vsel %vm3780, %v3776, 1326507024
    %v3791 = vsel %vm3779, %v3773, %v3790
    %v3792 = vsel %vm3778, %v3789, %v3791
    %v3793 = vshll.u32 %v3753, 8
    %v3794 = vmul.u32.u64.compose %v3793, %v3792
    %v3795 = vextract.low.u32 %v3794
    %v3796 = vextract.high.u32 %v3794
    %v3797 = vmul.u32.u64.compose %v3793, %v3788
    %v3798 = vextract.low.u32 %v3797
    %v3799 = vextract.high.u32 %v3797
    %v3800 = vmul.u32 %v3793, %v3784
    %v3801 = vadd.s32 %v3796, %v3798
    %vm3802 = vc.u32 %v3796, %v3798
    %v3803 = vadd.s32 %v3799, 1
    %v3804 = vsel %vm3802, %v3803, %v3799
    %v3805 = vadd.s32 %v3800, %v3804
    %v3806 = vadd.s32 %v3805, 536870912
    %v3807 = vshrl.u32 %v3806, 30
    %v3808 = vshll.u32 %v3807, 30
    %v3809 = vsub.s32 %v3805, %v3808
    %vm3810 = vcmp.lt.s32.totalorder %v3809, 0
    %v3811 = vsub.s32 0, %v3809
    %v3812 = vsel %vm3810, %v3811, %v3809
    %v3813 = vclz %v3812
    %v3814 = vsub.s32 %v3813, 2
    %vm3815 = vcmp.gt.s32.totalorder 0, %v3814
    %v3816 = vsel %vm3815, 0, %v3814
    %v3817 = vsub.s32 32, %v3816
    %v3818 = vshll.u32 %v3809, %v3816
    %v3819 = vshrl.u32 %v3801, %v3817
    %v3820 = vor.u32 %v3818, %v3819
    %v3821 = vsub.s32 4294967266, %v3816
    %v3822 = vadd.s32 %v3821, 127
    %v3823 = vshll.u32 %v3822, 23
    %v3824 = vor.u32 4788187, %v3823
    %v3825 = vand.u32 2147483647, %v3824
    %v3827 = vcvt.s32.f32 %v3820
    %v3828 = vmul.f32 %v3827, %v3825
    %v3829 = vxor.u32 %v3828, 2147483648
    %v3830 = vsel %vm3747, %v3829, %v3828
    %v3831 = vsub.s32 4, %v3807
    %v3832 = vsel %vm3747, %v3831, %v3807
    %v3833 = vsel %vm3746, %v623, %v3830
    %v3834 = vsel %vm3746, 0, %v3832
    %v3835 = vcosq.f32.pop %v3833
    %v3836 = vsinq.f32.pop %v3833
    %vm3837 = vweird.f32 %v623
    %v3838 = vadd.s32 %v3834, 3
    %v3839 = vand.u32 %v3838, 3
    %vm3840 = vcmp.lt.s32.totalorder %v3839, 2
    %vm3841 = vcmp.eq.s32.totalorder %v3839, 0
    %v3842 = vxor.u32 %v3836, 2147483648
    %v3843 = vsel %vm3841, %v3835, %v3842
    %vm3844 = vcmp.eq.s32.totalorder %v3839, 2
    %v3845 = vxor.u32 %v3835, 2147483648
    %v3846 = vsel %vm3844, %v3845, %v3836
    %v3847 = vsel %vm3840, %v3843, %v3846
    %v3848 = vsel %vm3837, nan, %v3847
    %v3849 = vand.u32 2147483647, %v624
    %vm3850 = vcmp.le.f32.partialorder %v3849, 0.7853982
    %vm3851 = vcmp.lt.s32.totalorder %v624, 0
    %v3852 = vand.u32 %v624, 2139095040
    %v3853 = vshrl.u32 %v3852, 23
    %v3854 = vsub.s32 %v3853, 127
    %v3855 = vand.u32 2147483647, %v624
    %v3856 = vand.u32 %v3855, 8388607
    %v3857 = vor.u32 %v3856, 8388608
    %v3858 = vsub.s32 0, %v3857
    %v3859 = vadd.s32 %v3854, 1
    %vm3860 = vcmp.gt.s32.totalorder %v3859, 0
    %v3861 = vsel %vm3860, %v3859, 0
    %v3862 = vshrl.u32 %v3861, 5
    %v3863 = vand.u32 %v3861, 31
    %v3864 = vsub.s32 32, %v3863
    %v3865 = vshrl.u32 683565275, %v3864
    %v3866 = vshll.u32 683565275, %v3863
    %v3867 = vshrl.u32 2475754826, %v3864
    %v3868 = vor.u32 %v3866, %v3867
    %v3869 = vshll.u32 2475754826, %v3863
    %v3870 = vshrl.u32 2131351028, %v3864
    %v3871 = vor.u32 %v3869, %v3870
    %v3872 = vshll.u32 2131351028, %v3863
    %v3873 = vshrl.u32 2102212464, %v3864
    %v3874 = vor.u32 %v3872, %v3873
    %v3875 = vshll.u32 2102212464, %v3863
    %v3876 = vshrl.u32 920167782, %v3864
    %v3877 = vor.u32 %v3875, %v3876
    %v3878 = vshll.u32 920167782, %v3863
    %v3879 = vshrl.u32 1326507024, %v3864
    %v3880 = vor.u32 %v3878, %v3879
    %vm3881 = vcmp.lt.s32.totalorder %v3862, 1
    %vm3882 = vcmp.lt.s32.totalorder %v3862, 2
    %vm3883 = vcmp.lt.s32.totalorder %v3862, 3
    %vm3884 = vcmp.lt.s32.totalorder %v3862, 4
    %v3885 = vsel %vm3881, %v3865, %v3868
    %v3886 = vsel %vm3884, %v3874, 2102212464
    %v3887 = vsel %vm3883, %v3871, %v3886
    %v3888 = vsel %vm3882, %v3885, %v3887
    %v3889 = vsel %vm3881, %v3868, %v3871
    %v3890 = vsel %vm3884, %v3877, 920167782
    %v3891 = vsel %vm3883, %v3874, %v3890
    %v3892 = vsel %vm3882, %v3889, %v3891
    %v3893 = vsel %vm3881, %v3871, %v3874
    %v3894 = vsel %vm3884, %v3880, 1326507024
    %v3895 = vsel %vm3883, %v3877, %v3894
    %v3896 = vsel %vm3882, %v3893, %v3895
    %v3897 = vshll.u32 %v3857, 8
    %v3898 = vmul.u32.u64.compose %v3897, %v3896
    %v3899 = vextract.low.u32 %v3898
    %v3900 = vextract.high.u32 %v3898
    %v3901 = vmul.u32.u64.compose %v3897, %v3892
    %v3902 = vextract.low.u32 %v3901
    %v3903 = vextract.high.u32 %v3901
    %v3904 = vmul.u32 %v3897, %v3888
    %v3905 = vadd.s32 %v3900, %v3902
    %vm3906 = vc.u32 %v3900, %v3902
    %v3907 = vadd.s32 %v3903, 1
    %v3908 = vsel %vm3906, %v3907, %v3903
    %v3909 = vadd.s32 %v3904, %v3908
    %v3910 = vadd.s32 %v3909, 536870912
    %v3911 = vshrl.u32 %v3910, 30
    %v3912 = vshll.u32 %v3911, 30
    %v3913 = vsub.s32 %v3909, %v3912
    %vm3914 = vcmp.lt.s32.totalorder %v3913, 0
    %v3915 = vsub.s32 0, %v3913
    %v3916 = vsel %vm3914, %v3915, %v3913
    %v3917 = vclz %v3916
    %v3918 = vsub.s32 %v3917, 2
    %vm3919 = vcmp.gt.s32.totalorder 0, %v3918
    %v3920 = vsel %vm3919, 0, %v3918
    %v3921 = vsub.s32 32, %v3920
    %v3922 = vshll.u32 %v3913, %v3920
    %v3923 = vshrl.u32 %v3905, %v3921
    %v3924 = vor.u32 %v3922, %v3923
    %v3925 = vsub.s32 4294967266, %v3920
    %v3926 = vadd.s32 %v3925, 127
    %v3927 = vshll.u32 %v3926, 23
    %v3928 = vor.u32 4788187, %v3927
    %v3929 = vand.u32 2147483647, %v3928
    %v3931 = vcvt.s32.f32 %v3924
    %v3932 = vmul.f32 %v3931, %v3929
    %v3933 = vxor.u32 %v3932, 2147483648
    %v3934 = vsel %vm3851, %v3933, %v3932
    %v3935 = vsub.s32 4, %v3911
    %v3936 = vsel %vm3851, %v3935, %v3911
    %v3937 = vsel %vm3850, %v624, %v3934
    %v3938 = vsel %vm3850, 0, %v3936
    %v3939 = vcosq.f32.pop %v3937
    %v3940 = vsinq.f32.pop %v3937
    %vm3941 = vweird.f32 %v624
    %v3942 = vadd.s32 %v3938, 3
    %v3943 = vand.u32 %v3942, 3
    %vm3944 = vcmp.lt.s32.totalorder %v3943, 2
    %vm3945 = vcmp.eq.s32.totalorder %v3943, 0
    %v3946 = vxor.u32 %v3940, 2147483648
    %v3947 = vsel %vm3945, %v3939, %v3946
    %vm3948 = vcmp.eq.s32.totalorder %v3943, 2
    %v3949 = vxor.u32 %v3939, 2147483648
    %v3950 = vsel %vm3948, %v3949, %v3940
    %v3951 = vsel %vm3944, %v3947, %v3950
    %v3952 = vsel %vm3941, nan, %v3951
    %v3953 = vmul.f32 %v503, %v2392
    %v3954 = vmul.f32 %v510, %v2496
    %v3955 = vmul.f32 %v517, %v2600
    %v3956 = vmul.f32 %v524, %v2704
    %v3957 = vmul.f32 %v531, %v2808
    %v3958 = vmul.f32 %v538, %v2912
    %v3959 = vmul.f32 %v545, %v3016
    %v3960 = vmul.f32 %v552, %v3120
    %v3961 = vmul.f32 %v559, %v3224
    %v3962 = vmul.f32 %v566, %v3328
    %v3963 = vmul.f32 %v573, %v3432
    %v3964 = vmul.f32 %v580, %v3536
    %v3965 = vmul.f32 %v587, %v3640
    %v3966 = vmul.f32 %v594, %v3744
    %v3967 = vmul.f32 %v601, %v3848
    %v3968 = vmul.f32 %v608, %v3952
    %3969 = vst [vmem:[#allocation4] sm:$0xff] %v2273
    %3970 = vst [vmem:[#allocation4 + $0x8] sm:$0xff] %v2274
    %3971 = vst [vmem:[#allocation4 + $0x10] sm:$0xff] %v2275
    %3972 = vst [vmem:[#allocation4 + $0x18] sm:$0xff] %v2276
    %3973 = vst [vmem:[#allocation4 + $0x20] sm:$0xff] %v2277
    %3974 = vst [vmem:[#allocation4 + $0x28] sm:$0xff] %v2278
    %3975 = vst [vmem:[#allocation4 + $0x30] sm:$0xff] %v2279
    %3976 = vst [vmem:[#allocation4 + $0x38] sm:$0xff] %v2280
    %3977 = vst [vmem:[#allocation4 + $0x40] sm:$0xff] %v2281
    %3978 = vst [vmem:[#allocation4 + $0x48] sm:$0xff] %v2282
    %3979 = vst [vmem:[#allocation4 + $0x50] sm:$0xff] %v2283
    %3980 = vst [vmem:[#allocation4 + $0x58] sm:$0xff] %v2284
    %3981 = vst [vmem:[#allocation4 + $0x60] sm:$0xff] %v2285
    %3982 = vst [vmem:[#allocation4 + $0x68] sm:$0xff] %v2286
    %3983 = vst [vmem:[#allocation4 + $0x70] sm:$0xff] %v2287
    %3984 = vst [vmem:[#allocation4 + $0x78] sm:$0xff] %v2288
    %3985 = vst [vmem:[#allocation4 + $0x80] sm:$0xff] %v3953
    %3986 = vst [vmem:[#allocation4 + $0x88] sm:$0xff] %v3954
    %3987 = vst [vmem:[#allocation4 + $0x90] sm:$0xff] %v3955
    %3988 = vst [vmem:[#allocation4 + $0x98] sm:$0xff] %v3956
    %3989 = vst [vmem:[#allocation4 + $0xa0] sm:$0xff] %v3957
    %3990 = vst [vmem:[#allocation4 + $0xa8] sm:$0xff] %v3958
    %3991 = vst [vmem:[#allocation4 + $0xb0] sm:$0xff] %v3959
    %3992 = vst [vmem:[#allocation4 + $0xb8] sm:$0xff] %v3960
    %3993 = vst [vmem:[#allocation4 + $0xc0] sm:$0xff] %v3961
    %3994 = vst [vmem:[#allocation4 + $0xc8] sm:$0xff] %v3962
    %3995 = vst [vmem:[#allocation4 + $0xd0] sm:$0xff] %v3963
    %3996 = vst [vmem:[#allocation4 + $0xd8] sm:$0xff] %v3964
    %3997 = vst [vmem:[#allocation4 + $0xe0] sm:$0xff] %v3965
    %3998 = vst [vmem:[#allocation4 + $0xe8] sm:$0xff] %v3966
    %3999 = vst [vmem:[#allocation4 + $0xf0] sm:$0xff] %v3967
    %4000 = vst [vmem:[#allocation4 + $0xf8] sm:$0xff] %v3968
    // Predicated region
    $region2: #{tpu_custom_call.1} parent=1 // pred_check
      _
    $region3: #{tpu_custom_call.1} parent=1 // pred_check_branch
      %4002 = sbr.rel (0) target = $region5
    $region4: #{tpu_custom_call.1} parent=1 // pred_region
      %s4004 = ssub.s32 4096, 4096
      %4005 = vsyncadd [#allocation5], %s4004
      %s4006 = sshll.u32 [#allocation4], 4
      %s4007 = int_to_ptr.vmem [resolvable:$true] %s4006
      %4012 = dma.vmem_to_hbm [thread:$0]  %s4007, 4096, %s1, [#allocation5], 1024, 1024, 64
    $region5: #{tpu_custom_call.1} parent=1 // pred_fallthru
      _
    // Predicated region
    $region6: #{tpu_custom_call.1} parent=1 // pred_check
      _
    $region7: #{tpu_custom_call.1} parent=1 // pred_check_branch
      %4014 = sbr.rel (0) target = $region9
    $region8: #{tpu_custom_call.1} parent=1 // pred_region
      %4015 = dma.done [#allocation5], 4096
    $region9: #{tpu_custom_call.1} parent=1 // pred_fallthru
      _
    %4016 = vsyncpa [#allocation5], 1

</llo_original>
